<compile_context>
chip_gen: v6e
topology: v6e:2x2x1
jax: 0.10.0
libtpu: 0.0.40
codegen_flags: <defaults>
</compile_context>

<pallas_src>
import jax
import jax.numpy as jnp
from jax.experimental import pallas as pl
from jax.experimental.pallas import tpu as pltpu


# ----------------------------------------------------------------------------
# Pallas kernels
# ----------------------------------------------------------------------------
def _conv_bn_relu_pool_kernel(x0_ref, x1_ref, x2_ref, x3_ref,
                              w_ref, scale_ref, bias_ref, o_ref):
    """Fused im2col-conv + BN(affine) + ReLU + 2x2 maxpool on one row tile.

    x{i}_ref : (TN, K)    bf16 im2col patches for pool-window offset i
    w_ref    : (K, Cout)  bf16 conv weights as a matrix
    scale    : (1, Cout)  f32  gamma / sqrt(var + eps)
    bias     : (1, Cout)  f32  beta + (conv_bias - mean) * scale
    o_ref    : (TN, Cout) f32
    """
    w = w_ref[...]
    scale = scale_ref[...]
    bias = bias_ref[...]

    def branch(x_ref):
        y = jnp.dot(x_ref[...], w, preferred_element_type=jnp.float32)
        return jnp.maximum(y * scale + bias, 0.0)

    # NB: BN scale may be negative, so ReLU/affine must be applied per offset
    # *before* the pooling max (matches PyTorch ordering).
    acc = branch(x0_ref)
    acc = jnp.maximum(acc, branch(x1_ref))
    acc = jnp.maximum(acc, branch(x2_ref))
    acc = jnp.maximum(acc, branch(x3_ref))
    o_ref[...] = acc


def _fc_log_softmax_kernel(x_ref, w_ref, b_ref, o_ref):
    """Linear layer + log_softmax(dim=1) on a batch row tile.

    x_ref : (TB, F) bf16, w_ref : (F, C) bf16, b_ref : (1, C) f32, o_ref : (TB, C) f32
    """
    logits = jnp.dot(x_ref[...], w_ref[...],
                     preferred_element_type=jnp.float32) + b_ref[...]
    m = jnp.max(logits, axis=-1, keepdims=True)
    s = logits - m
    lse = jnp.log(jnp.sum(jnp.exp(s), axis=-1, keepdims=True))
    o_ref[...] = s - lse


# ----------------------------------------------------------------------------
# Glue: im2col + pallas_call wrappers
# ----------------------------------------------------------------------------
def _im2col_pool_offsets(xp_bf16, H, W, Cin, ksize, pool):
    """Build the 4 per-pool-offset im2col matrices directly from the padded
    bf16 input via strided slices (no full patches tensor / gathers)."""
    B = xp_bf16.shape[0]
    Hp, Wp = H // pool, W // pool
    mats = []
    for di in range(pool):
        for dj in range(pool):
            taps = []
            for ki in range(ksize):
                for kj in range(ksize):
                    taps.append(
                        xp_bf16[:, di + ki: di + ki + H: pool,
                                dj + kj: dj + kj + W: pool, :])   # (B, Hp, Wp, Cin)
            p = jnp.stack(taps, axis=3)                            # (B, Hp, Wp, K*K, Cin)
            mats.append(p.reshape(B * Hp * Wp, ksize * ksize * Cin))
    return mats, (Hp, Wp)


def conv_bn_relu_pool(x_nhwc, w_conv, b_conv, gamma, beta, mean, var,
                      eps=1e-5, pool=2, row_tile=512):
    """x_nhwc: (B, H, W, Cin) f32; w_conv: (Cout, Cin, K, K) (PyTorch layout)."""
    B, H, W, Cin = x_nhwc.shape
    Cout, _, K, _ = w_conv.shape
    pad = K // 2

    xp = jnp.pad(x_nhwc.astype(jnp.bfloat16),
                 ((0, 0), (pad, pad), (pad, pad), (0, 0)))
    xs, (Hp, Wp) = _im2col_pool_offsets(xp, H, W, Cin, K, pool)

    # Patch order is (tap = ki*K + kj, cin) -> weight matrix (K*K*Cin, Cout).
    w_mat = jnp.transpose(w_conv, (2, 3, 1, 0)).reshape(K * K * Cin, Cout)
    w_mat = w_mat.astype(jnp.bfloat16)
    scale = (gamma / jnp.sqrt(var + eps)).astype(jnp.float32)
    bias = (beta + (b_conv - mean) * scale).astype(jnp.float32)
    scale2 = scale.reshape(1, Cout)
    bias2 = bias.reshape(1, Cout)

    N, Kdim = xs[0].shape                    # N = B * Hp * Wp
    tn = min(row_tile, N)                    # full block if small, else 512-row tiles
    grid = (pl.cdiv(N, tn),)

    row_spec = pl.BlockSpec((tn, Kdim), lambda i: (i, 0))
    const2d = lambda shape: pl.BlockSpec(shape, lambda i: (0, 0))

    out = pl.pallas_call(
        _conv_bn_relu_pool_kernel,
        grid=grid,
        in_specs=[row_spec, row_spec, row_spec, row_spec,
                  const2d((Kdim, Cout)), const2d((1, Cout)), const2d((1, Cout))],
        out_specs=pl.BlockSpec((tn, Cout), lambda i: (i, 0)),
        out_shape=jax.ShapeDtypeStruct((N, Cout), jnp.float32),
        compiler_params=pltpu.CompilerParams(dimension_semantics=("parallel",)),
    )(*xs, w_mat, scale2, bias2)

    return out.reshape(B, Hp, Wp, Cout)


def fc_log_softmax(x_flat_bf16, wt_bf16, b2_f32, row_tile=256):
    """x_flat: (B, F) bf16; wt: (F, C) bf16; b2: (1, C) f32."""
    B, F = x_flat_bf16.shape
    C = wt_bf16.shape[1]
    tb = min(row_tile, B)
    grid = (pl.cdiv(B, tb),)

    return pl.pallas_call(
        _fc_log_softmax_kernel,
        grid=grid,
        in_specs=[pl.BlockSpec((tb, F), lambda i: (i, 0)),
                  pl.BlockSpec((F, C), lambda i: (0, 0)),
                  pl.BlockSpec((1, C), lambda i: (0, 0))],
        out_specs=pl.BlockSpec((tb, C), lambda i: (i, 0)),
        out_shape=jax.ShapeDtypeStruct((B, C), jnp.float32),
        compiler_params=pltpu.CompilerParams(dimension_semantics=("parallel",)),
    )(x_flat_bf16, wt_bf16, b2_f32)


# ----------------------------------------------------------------------------
# Full forward pass
# ----------------------------------------------------------------------------
@jax.jit
def cnn_fashion_mnist_forward(x_nchw, params):
    x = jnp.transpose(x_nchw, (0, 2, 3, 1)).astype(jnp.float32)     # NCHW -> NHWC

    h1 = conv_bn_relu_pool(x, params["conv1_w"], params["conv1_b"],
                           params["bn1_gamma"], params["bn1_beta"],
                           params["bn1_mean"], params["bn1_var"])   # (B,14,14,16)

    h2 = conv_bn_relu_pool(h1, params["conv2_w"], params["conv2_b"],
                           params["bn2_gamma"], params["bn2_beta"],
                           params["bn2_mean"], params["bn2_var"])   # (B,7,7,32)

    B = x_nchw.shape[0]
    Hp2, Wp2, C2 = h2.shape[1], h2.shape[2], h2.shape[3]

    # Flatten activations in NHWC order (pure reshape); fold the PyTorch NCHW
    # .view() ordering into the small FC weight instead (exactly equivalent).
    flat = h2.reshape(B, -1).astype(jnp.bfloat16)                    # (B, 1568)
    fc_w = params["fc_w"]                                            # (10, C*H*W) in (c,h,w) order
    w_nhwc = jnp.transpose(fc_w.reshape(-1, C2, Hp2, Wp2),
                           (0, 2, 3, 1)).reshape(fc_w.shape[0], -1)  # (10, H*W*C)
    wt = jnp.transpose(w_nhwc).astype(jnp.bfloat16)                  # (1568, 10)
    b2 = params["fc_b"].reshape(1, -1).astype(jnp.float32)

    return fc_log_softmax(flat, wt, b2)                              # (B, 10)


# ----------------------------------------------------------------------------
# Deterministic parameter init + demo
# ----------------------------------------------------------------------------
def init_params(key):
    ks = jax.random.split(key, 12)
    f32 = jnp.float32

    def rnd(k, shape, scale):
        return (scale * jax.random.normal(k, shape)).astype(f32)

    params = {
        "conv1_w": rnd(ks[0], (16, 1, 5, 5), 0.2),
        "conv1_b": rnd(ks[1], (16,), 0.1),
        "bn1_gamma": (1.0 + 0.1 * jax.random.normal(ks[2], (16,))).astype(f32),
        "bn1_beta": rnd(ks[3], (16,), 0.1),
        "bn1_mean": rnd(ks[4], (16,), 0.1),
        "bn1_var": (0.5 + jnp.abs(jax.random.normal(ks[5], (16,)))).astype(f32),
        "conv2_w": rnd(ks[6], (32, 16, 5, 5), 0.05),
        "conv2_b": rnd(ks[7], (32,), 0.1),
        "bn2_gamma": (1.0 + 0.1 * jax.random.normal(ks[8], (32,))).astype(f32),
        "bn2_beta": rnd(ks[9], (32,), 0.1),
        "bn2_mean": rnd(ks[10], (32,), 0.1),
        "bn2_var": (0.5 + jnp.abs(jax.random.normal(ks[11], (32,)))).astype(f32),
    }
    kf = jax.random.split(ks[0], 2)
    params["fc_w"] = rnd(kf[0], (10, 7 * 7 * 32), 0.02)
    params["fc_b"] = rnd(kf[1], (10,), 0.05)
    return params


if __name__ == "__main__":
    key = jax.random.PRNGKey(0)
    k_x, k_p = jax.random.split(key)

    # FashionMNIST-shaped input: batch=2, 1 channel, 28x28 (required for 7*7*32 FC).
    x = jax.random.normal(k_x, (2, 1, 28, 28), dtype=jnp.float32)
    params = init_params(k_p)

    out = cnn_fashion_mnist_forward(x, params)
    jax.block_until_ready(out)

    assert out.shape == (2, 10)
    assert bool(jnp.all(jnp.isfinite(out)))
    print("KERNEL_OK")
</pallas_src>

<mosaic_0001>
module attributes {stable_mosaic.version = 11 : i64} {
  func.func @_conv_bn_relu_pool_kernel(%arg0: i32, %arg1: memref<392x25xbf16, #tpu.memory_space<vmem>>, %arg2: memref<392x25xbf16, #tpu.memory_space<vmem>>, %arg3: memref<392x25xbf16, #tpu.memory_space<vmem>>, %arg4: memref<392x25xbf16, #tpu.memory_space<vmem>>, %arg5: memref<25x16xbf16, #tpu.memory_space<vmem>>, %arg6: memref<1x16xf32, #tpu.memory_space<vmem>>, %arg7: memref<1x16xf32, #tpu.memory_space<vmem>>, %arg8: memref<392x16xf32, #tpu.memory_space<vmem>>) attributes {dimension_semantics = [#tpu.dimension_semantics<parallel>], iteration_bounds = array<i64: 1>, scalar_prefetch = 0 : i64, scratch_operands = 0 : i64, tpu.core_type = #tpu.core_type<tc>, window_params = [{transform_indices = @transform_0, window_bounds = array<i64: 392, 25>}, {transform_indices = @transform_1, window_bounds = array<i64: 392, 25>}, {transform_indices = @transform_2, window_bounds = array<i64: 392, 25>}, {transform_indices = @transform_3, window_bounds = array<i64: 392, 25>}, {pipeline_mode = #tpu.pipeline_mode<synchronous>, transform_indices = @transform_4, window_bounds = array<i64: 25, 16>}, {pipeline_mode = #tpu.pipeline_mode<synchronous>, transform_indices = @transform_5, window_bounds = array<i64: 1, 16>}, {pipeline_mode = #tpu.pipeline_mode<synchronous>, transform_indices = @transform_6, window_bounds = array<i64: 1, 16>}, {transform_indices = @transform_7, window_bounds = array<i64: 392, 16>}]} {
    %c0 = arith.constant 0 : index
    %c0_0 = arith.constant 0 : index
    %0 = vector.load %arg5[%c0, %c0_0] : memref<25x16xbf16, #tpu.memory_space<vmem>>, vector<25x16xbf16>
    %c0_1 = arith.constant 0 : index
    %c0_2 = arith.constant 0 : index
    %1 = vector.load %arg6[%c0_1, %c0_2] : memref<1x16xf32, #tpu.memory_space<vmem>>, vector<1x16xf32>
    %c0_3 = arith.constant 0 : index
    %c0_4 = arith.constant 0 : index
    %2 = vector.load %arg7[%c0_3, %c0_4] : memref<1x16xf32, #tpu.memory_space<vmem>>, vector<1x16xf32>
    %c0_5 = arith.constant 0 : index
    %c0_6 = arith.constant 0 : index
    %3 = vector.load %arg1[%c0_5, %c0_6] : memref<392x25xbf16, #tpu.memory_space<vmem>>, vector<392x25xbf16>
    %cst = arith.constant dense<0.000000e+00> : vector<392x16xf32>
    %4 = tpu.matmul %3, %0, %cst {dimension_numbers = #tpu.dot_dimension_numbers<[1], [0], [0], [1], [0, 0, 1, 1], [], []>} : vector<392x25xbf16>, vector<25x16xbf16>, vector<392x16xf32> -> vector<392x16xf32>
    %5 = vector.broadcast %1 : vector<1x16xf32> to vector<392x16xf32>
    %6 = arith.mulf %4, %5 : vector<392x16xf32>
    %7 = vector.broadcast %2 : vector<1x16xf32> to vector<392x16xf32>
    %8 = arith.addf %6, %7 : vector<392x16xf32>
    %cst_7 = arith.constant 0.000000e+00 : f32
    %9 = vector.broadcast %cst_7 : f32 to vector<392x16xf32>
    %10 = arith.maximumf %8, %9 : vector<392x16xf32>
    %c0_8 = arith.constant 0 : index
    %c0_9 = arith.constant 0 : index
    %11 = vector.load %arg2[%c0_8, %c0_9] : memref<392x25xbf16, #tpu.memory_space<vmem>>, vector<392x25xbf16>
    %cst_10 = arith.constant dense<0.000000e+00> : vector<392x16xf32>
    %12 = tpu.matmul %11, %0, %cst_10 {dimension_numbers = #tpu.dot_dimension_numbers<[1], [0], [0], [1], [0, 0, 1, 1], [], []>} : vector<392x25xbf16>, vector<25x16xbf16>, vector<392x16xf32> -> vector<392x16xf32>
    %13 = vector.broadcast %1 : vector<1x16xf32> to vector<392x16xf32>
    %14 = arith.mulf %12, %13 : vector<392x16xf32>
    %15 = vector.broadcast %2 : vector<1x16xf32> to vector<392x16xf32>
    %16 = arith.addf %14, %15 : vector<392x16xf32>
    %cst_11 = arith.constant 0.000000e+00 : f32
    %17 = vector.broadcast %cst_11 : f32 to vector<392x16xf32>
    %18 = arith.maximumf %16, %17 : vector<392x16xf32>
    %19 = arith.maximumf %10, %18 : vector<392x16xf32>
    %c0_12 = arith.constant 0 : index
    %c0_13 = arith.constant 0 : index
    %20 = vector.load %arg3[%c0_12, %c0_13] : memref<392x25xbf16, #tpu.memory_space<vmem>>, vector<392x25xbf16>
    %cst_14 = arith.constant dense<0.000000e+00> : vector<392x16xf32>
    %21 = tpu.matmul %20, %0, %cst_14 {dimension_numbers = #tpu.dot_dimension_numbers<[1], [0], [0], [1], [0, 0, 1, 1], [], []>} : vector<392x25xbf16>, vector<25x16xbf16>, vector<392x16xf32> -> vector<392x16xf32>
    %22 = vector.broadcast %1 : vector<1x16xf32> to vector<392x16xf32>
    %23 = arith.mulf %21, %22 : vector<392x16xf32>
    %24 = vector.broadcast %2 : vector<1x16xf32> to vector<392x16xf32>
    %25 = arith.addf %23, %24 : vector<392x16xf32>
    %cst_15 = arith.constant 0.000000e+00 : f32
    %26 = vector.broadcast %cst_15 : f32 to vector<392x16xf32>
    %27 = arith.maximumf %25, %26 : vector<392x16xf32>
    %28 = arith.maximumf %19, %27 : vector<392x16xf32>
    %c0_16 = arith.constant 0 : index
    %c0_17 = arith.constant 0 : index
    %29 = vector.load %arg4[%c0_16, %c0_17] : memref<392x25xbf16, #tpu.memory_space<vmem>>, vector<392x25xbf16>
    %cst_18 = arith.constant dense<0.000000e+00> : vector<392x16xf32>
    %30 = tpu.matmul %29, %0, %cst_18 {dimension_numbers = #tpu.dot_dimension_numbers<[1], [0], [0], [1], [0, 0, 1, 1], [], []>} : vector<392x25xbf16>, vector<25x16xbf16>, vector<392x16xf32> -> vector<392x16xf32>
    %31 = vector.broadcast %1 : vector<1x16xf32> to vector<392x16xf32>
    %32 = arith.mulf %30, %31 : vector<392x16xf32>
    %33 = vector.broadcast %2 : vector<1x16xf32> to vector<392x16xf32>
    %34 = arith.addf %32, %33 : vector<392x16xf32>
    %cst_19 = arith.constant 0.000000e+00 : f32
    %35 = vector.broadcast %cst_19 : f32 to vector<392x16xf32>
    %36 = arith.maximumf %34, %35 : vector<392x16xf32>
    %37 = arith.maximumf %28, %36 : vector<392x16xf32>
    %c0_20 = arith.constant 0 : index
    %c0_21 = arith.constant 0 : index
    %38 = vector.load %arg8[%c0_20, %c0_21] : memref<392x16xf32, #tpu.memory_space<vmem>>, vector<392x16xf32>
    tpu.vector_store %arg8[%c0_20, %c0_21], %37 {strides = array<i32>} : memref<392x16xf32, #tpu.memory_space<vmem>>, vector<392x16xf32>,
    return
  }
  func.func @transform_0(%arg0: i32) -> (i32, i32) {
    %c0_i32 = arith.constant 0 : i32
    %c0_i32_0 = arith.constant 0 : i32
    return %arg0, %c0_i32 : i32, i32
  }
  func.func @transform_1(%arg0: i32) -> (i32, i32) {
    %c0_i32 = arith.constant 0 : i32
    %c0_i32_0 = arith.constant 0 : i32
    return %arg0, %c0_i32 : i32, i32
  }
  func.func @transform_2(%arg0: i32) -> (i32, i32) {
    %c0_i32 = arith.constant 0 : i32
    %c0_i32_0 = arith.constant 0 : i32
    return %arg0, %c0_i32 : i32, i32
  }
  func.func @transform_3(%arg0: i32) -> (i32, i32) {
    %c0_i32 = arith.constant 0 : i32
    %c0_i32_0 = arith.constant 0 : i32
    return %arg0, %c0_i32 : i32, i32
  }
  func.func @transform_4(%arg0: i32) -> (i32, i32) {
    %c0_i32 = arith.constant 0 : i32
    %c0_i32_0 = arith.constant 0 : i32
    %c0_i32_1 = arith.constant 0 : i32
    return %c0_i32, %c0_i32_0 : i32, i32
  }
  func.func @transform_5(%arg0: i32) -> (i32, i32) {
    %c0_i32 = arith.constant 0 : i32
    %c0_i32_0 = arith.constant 0 : i32
    %c0_i32_1 = arith.constant 0 : i32
    return %c0_i32, %c0_i32_0 : i32, i32
  }
  func.func @transform_6(%arg0: i32) -> (i32, i32) {
    %c0_i32 = arith.constant 0 : i32
    %c0_i32_0 = arith.constant 0 : i32
    %c0_i32_1 = arith.constant 0 : i32
    return %c0_i32, %c0_i32_0 : i32, i32
  }
  func.func @transform_7(%arg0: i32) -> (i32, i32) {
    %c0_i32 = arith.constant 0 : i32
    %c0_i32_0 = arith.constant 0 : i32
    return %arg0, %c0_i32 : i32, i32
  }
}

module attributes {stable_mosaic.version = 11 : i64} {
  func.func @_conv_bn_relu_pool_kernel(%arg0: i32, %arg1: memref<98x400xbf16, #tpu.memory_space<vmem>>, %arg2: memref<98x400xbf16, #tpu.memory_space<vmem>>, %arg3: memref<98x400xbf16, #tpu.memory_space<vmem>>, %arg4: memref<98x400xbf16, #tpu.memory_space<vmem>>, %arg5: memref<400x32xbf16, #tpu.memory_space<vmem>>, %arg6: memref<1x32xf32, #tpu.memory_space<vmem>>, %arg7: memref<1x32xf32, #tpu.memory_space<vmem>>, %arg8: memref<98x32xf32, #tpu.memory_space<vmem>>) attributes {dimension_semantics = [#tpu.dimension_semantics<parallel>], iteration_bounds = array<i64: 1>, scalar_prefetch = 0 : i64, scratch_operands = 0 : i64, tpu.core_type = #tpu.core_type<tc>, window_params = [{transform_indices = @transform_0, window_bounds = array<i64: 98, 400>}, {transform_indices = @transform_1, window_bounds = array<i64: 98, 400>}, {transform_indices = @transform_2, window_bounds = array<i64: 98, 400>}, {transform_indices = @transform_3, window_bounds = array<i64: 98, 400>}, {pipeline_mode = #tpu.pipeline_mode<synchronous>, transform_indices = @transform_4, window_bounds = array<i64: 400, 32>}, {pipeline_mode = #tpu.pipeline_mode<synchronous>, transform_indices = @transform_5, window_bounds = array<i64: 1, 32>}, {pipeline_mode = #tpu.pipeline_mode<synchronous>, transform_indices = @transform_6, window_bounds = array<i64: 1, 32>}, {transform_indices = @transform_7, window_bounds = array<i64: 98, 32>}]} {
    %c0 = arith.constant 0 : index
    %c0_0 = arith.constant 0 : index
    %0 = vector.load %arg5[%c0, %c0_0] : memref<400x32xbf16, #tpu.memory_space<vmem>>, vector<400x32xbf16>
    %c0_1 = arith.constant 0 : index
    %c0_2 = arith.constant 0 : index
    %1 = vector.load %arg6[%c0_1, %c0_2] : memref<1x32xf32, #tpu.memory_space<vmem>>, vector<1x32xf32>
    %c0_3 = arith.constant 0 : index
    %c0_4 = arith.constant 0 : index
    %2 = vector.load %arg7[%c0_3, %c0_4] : memref<1x32xf32, #tpu.memory_space<vmem>>, vector<1x32xf32>
    %c0_5 = arith.constant 0 : index
    %c0_6 = arith.constant 0 : index
    %3 = vector.load %arg1[%c0_5, %c0_6] : memref<98x400xbf16, #tpu.memory_space<vmem>>, vector<98x400xbf16>
    %cst = arith.constant dense<0.000000e+00> : vector<98x32xf32>
    %4 = tpu.matmul %3, %0, %cst {dimension_numbers = #tpu.dot_dimension_numbers<[1], [0], [0], [1], [0, 0, 1, 1], [], []>} : vector<98x400xbf16>, vector<400x32xbf16>, vector<98x32xf32> -> vector<98x32xf32>
    %5 = vector.broadcast %1 : vector<1x32xf32> to vector<98x32xf32>
    %6 = arith.mulf %4, %5 : vector<98x32xf32>
    %7 = vector.broadcast %2 : vector<1x32xf32> to vector<98x32xf32>
    %8 = arith.addf %6, %7 : vector<98x32xf32>
    %cst_7 = arith.constant 0.000000e+00 : f32
    %9 = vector.broadcast %cst_7 : f32 to vector<98x32xf32>
    %10 = arith.maximumf %8, %9 : vector<98x32xf32>
    %c0_8 = arith.constant 0 : index
    %c0_9 = arith.constant 0 : index
    %11 = vector.load %arg2[%c0_8, %c0_9] : memref<98x400xbf16, #tpu.memory_space<vmem>>, vector<98x400xbf16>
    %cst_10 = arith.constant dense<0.000000e+00> : vector<98x32xf32>
    %12 = tpu.matmul %11, %0, %cst_10 {dimension_numbers = #tpu.dot_dimension_numbers<[1], [0], [0], [1], [0, 0, 1, 1], [], []>} : vector<98x400xbf16>, vector<400x32xbf16>, vector<98x32xf32> -> vector<98x32xf32>
    %13 = vector.broadcast %1 : vector<1x32xf32> to vector<98x32xf32>
    %14 = arith.mulf %12, %13 : vector<98x32xf32>
    %15 = vector.broadcast %2 : vector<1x32xf32> to vector<98x32xf32>
    %16 = arith.addf %14, %15 : vector<98x32xf32>
    %cst_11 = arith.constant 0.000000e+00 : f32
    %17 = vector.broadcast %cst_11 : f32 to vector<98x32xf32>
    %18 = arith.maximumf %16, %17 : vector<98x32xf32>
    %19 = arith.maximumf %10, %18 : vector<98x32xf32>
    %c0_12 = arith.constant 0 : index
    %c0_13 = arith.constant 0 : index
    %20 = vector.load %arg3[%c0_12, %c0_13] : memref<98x400xbf16, #tpu.memory_space<vmem>>, vector<98x400xbf16>
    %cst_14 = arith.constant dense<0.000000e+00> : vector<98x32xf32>
    %21 = tpu.matmul %20, %0, %cst_14 {dimension_numbers = #tpu.dot_dimension_numbers<[1], [0], [0], [1], [0, 0, 1, 1], [], []>} : vector<98x400xbf16>, vector<400x32xbf16>, vector<98x32xf32> -> vector<98x32xf32>
    %22 = vector.broadcast %1 : vector<1x32xf32> to vector<98x32xf32>
    %23 = arith.mulf %21, %22 : vector<98x32xf32>
    %24 = vector.broadcast %2 : vector<1x32xf32> to vector<98x32xf32>
    %25 = arith.addf %23, %24 : vector<98x32xf32>
    %cst_15 = arith.constant 0.000000e+00 : f32
    %26 = vector.broadcast %cst_15 : f32 to vector<98x32xf32>
    %27 = arith.maximumf %25, %26 : vector<98x32xf32>
    %28 = arith.maximumf %19, %27 : vector<98x32xf32>
    %c0_16 = arith.constant 0 : index
    %c0_17 = arith.constant 0 : index
    %29 = vector.load %arg4[%c0_16, %c0_17] : memref<98x400xbf16, #tpu.memory_space<vmem>>, vector<98x400xbf16>
    %cst_18 = arith.constant dense<0.000000e+00> : vector<98x32xf32>
    %30 = tpu.matmul %29, %0, %cst_18 {dimension_numbers = #tpu.dot_dimension_numbers<[1], [0], [0], [1], [0, 0, 1, 1], [], []>} : vector<98x400xbf16>, vector<400x32xbf16>, vector<98x32xf32> -> vector<98x32xf32>
    %31 = vector.broadcast %1 : vector<1x32xf32> to vector<98x32xf32>
    %32 = arith.mulf %30, %31 : vector<98x32xf32>
    %33 = vector.broadcast %2 : vector<1x32xf32> to vector<98x32xf32>
    %34 = arith.addf %32, %33 : vector<98x32xf32>
    %cst_19 = arith.constant 0.000000e+00 : f32
    %35 = vector.broadcast %cst_19 : f32 to vector<98x32xf32>
    %36 = arith.maximumf %34, %35 : vector<98x32xf32>
    %37 = arith.maximumf %28, %36 : vector<98x32xf32>
    %c0_20 = arith.constant 0 : index
    %c0_21 = arith.constant 0 : index
    %38 = vector.load %arg8[%c0_20, %c0_21] : memref<98x32xf32, #tpu.memory_space<vmem>>, vector<98x32xf32>
    tpu.vector_store %arg8[%c0_20, %c0_21], %37 {strides = array<i32>} : memref<98x32xf32, #tpu.memory_space<vmem>>, vector<98x32xf32>,
    return
  }
  func.func @transform_0(%arg0: i32) -> (i32, i32) {
    %c0_i32 = arith.constant 0 : i32
    %c0_i32_0 = arith.constant 0 : i32
    return %arg0, %c0_i32 : i32, i32
  }
  func.func @transform_1(%arg0: i32) -> (i32, i32) {
    %c0_i32 = arith.constant 0 : i32
    %c0_i32_0 = arith.constant 0 : i32
    return %arg0, %c0_i32 : i32, i32
  }
  func.func @transform_2(%arg0: i32) -> (i32, i32) {
    %c0_i32 = arith.constant 0 : i32
    %c0_i32_0 = arith.constant 0 : i32
    return %arg0, %c0_i32 : i32, i32
  }
  func.func @transform_3(%arg0: i32) -> (i32, i32) {
    %c0_i32 = arith.constant 0 : i32
    %c0_i32_0 = arith.constant 0 : i32
    return %arg0, %c0_i32 : i32, i32
  }
  func.func @transform_4(%arg0: i32) -> (i32, i32) {
    %c0_i32 = arith.constant 0 : i32
    %c0_i32_0 = arith.constant 0 : i32
    %c0_i32_1 = arith.constant 0 : i32
    return %c0_i32, %c0_i32_0 : i32, i32
  }
  func.func @transform_5(%arg0: i32) -> (i32, i32) {
    %c0_i32 = arith.constant 0 : i32
    %c0_i32_0 = arith.constant 0 : i32
    %c0_i32_1 = arith.constant 0 : i32
    return %c0_i32, %c0_i32_0 : i32, i32
  }
  func.func @transform_6(%arg0: i32) -> (i32, i32) {
    %c0_i32 = arith.constant 0 : i32
    %c0_i32_0 = arith.constant 0 : i32
    %c0_i32_1 = arith.constant 0 : i32
    return %c0_i32, %c0_i32_0 : i32, i32
  }
  func.func @transform_7(%arg0: i32) -> (i32, i32) {
    %c0_i32 = arith.constant 0 : i32
    %c0_i32_0 = arith.constant 0 : i32
    return %arg0, %c0_i32 : i32, i32
  }
}

module attributes {stable_mosaic.version = 11 : i64} {
  func.func @_fc_log_softmax_kernel(%arg0: i32, %arg1: memref<2x1568xbf16, #tpu.memory_space<vmem>>, %arg2: memref<1568x10xbf16, #tpu.memory_space<vmem>>, %arg3: memref<1x10xf32, #tpu.memory_space<vmem>>, %arg4: memref<2x10xf32, #tpu.memory_space<vmem>>) attributes {dimension_semantics = [#tpu.dimension_semantics<parallel>], iteration_bounds = array<i64: 1>, scalar_prefetch = 0 : i64, scratch_operands = 0 : i64, tpu.core_type = #tpu.core_type<tc>, window_params = [{transform_indices = @transform_0, window_bounds = array<i64: 2, 1568>}, {pipeline_mode = #tpu.pipeline_mode<synchronous>, transform_indices = @transform_1, window_bounds = array<i64: 1568, 10>}, {pipeline_mode = #tpu.pipeline_mode<synchronous>, transform_indices = @transform_2, window_bounds = array<i64: 1, 10>}, {transform_indices = @transform_3, window_bounds = array<i64: 2, 10>}]} {
    %c0 = arith.constant 0 : index
    %c0_0 = arith.constant 0 : index
    %0 = vector.load %arg1[%c0, %c0_0] : memref<2x1568xbf16, #tpu.memory_space<vmem>>, vector<2x1568xbf16>
    %c0_1 = arith.constant 0 : index
    %c0_2 = arith.constant 0 : index
    %1 = vector.load %arg2[%c0_1, %c0_2] : memref<1568x10xbf16, #tpu.memory_space<vmem>>, vector<1568x10xbf16>
    %cst = arith.constant dense<0.000000e+00> : vector<2x10xf32>
    %2 = tpu.matmul %0, %1, %cst {dimension_numbers = #tpu.dot_dimension_numbers<[1], [0], [0], [1], [0, 0, 1, 1], [], []>} : vector<2x1568xbf16>, vector<1568x10xbf16>, vector<2x10xf32> -> vector<2x10xf32>
    %c0_3 = arith.constant 0 : index
    %c0_4 = arith.constant 0 : index
    %3 = vector.load %arg3[%c0_3, %c0_4] : memref<1x10xf32, #tpu.memory_space<vmem>>, vector<1x10xf32>
    %4 = vector.broadcast %3 : vector<1x10xf32> to vector<2x10xf32>
    %5 = arith.addf %2, %4 : vector<2x10xf32>
    %cst_5 = arith.constant dense<0xFF800000> : vector<2xf32>
    %6 = vector.multi_reduction <maximumf>, %5, %cst_5 [1] : vector<2x10xf32> to vector<2xf32>
    %7 = vector.shape_cast %6 : vector<2xf32> to vector<2x1xf32>
    %8 = vector.broadcast %7 : vector<2x1xf32> to vector<2x10xf32>
    %9 = arith.subf %5, %8 : vector<2x10xf32>
    %10 = math.exp %9 : vector<2x10xf32>
    %cst_6 = arith.constant dense<0.000000e+00> : vector<2xf32>
    %11 = vector.multi_reduction <add>, %10, %cst_6 [1] : vector<2x10xf32> to vector<2xf32>
    %12 = vector.shape_cast %11 : vector<2xf32> to vector<2x1xf32>
    %13 = math.log %12 : vector<2x1xf32>
    %14 = vector.broadcast %13 : vector<2x1xf32> to vector<2x10xf32>
    %15 = arith.subf %9, %14 : vector<2x10xf32>
    %c0_7 = arith.constant 0 : index
    %c0_8 = arith.constant 0 : index
    %16 = vector.load %arg4[%c0_7, %c0_8] : memref<2x10xf32, #tpu.memory_space<vmem>>, vector<2x10xf32>
    tpu.vector_store %arg4[%c0_7, %c0_8], %15 {strides = array<i32>} : memref<2x10xf32, #tpu.memory_space<vmem>>, vector<2x10xf32>,
    return
  }
  func.func @transform_0(%arg0: i32) -> (i32, i32) {
    %c0_i32 = arith.constant 0 : i32
    %c0_i32_0 = arith.constant 0 : i32
    return %arg0, %c0_i32 : i32, i32
  }
  func.func @transform_1(%arg0: i32) -> (i32, i32) {
    %c0_i32 = arith.constant 0 : i32
    %c0_i32_0 = arith.constant 0 : i32
    %c0_i32_1 = arith.constant 0 : i32
    return %c0_i32, %c0_i32_0 : i32, i32
  }
  func.func @transform_2(%arg0: i32) -> (i32, i32) {
    %c0_i32 = arith.constant 0 : i32
    %c0_i32_0 = arith.constant 0 : i32
    %c0_i32_1 = arith.constant 0 : i32
    return %c0_i32, %c0_i32_0 : i32, i32
  }
  func.func @transform_3(%arg0: i32) -> (i32, i32) {
    %c0_i32 = arith.constant 0 : i32
    %c0_i32_0 = arith.constant 0 : i32
    return %arg0, %c0_i32 : i32, i32
  }
}

</mosaic_0001>

<llo_original>
// kernel: cnn_fashion_mnist_forward.3
$region0: #{cnn_fashion_mnist_forward.3}
  #allocation0 [shape = 'u32[]', space=smem, size = 0x4, offset = 0x4, fixed_abs, tag = 'smem constant byte address 0x4 - core index']
  #allocation1 [shape = 'u32[144,128]{1,0:T(1,128)}', space=vmem, size = 0x12000, scoped, tag = 'internal scratch']
  %s0 = inlined_call_operand.vmem [shape: bf16[392,25], index: 0, kind: input, shape index: {}]
  %s1 = inlined_call_operand.vmem [shape: bf16[392,25], index: 1, kind: input, shape index: {}]
  %s2 = inlined_call_operand.vmem [shape: bf16[392,25], index: 2, kind: input, shape index: {}]
  %s3 = inlined_call_operand.vmem [shape: bf16[392,25], index: 3, kind: input, shape index: {}]
  %s4 = inlined_call_operand.vmem [shape: bf16[25,16], index: 4, kind: input, shape index: {}]
  %s5 = inlined_call_operand.vmem [shape: f32[1,16], index: 5, kind: input, shape index: {}]
  %s6 = inlined_call_operand.vmem [shape: f32[1,16], index: 6, kind: input, shape index: {}]
  %s7 = inlined_call_operand.vmem [shape: f32[392,16], index: 7, kind: output, shape index: {}]
  %s8 = sld [smem:[#allocation0]]
  $region38: #{cnn_fashion_mnist_forward.3} parent=0
    _
  %s10 = ssub.s32 1, %s8
  %s11 = scalar_select 0, %s10, %s8
  // Predicated region
  $region2: #{cnn_fashion_mnist_forward.3} parent=0 // pred_check
    _
  $region3: #{cnn_fashion_mnist_forward.3} parent=0 // pred_check_branch
    %13 = sbr.rel (0) target = $region5
  $region4: #{cnn_fashion_mnist_forward.3} parent=0 // pred_region
    _
  $region5: #{cnn_fashion_mnist_forward.3} parent=0 // pred_fallthru
    _
  // Predicated region
  $region6: #{cnn_fashion_mnist_forward.3} parent=0 // pred_check
    _
  $region7: #{cnn_fashion_mnist_forward.3} parent=0 // pred_check_branch
    %15 = sbr.rel (0) target = $region9
  $region8: #{cnn_fashion_mnist_forward.3} parent=0 // pred_region
    _
  $region9: #{cnn_fashion_mnist_forward.3} parent=0 // pred_fallthru
    _
  // Predicated region
  $region10: #{cnn_fashion_mnist_forward.3} parent=0 // pred_check
    _
  $region11: #{cnn_fashion_mnist_forward.3} parent=0 // pred_check_branch
    %17 = sbr.rel (0) target = $region13
  $region12: #{cnn_fashion_mnist_forward.3} parent=0 // pred_region
    _
  $region13: #{cnn_fashion_mnist_forward.3} parent=0 // pred_fallthru
    _
  // Predicated region
  $region14: #{cnn_fashion_mnist_forward.3} parent=0 // pred_check
    _
  $region15: #{cnn_fashion_mnist_forward.3} parent=0 // pred_check_branch
    %19 = sbr.rel (0) target = $region17
  $region16: #{cnn_fashion_mnist_forward.3} parent=0 // pred_region
    _
  $region17: #{cnn_fashion_mnist_forward.3} parent=0 // pred_fallthru
    _
  // Predicated region
  $region18: #{cnn_fashion_mnist_forward.3} parent=0 // pred_check
    _
  $region19: #{cnn_fashion_mnist_forward.3} parent=0 // pred_check_branch
    %21 = sbr.rel (0) target = $region21
  $region20: #{cnn_fashion_mnist_forward.3} parent=0 // pred_region
    _
  $region21: #{cnn_fashion_mnist_forward.3} parent=0 // pred_fallthru
    _
  // Predicated region
  $region22: #{cnn_fashion_mnist_forward.3} parent=0 // pred_check
    _
  $region23: #{cnn_fashion_mnist_forward.3} parent=0 // pred_check_branch
    %23 = sbr.rel (0) target = $region25
  $region24: #{cnn_fashion_mnist_forward.3} parent=0 // pred_region
    _
  $region25: #{cnn_fashion_mnist_forward.3} parent=0 // pred_fallthru
    _
  // Predicated region
  $region26: #{cnn_fashion_mnist_forward.3} parent=0 // pred_check
    _
  $region27: #{cnn_fashion_mnist_forward.3} parent=0 // pred_check_branch
    %25 = sbr.rel (0) target = $region29
  $region28: #{cnn_fashion_mnist_forward.3} parent=0 // pred_region
    _
  $region29: #{cnn_fashion_mnist_forward.3} parent=0 // pred_fallthru
    _
  %v27 = vld [vmem:[%s4] sm:$0xf]
  %v28 = vld [vmem:[%s4 + $0x4] sm:$0xf]
  %v29 = vld [vmem:[%s4 + $0x8] sm:$0xf]
  %v30 = vld [vmem:[%s4 + $0xc] sm:$0x1]
  %v31 = vld [vmem:[%s5] sm:$0x1]
  %v32 = vld [vmem:[%s6] sm:$0x1]
  %v33 = vld [vmem:[%s0] sm:$0xf]
  %v34 = vld [vmem:[%s0 + $0x4] sm:$0xf]
  %v35 = vld [vmem:[%s0 + $0x8] sm:$0xf]
  %v36 = vld [vmem:[%s0 + $0xc] sm:$0xf]
  %v37 = vld [vmem:[%s0 + $0x10] sm:$0xf]
  %v38 = vld [vmem:[%s0 + $0x14] sm:$0xf]
  %v39 = vld [vmem:[%s0 + $0x18] sm:$0xf]
  %v40 = vld [vmem:[%s0 + $0x1c] sm:$0xf]
  %v41 = vld [vmem:[%s0 + $0x20] sm:$0xf]
  %v42 = vld [vmem:[%s0 + $0x24] sm:$0xf]
  %v43 = vld [vmem:[%s0 + $0x28] sm:$0xf]
  %v44 = vld [vmem:[%s0 + $0x2c] sm:$0xf]
  %v45 = vld [vmem:[%s0 + $0x30] sm:$0xf]
  %v46 = vld [vmem:[%s0 + $0x34] sm:$0xf]
  %v47 = vld [vmem:[%s0 + $0x38] sm:$0xf]
  %v48 = vld [vmem:[%s0 + $0x3c] sm:$0xf]
  %v49 = vld [vmem:[%s0 + $0x40] sm:$0xf]
  %v50 = vld [vmem:[%s0 + $0x44] sm:$0xf]
  %v51 = vld [vmem:[%s0 + $0x48] sm:$0xf]
  %v52 = vld [vmem:[%s0 + $0x4c] sm:$0xf]
  %v53 = vld [vmem:[%s0 + $0x50] sm:$0xf]
  %v54 = vld [vmem:[%s0 + $0x54] sm:$0xf]
  %v55 = vld [vmem:[%s0 + $0x58] sm:$0xf]
  %v56 = vld [vmem:[%s0 + $0x5c] sm:$0xf]
  %v57 = vld [vmem:[%s0 + $0x60] sm:$0xf]
  %v58 = vld [vmem:[%s0 + $0x64] sm:$0xf]
  %v59 = vld [vmem:[%s0 + $0x68] sm:$0xf]
  %v60 = vld [vmem:[%s0 + $0x6c] sm:$0xf]
  %v61 = vld [vmem:[%s0 + $0x70] sm:$0xf]
  %v62 = vld [vmem:[%s0 + $0x74] sm:$0xf]
  %v63 = vld [vmem:[%s0 + $0x78] sm:$0xf]
  %v64 = vld [vmem:[%s0 + $0x7c] sm:$0xf]
  %v65 = vld [vmem:[%s0 + $0x80] sm:$0xf]
  %v66 = vld [vmem:[%s0 + $0x84] sm:$0xf]
  %v67 = vld [vmem:[%s0 + $0x88] sm:$0xf]
  %v68 = vld [vmem:[%s0 + $0x8c] sm:$0xf]
  %v69 = vld [vmem:[%s0 + $0x90] sm:$0xf]
  %v70 = vld [vmem:[%s0 + $0x94] sm:$0xf]
  %v71 = vld [vmem:[%s0 + $0x98] sm:$0xf]
  %v72 = vld [vmem:[%s0 + $0x9c] sm:$0xf]
  %v73 = vld [vmem:[%s0 + $0xa0] sm:$0xf]
  %v74 = vld [vmem:[%s0 + $0xa4] sm:$0xf]
  %v75 = vld [vmem:[%s0 + $0xa8] sm:$0xf]
  %v76 = vld [vmem:[%s0 + $0xac] sm:$0xf]
  %v77 = vld [vmem:[%s0 + $0xb0] sm:$0xf]
  %v78 = vld [vmem:[%s0 + $0xb4] sm:$0xf]
  %v79 = vld [vmem:[%s0 + $0xb8] sm:$0xf]
  %v80 = vld [vmem:[%s0 + $0xbc] sm:$0xf]
  %v81 = vld [vmem:[%s0 + $0xc0] sm:$0xf]
  %v131 = vunpack.c.l.b16 %v33
  %v132 = vunpack.c.l.b16 %v34
  %v133 = vunpack.c.l.b16 %v35
  %v134 = vunpack.c.l.b16 %v36
  %v135 = vunpack.c.l.b16 %v37
  %v136 = vunpack.c.l.b16 %v38
  %v137 = vunpack.c.l.b16 %v39
  %v138 = vunpack.c.l.b16 %v40
  %v139 = vunpack.c.l.b16 %v41
  %v140 = vunpack.c.l.b16 %v42
  %v141 = vunpack.c.l.b16 %v43
  %v142 = vunpack.c.l.b16 %v44
  %v143 = vunpack.c.l.b16 %v45
  %v144 = vunpack.c.l.b16 %v46
  %v145 = vunpack.c.l.b16 %v47
  %v146 = vunpack.c.l.b16 %v48
  %v147 = vunpack.c.l.b16 %v49
  %v148 = vunpack.c.l.b16 %v50
  %v149 = vunpack.c.l.b16 %v51
  %v150 = vunpack.c.l.b16 %v52
  %v151 = vunpack.c.l.b16 %v53
  %v152 = vunpack.c.l.b16 %v54
  %v153 = vunpack.c.l.b16 %v55
  %v154 = vunpack.c.l.b16 %v56
  %v155 = vunpack.c.l.b16 %v57
  %v156 = vunpack.c.l.b16 %v58
  %v157 = vunpack.c.l.b16 %v59
  %v158 = vunpack.c.l.b16 %v60
  %v159 = vunpack.c.l.b16 %v61
  %v160 = vunpack.c.l.b16 %v62
  %v161 = vunpack.c.l.b16 %v63
  %v162 = vunpack.c.l.b16 %v64
  %v163 = vunpack.c.l.b16 %v65
  %v164 = vunpack.c.l.b16 %v66
  %v165 = vunpack.c.l.b16 %v67
  %v166 = vunpack.c.l.b16 %v68
  %v167 = vunpack.c.l.b16 %v69
  %v168 = vunpack.c.l.b16 %v70
  %v169 = vunpack.c.l.b16 %v71
  %v170 = vunpack.c.l.b16 %v72
  %v171 = vunpack.c.l.b16 %v73
  %v172 = vunpack.c.l.b16 %v74
  %v173 = vunpack.c.l.b16 %v75
  %v174 = vunpack.c.l.b16 %v76
  %v175 = vunpack.c.l.b16 %v77
  %v176 = vunpack.c.l.b16 %v78
  %v177 = vunpack.c.l.b16 %v79
  %v178 = vunpack.c.l.b16 %v80
  %v179 = vunpack.c.l.b16 %v81
  %v180 = vpack.c.b16 %v132, %v131
  %v181 = vpack.c.b16 %v134, %v133
  %v182 = vpack.c.b16 %v136, %v135
  %v183 = vpack.c.b16 %v138, %v137
  %v184 = vpack.c.b16 %v140, %v139
  %v185 = vpack.c.b16 %v142, %v141
  %v186 = vpack.c.b16 %v144, %v143
  %v187 = vpack.c.b16 %v146, %v145
  %v188 = vpack.c.b16 %v148, %v147
  %v189 = vpack.c.b16 %v150, %v149
  %v190 = vpack.c.b16 %v152, %v151
  %v191 = vpack.c.b16 %v154, %v153
  %v192 = vpack.c.b16 %v156, %v155
  %v193 = vpack.c.b16 %v158, %v157
  %v194 = vpack.c.b16 %v160, %v159
  %v195 = vpack.c.b16 %v162, %v161
  %v196 = vpack.c.b16 %v164, %v163
  %v197 = vpack.c.b16 %v166, %v165
  %v198 = vpack.c.b16 %v168, %v167
  %v199 = vpack.c.b16 %v170, %v169
  %v200 = vpack.c.b16 %v172, %v171
  %v201 = vpack.c.b16 %v174, %v173
  %v202 = vpack.c.b16 %v176, %v175
  %v203 = vpack.c.b16 %v178, %v177
  %v204 = vpack.c.b16 %v179, %v179
  %v209 = vunpack.c.l.b16 %v27
  %v210 = vunpack.c.l.b16 %v28
  %v211 = vunpack.c.l.b16 %v29
  %v212 = vunpack.c.l.b16 %v30
  %v213 = vpack.c.b16 %v210, %v209
  %v214 = vpack.c.b16 %v212, %v211
  %vm216 = vcmask 203776
  %v218 = vsel %vm216, %v180, 0
  %v221 = vsel %vm216, %v181, 0
  %v224 = vsel %vm216, %v182, 0
  %v227 = vsel %vm216, %v183, 0
  %v230 = vsel %vm216, %v184, 0
  %v233 = vsel %vm216, %v185, 0
  %v236 = vsel %vm216, %v186, 0
  %v239 = vsel %vm216, %v187, 0
  %v242 = vsel %vm216, %v188, 0
  %v245 = vsel %vm216, %v189, 0
  %v248 = vsel %vm216, %v190, 0
  %v251 = vsel %vm216, %v191, 0
  %v254 = vsel %vm216, %v192, 0
  %v257 = vsel %vm216, %v193, 0
  %v260 = vsel %vm216, %v194, 0
  %v263 = vsel %vm216, %v195, 0
  %v266 = vsel %vm216, %v196, 0
  %v269 = vsel %vm216, %v197, 0
  %v272 = vsel %vm216, %v198, 0
  %v275 = vsel %vm216, %v199, 0
  %v278 = vsel %vm216, %v200, 0
  %v281 = vsel %vm216, %v201, 0
  %v284 = vsel %vm216, %v202, 0
  %v287 = vsel %vm216, %v203, 0
  %v290 = vsel %vm216, %v204, 0
  %vm292 = vcmask 1043456
  %vm293 = vcmask 1044480
  %v294 = vsel %vm292, 4294967295, 65535
  %v295 = vsel %vm293, %v294, 0
  %v297 = vand.u32 %v214, %v295
  %299 = vmatprep.subr.bf16.mxu0 0
  %300 = vmatpush1.bf16.msra.mxu0 0
  %301 = vmatprep.subr.bf16.mxu0 0
  %302 = vmatpush1.bf16.msra.mxu0 0
  %303 = vmatprep.subr.bf16.mxu0 0
  %304 = vmatpush1.bf16.msra.mxu0 0
  %305 = vmatprep.subr.bf16.mxu0 0
  %306 = vmatpush1.bf16.msra.mxu0 0
  %307 = vmatprep.subr.bf16.mxu0 0
  %308 = vmatpush1.bf16.msra.mxu0 0
  %309 = vmatprep.subr.bf16.mxu0 0
  %310 = vmatpush1.bf16.msra.mxu0 0
  %311 = vmatprep.subr.bf16.mxu0 0
  %312 = vmatpush1.bf16.msra.mxu0 %v297
  %313 = vmatprep.subr.bf16.mxu0 0
  %314 = vmatpush1.bf16.msra.mxu0 %v213
  %315 = vmatprep.subr.bf16.mxu0 0
  %316 = vmatpush2.bf16.msra.mxu0 0
  %317 = vmatprep.subr.bf16.mxu0 0
  %318 = vmatpush2.bf16.msra.mxu0 0
  %319 = vmatprep.subr.bf16.mxu0 0
  %320 = vmatpush2.bf16.msra.mxu0 0
  %321 = vmatprep.subr.bf16.mxu0 0
  %322 = vmatpush2.bf16.msra.mxu0 0
  %323 = vmatprep.subr.bf16.mxu0 0
  %324 = vmatpush2.bf16.msra.mxu0 0
  %325 = vmatprep.subr.bf16.mxu0 0
  %326 = vmatpush2.bf16.msra.mxu0 0
  %327 = vmatprep.subr.bf16.mxu0 0
  %328 = vmatpush2.bf16.msra.mxu0 0
  %329 = vmatprep.subr.bf16.mxu0 0
  %330 = vmatpush2.bf16.msra.mxu0 0
  %331 = vmatprep.mubr.bf16.mxu0 0
  %332 = vmatmul.mubr.bf16.gmra.mxu0 %v218
  %v333 = vpop.f32.mrf.mxu0
  %v334 = vadd.f32 0.0, %v333
  %v335 = vpop.f32.mrf.mxu0
  %v336 = vpop.f32.mrf.mxu0
  %v337 = vadd.f32 0.0, %v336
  %v338 = vpop.f32.mrf.mxu0
  %339 = vmatprep.mubr.bf16.mxu0 0
  %340 = vmatmul.mubr.bf16.gmra.mxu0 %v221
  %v341 = vpop.f32.mrf.mxu0
  %v342 = vadd.f32 0.0, %v341
  %v343 = vpop.f32.mrf.mxu0
  %v344 = vpop.f32.mrf.mxu0
  %v345 = vadd.f32 0.0, %v344
  %v346 = vpop.f32.mrf.mxu0
  %347 = vmatprep.mubr.bf16.mxu0 0
  %348 = vmatmul.mubr.bf16.gmra.mxu0 %v224
  %v349 = vpop.f32.mrf.mxu0
  %v350 = vadd.f32 0.0, %v349
  %v351 = vpop.f32.mrf.mxu0
  %v352 = vpop.f32.mrf.mxu0
  %v353 = vadd.f32 0.0, %v352
  %v354 = vpop.f32.mrf.mxu0
  %355 = vmatprep.mubr.bf16.mxu0 0
  %356 = vmatmul.mubr.bf16.gmra.mxu0 %v227
  %v357 = vpop.f32.mrf.mxu0
  %v358 = vadd.f32 0.0, %v357
  %v359 = vpop.f32.mrf.mxu0
  %v360 = vpop.f32.mrf.mxu0
  %v361 = vadd.f32 0.0, %v360
  %v362 = vpop.f32.mrf.mxu0
  %363 = vmatprep.mubr.bf16.mxu0 0
  %364 = vmatmul.mubr.bf16.gmra.mxu0 %v230
  %v365 = vpop.f32.mrf.mxu0
  %v366 = vadd.f32 0.0, %v365
  %v367 = vpop.f32.mrf.mxu0
  %v368 = vpop.f32.mrf.mxu0
  %v369 = vadd.f32 0.0, %v368
  %v370 = vpop.f32.mrf.mxu0
  %371 = vmatprep.mubr.bf16.mxu0 0
  %372 = vmatmul.mubr.bf16.gmra.mxu0 %v233
  %v373 = vpop.f32.mrf.mxu0
  %v374 = vadd.f32 0.0, %v373
  %v375 = vpop.f32.mrf.mxu0
  %v376 = vpop.f32.mrf.mxu0
  %v377 = vadd.f32 0.0, %v376
  %v378 = vpop.f32.mrf.mxu0
  %379 = vmatprep.mubr.bf16.mxu0 0
  %380 = vmatmul.mubr.bf16.gmra.mxu0 %v236
  %v381 = vpop.f32.mrf.mxu0
  %v382 = vadd.f32 0.0, %v381
  %v383 = vpop.f32.mrf.mxu0
  %v384 = vpop.f32.mrf.mxu0
  %v385 = vadd.f32 0.0, %v384
  %v386 = vpop.f32.mrf.mxu0
  %387 = vmatprep.mubr.bf16.mxu0 0
  %388 = vmatmul.mubr.bf16.gmra.mxu0 %v239
  %v389 = vpop.f32.mrf.mxu0
  %v390 = vadd.f32 0.0, %v389
  %v391 = vpop.f32.mrf.mxu0
  %v392 = vpop.f32.mrf.mxu0
  %v393 = vadd.f32 0.0, %v392
  %v394 = vpop.f32.mrf.mxu0
  %395 = vmatprep.mubr.bf16.mxu0 0
  %396 = vmatmul.mubr.bf16.gmra.mxu0 %v242
  %v397 = vpop.f32.mrf.mxu0
  %v398 = vadd.f32 0.0, %v397
  %v399 = vpop.f32.mrf.mxu0
  %v400 = vpop.f32.mrf.mxu0
  %v401 = vadd.f32 0.0, %v400
  %v402 = vpop.f32.mrf.mxu0
  %403 = vmatprep.mubr.bf16.mxu0 0
  %404 = vmatmul.mubr.bf16.gmra.mxu0 %v245
  %v405 = vpop.f32.mrf.mxu0
  %v406 = vadd.f32 0.0, %v405
  %v407 = vpop.f32.mrf.mxu0
  %v408 = vpop.f32.mrf.mxu0
  %v409 = vadd.f32 0.0, %v408
  %v410 = vpop.f32.mrf.mxu0
  %411 = vmatprep.mubr.bf16.mxu0 0
  %412 = vmatmul.mubr.bf16.gmra.mxu0 %v248
  %v413 = vpop.f32.mrf.mxu0
  %v414 = vadd.f32 0.0, %v413
  %v415 = vpop.f32.mrf.mxu0
  %v416 = vpop.f32.mrf.mxu0
  %v417 = vadd.f32 0.0, %v416
  %v418 = vpop.f32.mrf.mxu0
  %419 = vmatprep.mubr.bf16.mxu0 0
  %420 = vmatmul.mubr.bf16.gmra.mxu0 %v251
  %v421 = vpop.f32.mrf.mxu0
  %v422 = vadd.f32 0.0, %v421
  %v423 = vpop.f32.mrf.mxu0
  %v424 = vpop.f32.mrf.mxu0
  %v425 = vadd.f32 0.0, %v424
  %v426 = vpop.f32.mrf.mxu0
  %427 = vmatprep.mubr.bf16.mxu0 0
  %428 = vmatmul.mubr.bf16.gmra.mxu0 %v254
  %v429 = vpop.f32.mrf.mxu0
  %v430 = vadd.f32 0.0, %v429
  %v431 = vpop.f32.mrf.mxu0
  %v432 = vpop.f32.mrf.mxu0
  %v433 = vadd.f32 0.0, %v432
  %v434 = vpop.f32.mrf.mxu0
  %435 = vmatprep.mubr.bf16.mxu0 0
  %436 = vmatmul.mubr.bf16.gmra.mxu0 %v257
  %v437 = vpop.f32.mrf.mxu0
  %v438 = vadd.f32 0.0, %v437
  %v439 = vpop.f32.mrf.mxu0
  %v440 = vpop.f32.mrf.mxu0
  %v441 = vadd.f32 0.0, %v440
  %v442 = vpop.f32.mrf.mxu0
  %443 = vmatprep.mubr.bf16.mxu0 0
  %444 = vmatmul.mubr.bf16.gmra.mxu0 %v260
  %v445 = vpop.f32.mrf.mxu0
  %v446 = vadd.f32 0.0, %v445
  %v447 = vpop.f32.mrf.mxu0
  %v448 = vpop.f32.mrf.mxu0
  %v449 = vadd.f32 0.0, %v448
  %v450 = vpop.f32.mrf.mxu0
  %451 = vmatprep.mubr.bf16.mxu0 0
  %452 = vmatmul.mubr.bf16.gmra.mxu0 %v263
  %v453 = vpop.f32.mrf.mxu0
  %v454 = vadd.f32 0.0, %v453
  %v455 = vpop.f32.mrf.mxu0
  %v456 = vpop.f32.mrf.mxu0
  %v457 = vadd.f32 0.0, %v456
  %v458 = vpop.f32.mrf.mxu0
  %459 = vmatprep.mubr.bf16.mxu0 0
  %460 = vmatmul.mubr.bf16.gmra.mxu0 %v266
  %v461 = vpop.f32.mrf.mxu0
  %v462 = vadd.f32 0.0, %v461
  %v463 = vpop.f32.mrf.mxu0
  %v464 = vpop.f32.mrf.mxu0
  %v465 = vadd.f32 0.0, %v464
  %v466 = vpop.f32.mrf.mxu0
  %467 = vmatprep.mubr.bf16.mxu0 0
  %468 = vmatmul.mubr.bf16.gmra.mxu0 %v269
  %v469 = vpop.f32.mrf.mxu0
  %v470 = vadd.f32 0.0, %v469
  %v471 = vpop.f32.mrf.mxu0
  %v472 = vpop.f32.mrf.mxu0
  %v473 = vadd.f32 0.0, %v472
  %v474 = vpop.f32.mrf.mxu0
  %475 = vmatprep.mubr.bf16.mxu0 0
  %476 = vmatmul.mubr.bf16.gmra.mxu0 %v272
  %v477 = vpop.f32.mrf.mxu0
  %v478 = vadd.f32 0.0, %v477
  %v479 = vpop.f32.mrf.mxu0
  %v480 = vpop.f32.mrf.mxu0
  %v481 = vadd.f32 0.0, %v480
  %v482 = vpop.f32.mrf.mxu0
  %483 = vmatprep.mubr.bf16.mxu0 0
  %484 = vmatmul.mubr.bf16.gmra.mxu0 %v275
  %v485 = vpop.f32.mrf.mxu0
  %v486 = vadd.f32 0.0, %v485
  %v487 = vpop.f32.mrf.mxu0
  %v488 = vpop.f32.mrf.mxu0
  %v489 = vadd.f32 0.0, %v488
  %v490 = vpop.f32.mrf.mxu0
  %491 = vmatprep.mubr.bf16.mxu0 0
  %492 = vmatmul.mubr.bf16.gmra.mxu0 %v278
  %v493 = vpop.f32.mrf.mxu0
  %v494 = vadd.f32 0.0, %v493
  %v495 = vpop.f32.mrf.mxu0
  %v496 = vpop.f32.mrf.mxu0
  %v497 = vadd.f32 0.0, %v496
  %v498 = vpop.f32.mrf.mxu0
  %499 = vmatprep.mubr.bf16.mxu0 0
  %500 = vmatmul.mubr.bf16.gmra.mxu0 %v281
  %v501 = vpop.f32.mrf.mxu0
  %v502 = vadd.f32 0.0, %v501
  %v503 = vpop.f32.mrf.mxu0
  %v504 = vpop.f32.mrf.mxu0
  %v505 = vadd.f32 0.0, %v504
  %v506 = vpop.f32.mrf.mxu0
  %507 = vmatprep.mubr.bf16.mxu0 0
  %508 = vmatmul.mubr.bf16.gmra.mxu0 %v284
  %v509 = vpop.f32.mrf.mxu0
  %v510 = vadd.f32 0.0, %v509
  %v511 = vpop.f32.mrf.mxu0
  %v512 = vpop.f32.mrf.mxu0
  %v513 = vadd.f32 0.0, %v512
  %v514 = vpop.f32.mrf.mxu0
  %515 = vmatprep.mubr.bf16.mxu0 0
  %516 = vmatmul.mubr.bf16.gmra.mxu0 %v287
  %v517 = vpop.f32.mrf.mxu0
  %v518 = vadd.f32 0.0, %v517
  %v519 = vpop.f32.mrf.mxu0
  %v520 = vpop.f32.mrf.mxu0
  %v521 = vadd.f32 0.0, %v520
  %v522 = vpop.f32.mrf.mxu0
  %523 = vmatprep.mubr.bf16.mxu0 0
  %524 = vmatmul.mubr.bf16.gmra.mxu0 %v290
  %v525 = vpop.f32.mrf.mxu0
  %v526 = vadd.f32 0.0, %v525
  %v527 = vpop.f32.mrf.mxu0
  %v528 = vpop.f32.mrf.mxu0
  %v529 = vpop.f32.mrf.mxu0
  %530 = vdwg.mxu0
  %v532 = vlaneseq
  %v533 = vshrl.u32 %v532, 7
  %v534 = vsub.s32 0, %v533
  %v535 = vrot.slane %v31, %v534
  %v537 = vmul.f32 %v334, %v535
  %v538 = vmul.f32 %v337, %v535
  %v539 = vmul.f32 %v342, %v535
  %v540 = vmul.f32 %v345, %v535
  %v541 = vmul.f32 %v350, %v535
  %v542 = vmul.f32 %v353, %v535
  %v543 = vmul.f32 %v358, %v535
  %v544 = vmul.f32 %v361, %v535
  %v545 = vmul.f32 %v366, %v535
  %v546 = vmul.f32 %v369, %v535
  %v547 = vmul.f32 %v374, %v535
  %v548 = vmul.f32 %v377, %v535
  %v549 = vmul.f32 %v382, %v535
  %v550 = vmul.f32 %v385, %v535
  %v551 = vmul.f32 %v390, %v535
  %v552 = vmul.f32 %v393, %v535
  %v553 = vmul.f32 %v398, %v535
  %v554 = vmul.f32 %v401, %v535
  %v555 = vmul.f32 %v406, %v535
  %v556 = vmul.f32 %v409, %v535
  %v557 = vmul.f32 %v414, %v535
  %v558 = vmul.f32 %v417, %v535
  %v559 = vmul.f32 %v422, %v535
  %v560 = vmul.f32 %v425, %v535
  %v561 = vmul.f32 %v430, %v535
  %v562 = vmul.f32 %v433, %v535
  %v563 = vmul.f32 %v438, %v535
  %v564 = vmul.f32 %v441, %v535
  %v565 = vmul.f32 %v446, %v535
  %v566 = vmul.f32 %v449, %v535
  %v567 = vmul.f32 %v454, %v535
  %v568 = vmul.f32 %v457, %v535
  %v569 = vmul.f32 %v462, %v535
  %v570 = vmul.f32 %v465, %v535
  %v571 = vmul.f32 %v470, %v535
  %v572 = vmul.f32 %v473, %v535
  %v573 = vmul.f32 %v478, %v535
  %v574 = vmul.f32 %v481, %v535
  %v575 = vmul.f32 %v486, %v535
  %v576 = vmul.f32 %v489, %v535
  %v577 = vmul.f32 %v494, %v535
  %v578 = vmul.f32 %v497, %v535
  %v579 = vmul.f32 %v502, %v535
  %v580 = vmul.f32 %v505, %v535
  %v581 = vmul.f32 %v510, %v535
  %v582 = vmul.f32 %v513, %v535
  %v583 = vmul.f32 %v518, %v535
  %v584 = vmul.f32 %v521, %v535
  %v585 = vmul.f32 %v526, %v535
  %v587 = vlaneseq
  %v588 = vshrl.u32 %v587, 7
  %v589 = vsub.s32 0, %v588
  %v590 = vrot.slane %v32, %v589
  %v592 = vadd.f32 %v537, %v590
  %v593 = vadd.f32 %v538, %v590
  %v594 = vadd.f32 %v539, %v590
  %v595 = vadd.f32 %v540, %v590
  %v596 = vadd.f32 %v541, %v590
  %v597 = vadd.f32 %v542, %v590
  %v598 = vadd.f32 %v543, %v590
  %v599 = vadd.f32 %v544, %v590
  %v600 = vadd.f32 %v545, %v590
  %v601 = vadd.f32 %v546, %v590
  %v602 = vadd.f32 %v547, %v590
  %v603 = vadd.f32 %v548, %v590
  %v604 = vadd.f32 %v549, %v590
  %v605 = vadd.f32 %v550, %v590
  %v606 = vadd.f32 %v551, %v590
  %v607 = vadd.f32 %v552, %v590
  %v608 = vadd.f32 %v553, %v590
  %v609 = vadd.f32 %v554, %v590
  %v610 = vadd.f32 %v555, %v590
  %v611 = vadd.f32 %v556, %v590
  %v612 = vadd.f32 %v557, %v590
  %v613 = vadd.f32 %v558, %v590
  %v614 = vadd.f32 %v559, %v590
  %v615 = vadd.f32 %v560, %v590
  %v616 = vadd.f32 %v561, %v590
  %v617 = vadd.f32 %v562, %v590
  %v618 = vadd.f32 %v563, %v590
  %v619 = vadd.f32 %v564, %v590
  %v620 = vadd.f32 %v565, %v590
  %v621 = vadd.f32 %v566, %v590
  %v622 = vadd.f32 %v567, %v590
  %v623 = vadd.f32 %v568, %v590
  %v624 = vadd.f32 %v569, %v590
  %v625 = vadd.f32 %v570, %v590
  %v626 = vadd.f32 %v571, %v590
  %v627 = vadd.f32 %v572, %v590
  %v628 = vadd.f32 %v573, %v590
  %v629 = vadd.f32 %v574, %v590
  %v630 = vadd.f32 %v575, %v590
  %v631 = vadd.f32 %v576, %v590
  %v632 = vadd.f32 %v577, %v590
  %v633 = vadd.f32 %v578, %v590
  %v634 = vadd.f32 %v579, %v590
  %v635 = vadd.f32 %v580, %v590
  %v636 = vadd.f32 %v581, %v590
  %v637 = vadd.f32 %v582, %v590
  %v638 = vadd.f32 %v583, %v590
  %v639 = vadd.f32 %v584, %v590
  %v640 = vadd.f32 %v585, %v590
  %v641 = vmax.f32 %v592, 0.0
  %v642 = vmax.f32 %v593, 0.0
  %v643 = vmax.f32 %v594, 0.0
  %v644 = vmax.f32 %v595, 0.0
  %v645 = vmax.f32 %v596, 0.0
  %v646 = vmax.f32 %v597, 0.0
  %v647 = vmax.f32 %v598, 0.0
  %v648 = vmax.f32 %v599, 0.0
  %v649 = vmax.f32 %v600, 0.0
  %v650 = vmax.f32 %v601, 0.0
  %v651 = vmax.f32 %v602, 0.0
  %v652 = vmax.f32 %v603, 0.0
  %v653 = vmax.f32 %v604, 0.0
  %v654 = vmax.f32 %v605, 0.0
  %v655 = vmax.f32 %v606, 0.0
  %v656 = vmax.f32 %v607, 0.0
  %v657 = vmax.f32 %v608, 0.0
  %v658 = vmax.f32 %v609, 0.0
  %v659 = vmax.f32 %v610, 0.0
  %v660 = vmax.f32 %v611, 0.0
  %v661 = vmax.f32 %v612, 0.0
  %v662 = vmax.f32 %v613, 0.0
  %v663 = vmax.f32 %v614, 0.0
  %v664 = vmax.f32 %v615, 0.0
  %v665 = vmax.f32 %v616, 0.0
  %v666 = vmax.f32 %v617, 0.0
  %v667 = vmax.f32 %v618, 0.0
  %v668 = vmax.f32 %v619, 0.0
  %v669 = vmax.f32 %v620, 0.0
  %v670 = vmax.f32 %v621, 0.0
  %v671 = vmax.f32 %v622, 0.0
  %v672 = vmax.f32 %v623, 0.0
  %v673 = vmax.f32 %v624, 0.0
  %v674 = vmax.f32 %v625, 0.0
  %v675 = vmax.f32 %v626, 0.0
  %v676 = vmax.f32 %v627, 0.0
  %v677 = vmax.f32 %v628, 0.0
  %v678 = vmax.f32 %v629, 0.0
  %v679 = vmax.f32 %v630, 0.0
  %v680 = vmax.f32 %v631, 0.0
  %v681 = vmax.f32 %v632, 0.0
  %v682 = vmax.f32 %v633, 0.0
  %v683 = vmax.f32 %v634, 0.0
  %v684 = vmax.f32 %v635, 0.0
  %v685 = vmax.f32 %v636, 0.0
  %v686 = vmax.f32 %v637, 0.0
  %v687 = vmax.f32 %v638, 0.0
  %v688 = vmax.f32 %v639, 0.0
  %v689 = vmax.f32 %v640, 0.0
  %v690 = vld [vmem:[%s1] sm:$0xf]
  %v691 = vld [vmem:[%s1 + $0x4] sm:$0xf]
  %v692 = vld [vmem:[%s1 + $0x8] sm:$0xf]
  %v693 = vld [vmem:[%s1 + $0xc] sm:$0xf]
  %v694 = vld [vmem:[%s1 + $0x10] sm:$0xf]
  %v695 = vld [vmem:[%s1 + $0x14] sm:$0xf]
  %v696 = vld [vmem:[%s1 + $0x18] sm:$0xf]
  %v697 = vld [vmem:[%s1 + $0x1c] sm:$0xf]
  %v698 = vld [vmem:[%s1 + $0x20] sm:$0xf]
  %v699 = vld [vmem:[%s1 + $0x24] sm:$0xf]
  %v700 = vld [vmem:[%s1 + $0x28] sm:$0xf]
  %v701 = vld [vmem:[%s1 + $0x2c] sm:$0xf]
  %v702 = vld [vmem:[%s1 + $0x30] sm:$0xf]
  %v703 = vld [vmem:[%s1 + $0x34] sm:$0xf]
  %v704 = vld [vmem:[%s1 + $0x38] sm:$0xf]
  %v705 = vld [vmem:[%s1 + $0x3c] sm:$0xf]
  %v706 = vld [vmem:[%s1 + $0x40] sm:$0xf]
  %v707 = vld [vmem:[%s1 + $0x44] sm:$0xf]
  %v708 = vld [vmem:[%s1 + $0x48] sm:$0xf]
  %v709 = vld [vmem:[%s1 + $0x4c] sm:$0xf]
  %v710 = vld [vmem:[%s1 + $0x50] sm:$0xf]
  %v711 = vld [vmem:[%s1 + $0x54] sm:$0xf]
  %v712 = vld [vmem:[%s1 + $0x58] sm:$0xf]
  %v713 = vld [vmem:[%s1 + $0x5c] sm:$0xf]
  %v714 = vld [vmem:[%s1 + $0x60] sm:$0xf]
  %v715 = vld [vmem:[%s1 + $0x64] sm:$0xf]
  %v716 = vld [vmem:[%s1 + $0x68] sm:$0xf]
  %v717 = vld [vmem:[%s1 + $0x6c] sm:$0xf]
  %v718 = vld [vmem:[%s1 + $0x70] sm:$0xf]
  %v719 = vld [vmem:[%s1 + $0x74] sm:$0xf]
  %v720 = vld [vmem:[%s1 + $0x78] sm:$0xf]
  %v721 = vld [vmem:[%s1 + $0x7c] sm:$0xf]
  %v722 = vld [vmem:[%s1 + $0x80] sm:$0xf]
  %v723 = vld [vmem:[%s1 + $0x84] sm:$0xf]
  %v724 = vld [vmem:[%s1 + $0x88] sm:$0xf]
  %v725 = vld [vmem:[%s1 + $0x8c] sm:$0xf]
  %v726 = vld [vmem:[%s1 + $0x90] sm:$0xf]
  %v727 = vld [vmem:[%s1 + $0x94] sm:$0xf]
  %v728 = vld [vmem:[%s1 + $0x98] sm:$0xf]
  %v729 = vld [vmem:[%s1 + $0x9c] sm:$0xf]
  %v730 = vld [vmem:[%s1 + $0xa0] sm:$0xf]
  %v731 = vld [vmem:[%s1 + $0xa4] sm:$0xf]
  %v732 = vld [vmem:[%s1 + $0xa8] sm:$0xf]
  %v733 = vld [vmem:[%s1 + $0xac] sm:$0xf]
  %v734 = vld [vmem:[%s1 + $0xb0] sm:$0xf]
  %v735 = vld [vmem:[%s1 + $0xb4] sm:$0xf]
  %v736 = vld [vmem:[%s1 + $0xb8] sm:$0xf]
  %v737 = vld [vmem:[%s1 + $0xbc] sm:$0xf]
  %v738 = vld [vmem:[%s1 + $0xc0] sm:$0xf]
  %v788 = vunpack.c.l.b16 %v690
  %v789 = vunpack.c.l.b16 %v691
  %v790 = vunpack.c.l.b16 %v692
  %v791 = vunpack.c.l.b16 %v693
  %v792 = vunpack.c.l.b16 %v694
  %v793 = vunpack.c.l.b16 %v695
  %v794 = vunpack.c.l.b16 %v696
  %v795 = vunpack.c.l.b16 %v697
  %v796 = vunpack.c.l.b16 %v698
  %v797 = vunpack.c.l.b16 %v699
  %v798 = vunpack.c.l.b16 %v700
  %v799 = vunpack.c.l.b16 %v701
  %v800 = vunpack.c.l.b16 %v702
  %v801 = vunpack.c.l.b16 %v703
  %v802 = vunpack.c.l.b16 %v704
  %v803 = vunpack.c.l.b16 %v705
  %v804 = vunpack.c.l.b16 %v706
  %v805 = vunpack.c.l.b16 %v707
  %v806 = vunpack.c.l.b16 %v708
  %v807 = vunpack.c.l.b16 %v709
  %v808 = vunpack.c.l.b16 %v710
  %v809 = vunpack.c.l.b16 %v711
  %v810 = vunpack.c.l.b16 %v712
  %v811 = vunpack.c.l.b16 %v713
  %v812 = vunpack.c.l.b16 %v714
  %v813 = vunpack.c.l.b16 %v715
  %v814 = vunpack.c.l.b16 %v716
  %v815 = vunpack.c.l.b16 %v717
  %v816 = vunpack.c.l.b16 %v718
  %v817 = vunpack.c.l.b16 %v719
  %v818 = vunpack.c.l.b16 %v720
  %v819 = vunpack.c.l.b16 %v721
  %v820 = vunpack.c.l.b16 %v722
  %v821 = vunpack.c.l.b16 %v723
  %v822 = vunpack.c.l.b16 %v724
  %v823 = vunpack.c.l.b16 %v725
  %v824 = vunpack.c.l.b16 %v726
  %v825 = vunpack.c.l.b16 %v727
  %v826 = vunpack.c.l.b16 %v728
  %v827 = vunpack.c.l.b16 %v729
  %v828 = vunpack.c.l.b16 %v730
  %v829 = vunpack.c.l.b16 %v731
  %v830 = vunpack.c.l.b16 %v732
  %v831 = vunpack.c.l.b16 %v733
  %v832 = vunpack.c.l.b16 %v734
  %v833 = vunpack.c.l.b16 %v735
  %v834 = vunpack.c.l.b16 %v736
  %v835 = vunpack.c.l.b16 %v737
  %v836 = vunpack.c.l.b16 %v738
  %v837 = vpack.c.b16 %v789, %v788
  %v838 = vpack.c.b16 %v791, %v790
  %v839 = vpack.c.b16 %v793, %v792
  %v840 = vpack.c.b16 %v795, %v794
  %v841 = vpack.c.b16 %v797, %v796
  %v842 = vpack.c.b16 %v799, %v798
  %v843 = vpack.c.b16 %v801, %v800
  %v844 = vpack.c.b16 %v803, %v802
  %v845 = vpack.c.b16 %v805, %v804
  %v846 = vpack.c.b16 %v807, %v806
  %v847 = vpack.c.b16 %v809, %v808
  %v848 = vpack.c.b16 %v811, %v810
  %v849 = vpack.c.b16 %v813, %v812
  %v850 = vpack.c.b16 %v815, %v814
  %v851 = vpack.c.b16 %v817, %v816
  %v852 = vpack.c.b16 %v819, %v818
  %v853 = vpack.c.b16 %v821, %v820
  %v854 = vpack.c.b16 %v823, %v822
  %v855 = vpack.c.b16 %v825, %v824
  %v856 = vpack.c.b16 %v827, %v826
  %v857 = vpack.c.b16 %v829, %v828
  %v858 = vpack.c.b16 %v831, %v830
  %v859 = vpack.c.b16 %v833, %v832
  %v860 = vpack.c.b16 %v835, %v834
  %v861 = vpack.c.b16 %v836, %v836
  %v863 = vsel %vm216, %v837, 0
  %v866 = vsel %vm216, %v838, 0
  %v869 = vsel %vm216, %v839, 0
  %v872 = vsel %vm216, %v840, 0
  %v875 = vsel %vm216, %v841, 0
  %v878 = vsel %vm216, %v842, 0
  %v881 = vsel %vm216, %v843, 0
  %v884 = vsel %vm216, %v844, 0
  %v887 = vsel %vm216, %v845, 0
  %v890 = vsel %vm216, %v846, 0
  %v893 = vsel %vm216, %v847, 0
  %v896 = vsel %vm216, %v848, 0
  %v899 = vsel %vm216, %v849, 0
  %v902 = vsel %vm216, %v850, 0
  %v905 = vsel %vm216, %v851, 0
  %v908 = vsel %vm216, %v852, 0
  %v911 = vsel %vm216, %v853, 0
  %v914 = vsel %vm216, %v854, 0
  %v917 = vsel %vm216, %v855, 0
  %v920 = vsel %vm216, %v856, 0
  %v923 = vsel %vm216, %v857, 0
  %v926 = vsel %vm216, %v858, 0
  %v929 = vsel %vm216, %v859, 0
  %v932 = vsel %vm216, %v860, 0
  %v935 = vsel %vm216, %v861, 0
  %937 = vmatprep.subr.bf16.mxu0 0
  %938 = vmatpush1.bf16.msra.mxu0 0
  %939 = vmatprep.subr.bf16.mxu0 0
  %940 = vmatpush1.bf16.msra.mxu0 0
  %941 = vmatprep.subr.bf16.mxu0 0
  %942 = vmatpush1.bf16.msra.mxu0 0
  %943 = vmatprep.subr.bf16.mxu0 0
  %944 = vmatpush1.bf16.msra.mxu0 0
  %945 = vmatprep.subr.bf16.mxu0 0
  %946 = vmatpush1.bf16.msra.mxu0 0
  %947 = vmatprep.subr.bf16.mxu0 0
  %948 = vmatpush1.bf16.msra.mxu0 0
  %949 = vmatprep.subr.bf16.mxu0 0
  %950 = vmatpush1.bf16.msra.mxu0 %v297
  %951 = vmatprep.subr.bf16.mxu0 0
  %952 = vmatpush1.bf16.msra.mxu0 %v213
  %953 = vmatprep.subr.bf16.mxu0 0
  %954 = vmatpush2.bf16.msra.mxu0 0
  %955 = vmatprep.subr.bf16.mxu0 0
  %956 = vmatpush2.bf16.msra.mxu0 0
  %957 = vmatprep.subr.bf16.mxu0 0
  %958 = vmatpush2.bf16.msra.mxu0 0
  %959 = vmatprep.subr.bf16.mxu0 0
  %960 = vmatpush2.bf16.msra.mxu0 0
  %961 = vmatprep.subr.bf16.mxu0 0
  %962 = vmatpush2.bf16.msra.mxu0 0
  %963 = vmatprep.subr.bf16.mxu0 0
  %964 = vmatpush2.bf16.msra.mxu0 0
  %965 = vmatprep.subr.bf16.mxu0 0
  %966 = vmatpush2.bf16.msra.mxu0 0
  %967 = vmatprep.subr.bf16.mxu0 0
  %968 = vmatpush2.bf16.msra.mxu0 0
  %969 = vmatprep.mubr.bf16.mxu0 0
  %970 = vmatmul.mubr.bf16.gmra.mxu0 %v863
  %v971 = vpop.f32.mrf.mxu0
  %v972 = vadd.f32 0.0, %v971
  %v973 = vpop.f32.mrf.mxu0
  %v974 = vpop.f32.mrf.mxu0
  %v975 = vadd.f32 0.0, %v974
  %v976 = vpop.f32.mrf.mxu0
  %977 = vmatprep.mubr.bf16.mxu0 0
  %978 = vmatmul.mubr.bf16.gmra.mxu0 %v866
  %v979 = vpop.f32.mrf.mxu0
  %v980 = vadd.f32 0.0, %v979
  %v981 = vpop.f32.mrf.mxu0
  %v982 = vpop.f32.mrf.mxu0
  %v983 = vadd.f32 0.0, %v982
  %v984 = vpop.f32.mrf.mxu0
  %985 = vmatprep.mubr.bf16.mxu0 0
  %986 = vmatmul.mubr.bf16.gmra.mxu0 %v869
  %v987 = vpop.f32.mrf.mxu0
  %v988 = vadd.f32 0.0, %v987
  %v989 = vpop.f32.mrf.mxu0
  %v990 = vpop.f32.mrf.mxu0
  %v991 = vadd.f32 0.0, %v990
  %v992 = vpop.f32.mrf.mxu0
  %993 = vmatprep.mubr.bf16.mxu0 0
  %994 = vmatmul.mubr.bf16.gmra.mxu0 %v872
  %v995 = vpop.f32.mrf.mxu0
  %v996 = vadd.f32 0.0, %v995
  %v997 = vpop.f32.mrf.mxu0
  %v998 = vpop.f32.mrf.mxu0
  %v999 = vadd.f32 0.0, %v998
  %v1000 = vpop.f32.mrf.mxu0
  %1001 = vmatprep.mubr.bf16.mxu0 0
  %1002 = vmatmul.mubr.bf16.gmra.mxu0 %v875
  %v1003 = vpop.f32.mrf.mxu0
  %v1004 = vadd.f32 0.0, %v1003
  %v1005 = vpop.f32.mrf.mxu0
  %v1006 = vpop.f32.mrf.mxu0
  %v1007 = vadd.f32 0.0, %v1006
  %v1008 = vpop.f32.mrf.mxu0
  %1009 = vmatprep.mubr.bf16.mxu0 0
  %1010 = vmatmul.mubr.bf16.gmra.mxu0 %v878
  %v1011 = vpop.f32.mrf.mxu0
  %v1012 = vadd.f32 0.0, %v1011
  %v1013 = vpop.f32.mrf.mxu0
  %v1014 = vpop.f32.mrf.mxu0
  %v1015 = vadd.f32 0.0, %v1014
  %v1016 = vpop.f32.mrf.mxu0
  %1017 = vmatprep.mubr.bf16.mxu0 0
  %1018 = vmatmul.mubr.bf16.gmra.mxu0 %v881
  %v1019 = vpop.f32.mrf.mxu0
  %v1020 = vadd.f32 0.0, %v1019
  %v1021 = vpop.f32.mrf.mxu0
  %v1022 = vpop.f32.mrf.mxu0
  %v1023 = vadd.f32 0.0, %v1022
  %v1024 = vpop.f32.mrf.mxu0
  %1025 = vmatprep.mubr.bf16.mxu0 0
  %1026 = vmatmul.mubr.bf16.gmra.mxu0 %v884
  %v1027 = vpop.f32.mrf.mxu0
  %v1028 = vadd.f32 0.0, %v1027
  %v1029 = vpop.f32.mrf.mxu0
  %v1030 = vpop.f32.mrf.mxu0
  %v1031 = vadd.f32 0.0, %v1030
  %v1032 = vpop.f32.mrf.mxu0
  %1033 = vmatprep.mubr.bf16.mxu0 0
  %1034 = vmatmul.mubr.bf16.gmra.mxu0 %v887
  %v1035 = vpop.f32.mrf.mxu0
  %v1036 = vadd.f32 0.0, %v1035
  %v1037 = vpop.f32.mrf.mxu0
  %v1038 = vpop.f32.mrf.mxu0
  %v1039 = vadd.f32 0.0, %v1038
  %v1040 = vpop.f32.mrf.mxu0
  %1041 = vmatprep.mubr.bf16.mxu0 0
  %1042 = vmatmul.mubr.bf16.gmra.mxu0 %v890
  %v1043 = vpop.f32.mrf.mxu0
  %v1044 = vadd.f32 0.0, %v1043
  %v1045 = vpop.f32.mrf.mxu0
  %v1046 = vpop.f32.mrf.mxu0
  %v1047 = vadd.f32 0.0, %v1046
  %v1048 = vpop.f32.mrf.mxu0
  %1049 = vmatprep.mubr.bf16.mxu0 0
  %1050 = vmatmul.mubr.bf16.gmra.mxu0 %v893
  %v1051 = vpop.f32.mrf.mxu0
  %v1052 = vadd.f32 0.0, %v1051
  %v1053 = vpop.f32.mrf.mxu0
  %v1054 = vpop.f32.mrf.mxu0
  %v1055 = vadd.f32 0.0, %v1054
  %v1056 = vpop.f32.mrf.mxu0
  %1057 = vmatprep.mubr.bf16.mxu0 0
  %1058 = vmatmul.mubr.bf16.gmra.mxu0 %v896
  %v1059 = vpop.f32.mrf.mxu0
  %v1060 = vadd.f32 0.0, %v1059
  %v1061 = vpop.f32.mrf.mxu0
  %v1062 = vpop.f32.mrf.mxu0
  %v1063 = vadd.f32 0.0, %v1062
  %v1064 = vpop.f32.mrf.mxu0
  %1065 = vmatprep.mubr.bf16.mxu0 0
  %1066 = vmatmul.mubr.bf16.gmra.mxu0 %v899
  %v1067 = vpop.f32.mrf.mxu0
  %v1068 = vadd.f32 0.0, %v1067
  %v1069 = vpop.f32.mrf.mxu0
  %v1070 = vpop.f32.mrf.mxu0
  %v1071 = vadd.f32 0.0, %v1070
  %v1072 = vpop.f32.mrf.mxu0
  %1073 = vmatprep.mubr.bf16.mxu0 0
  %1074 = vmatmul.mubr.bf16.gmra.mxu0 %v902
  %v1075 = vpop.f32.mrf.mxu0
  %v1076 = vadd.f32 0.0, %v1075
  %v1077 = vpop.f32.mrf.mxu0
  %v1078 = vpop.f32.mrf.mxu0
  %v1079 = vadd.f32 0.0, %v1078
  %v1080 = vpop.f32.mrf.mxu0
  %1081 = vmatprep.mubr.bf16.mxu0 0
  %1082 = vmatmul.mubr.bf16.gmra.mxu0 %v905
  %v1083 = vpop.f32.mrf.mxu0
  %v1084 = vadd.f32 0.0, %v1083
  %v1085 = vpop.f32.mrf.mxu0
  %v1086 = vpop.f32.mrf.mxu0
  %v1087 = vadd.f32 0.0, %v1086
  %v1088 = vpop.f32.mrf.mxu0
  %1089 = vmatprep.mubr.bf16.mxu0 0
  %1090 = vmatmul.mubr.bf16.gmra.mxu0 %v908
  %v1091 = vpop.f32.mrf.mxu0
  %v1092 = vadd.f32 0.0, %v1091
  %v1093 = vpop.f32.mrf.mxu0
  %v1094 = vpop.f32.mrf.mxu0
  %v1095 = vadd.f32 0.0, %v1094
  %v1096 = vpop.f32.mrf.mxu0
  %1097 = vmatprep.mubr.bf16.mxu0 0
  %1098 = vmatmul.mubr.bf16.gmra.mxu0 %v911
  %v1099 = vpop.f32.mrf.mxu0
  %v1100 = vadd.f32 0.0, %v1099
  %v1101 = vpop.f32.mrf.mxu0
  %v1102 = vpop.f32.mrf.mxu0
  %v1103 = vadd.f32 0.0, %v1102
  %v1104 = vpop.f32.mrf.mxu0
  %1105 = vmatprep.mubr.bf16.mxu0 0
  %1106 = vmatmul.mubr.bf16.gmra.mxu0 %v914
  %v1107 = vpop.f32.mrf.mxu0
  %v1108 = vadd.f32 0.0, %v1107
  %v1109 = vpop.f32.mrf.mxu0
  %v1110 = vpop.f32.mrf.mxu0
  %v1111 = vadd.f32 0.0, %v1110
  %v1112 = vpop.f32.mrf.mxu0
  %1113 = vmatprep.mubr.bf16.mxu0 0
  %1114 = vmatmul.mubr.bf16.gmra.mxu0 %v917
  %v1115 = vpop.f32.mrf.mxu0
  %v1116 = vadd.f32 0.0, %v1115
  %v1117 = vpop.f32.mrf.mxu0
  %v1118 = vpop.f32.mrf.mxu0
  %v1119 = vadd.f32 0.0, %v1118
  %v1120 = vpop.f32.mrf.mxu0
  %1121 = vmatprep.mubr.bf16.mxu0 0
  %1122 = vmatmul.mubr.bf16.gmra.mxu0 %v920
  %v1123 = vpop.f32.mrf.mxu0
  %v1124 = vadd.f32 0.0, %v1123
  %v1125 = vpop.f32.mrf.mxu0
  %v1126 = vpop.f32.mrf.mxu0
  %v1127 = vadd.f32 0.0, %v1126
  %v1128 = vpop.f32.mrf.mxu0
  %1129 = vmatprep.mubr.bf16.mxu0 0
  %1130 = vmatmul.mubr.bf16.gmra.mxu0 %v923
  %v1131 = vpop.f32.mrf.mxu0
  %v1132 = vadd.f32 0.0, %v1131
  %v1133 = vpop.f32.mrf.mxu0
  %v1134 = vpop.f32.mrf.mxu0
  %v1135 = vadd.f32 0.0, %v1134
  %v1136 = vpop.f32.mrf.mxu0
  %1137 = vmatprep.mubr.bf16.mxu0 0
  %1138 = vmatmul.mubr.bf16.gmra.mxu0 %v926
  %v1139 = vpop.f32.mrf.mxu0
  %v1140 = vadd.f32 0.0, %v1139
  %v1141 = vpop.f32.mrf.mxu0
  %v1142 = vpop.f32.mrf.mxu0
  %v1143 = vadd.f32 0.0, %v1142
  %v1144 = vpop.f32.mrf.mxu0
  %1145 = vmatprep.mubr.bf16.mxu0 0
  %1146 = vmatmul.mubr.bf16.gmra.mxu0 %v929
  %v1147 = vpop.f32.mrf.mxu0
  %v1148 = vadd.f32 0.0, %v1147
  %v1149 = vpop.f32.mrf.mxu0
  %v1150 = vpop.f32.mrf.mxu0
  %v1151 = vadd.f32 0.0, %v1150
  %v1152 = vpop.f32.mrf.mxu0
  %1153 = vmatprep.mubr.bf16.mxu0 0
  %1154 = vmatmul.mubr.bf16.gmra.mxu0 %v932
  %v1155 = vpop.f32.mrf.mxu0
  %v1156 = vadd.f32 0.0, %v1155
  %v1157 = vpop.f32.mrf.mxu0
  %v1158 = vpop.f32.mrf.mxu0
  %v1159 = vadd.f32 0.0, %v1158
  %v1160 = vpop.f32.mrf.mxu0
  %1161 = vmatprep.mubr.bf16.mxu0 0
  %1162 = vmatmul.mubr.bf16.gmra.mxu0 %v935
  %v1163 = vpop.f32.mrf.mxu0
  %v1164 = vadd.f32 0.0, %v1163
  %v1165 = vpop.f32.mrf.mxu0
  %v1166 = vpop.f32.mrf.mxu0
  %v1167 = vpop.f32.mrf.mxu0
  %1168 = vdwg.mxu0
  %v1169 = vmul.f32 %v972, %v535
  %v1170 = vmul.f32 %v975, %v535
  %v1171 = vmul.f32 %v980, %v535
  %v1172 = vmul.f32 %v983, %v535
  %v1173 = vmul.f32 %v988, %v535
  %v1174 = vmul.f32 %v991, %v535
  %v1175 = vmul.f32 %v996, %v535
  %v1176 = vmul.f32 %v999, %v535
  %v1177 = vmul.f32 %v1004, %v535
  %v1178 = vmul.f32 %v1007, %v535
  %v1179 = vmul.f32 %v1012, %v535
  %v1180 = vmul.f32 %v1015, %v535
  %v1181 = vmul.f32 %v1020, %v535
  %v1182 = vmul.f32 %v1023, %v535
  %v1183 = vmul.f32 %v1028, %v535
  %v1184 = vmul.f32 %v1031, %v535
  %v1185 = vmul.f32 %v1036, %v535
  %v1186 = vmul.f32 %v1039, %v535
  %v1187 = vmul.f32 %v1044, %v535
  %v1188 = vmul.f32 %v1047, %v535
  %v1189 = vmul.f32 %v1052, %v535
  %v1190 = vmul.f32 %v1055, %v535
  %v1191 = vmul.f32 %v1060, %v535
  %v1192 = vmul.f32 %v1063, %v535
  %v1193 = vmul.f32 %v1068, %v535
  %v1194 = vmul.f32 %v1071, %v535
  %v1195 = vmul.f32 %v1076, %v535
  %v1196 = vmul.f32 %v1079, %v535
  %v1197 = vmul.f32 %v1084, %v535
  %v1198 = vmul.f32 %v1087, %v535
  %v1199 = vmul.f32 %v1092, %v535
  %v1200 = vmul.f32 %v1095, %v535
  %v1201 = vmul.f32 %v1100, %v535
  %v1202 = vmul.f32 %v1103, %v535
  %v1203 = vmul.f32 %v1108, %v535
  %v1204 = vmul.f32 %v1111, %v535
  %v1205 = vmul.f32 %v1116, %v535
  %v1206 = vmul.f32 %v1119, %v535
  %v1207 = vmul.f32 %v1124, %v535
  %v1208 = vmul.f32 %v1127, %v535
  %v1209 = vmul.f32 %v1132, %v535
  %v1210 = vmul.f32 %v1135, %v535
  %v1211 = vmul.f32 %v1140, %v535
  %v1212 = vmul.f32 %v1143, %v535
  %v1213 = vmul.f32 %v1148, %v535
  %v1214 = vmul.f32 %v1151, %v535
  %v1215 = vmul.f32 %v1156, %v535
  %v1216 = vmul.f32 %v1159, %v535
  %v1217 = vmul.f32 %v1164, %v535
  %v1218 = vadd.f32 %v1169, %v590
  %v1219 = vadd.f32 %v1170, %v590
  %v1220 = vadd.f32 %v1171, %v590
  %v1221 = vadd.f32 %v1172, %v590
  %v1222 = vadd.f32 %v1173, %v590
  %v1223 = vadd.f32 %v1174, %v590
  %v1224 = vadd.f32 %v1175, %v590
  %v1225 = vadd.f32 %v1176, %v590
  %v1226 = vadd.f32 %v1177, %v590
  %v1227 = vadd.f32 %v1178, %v590
  %v1228 = vadd.f32 %v1179, %v590
  %v1229 = vadd.f32 %v1180, %v590
  %v1230 = vadd.f32 %v1181, %v590
  %v1231 = vadd.f32 %v1182, %v590
  %v1232 = vadd.f32 %v1183, %v590
  %v1233 = vadd.f32 %v1184, %v590
  %v1234 = vadd.f32 %v1185, %v590
  %v1235 = vadd.f32 %v1186, %v590
  %v1236 = vadd.f32 %v1187, %v590
  %v1237 = vadd.f32 %v1188, %v590
  %v1238 = vadd.f32 %v1189, %v590
  %v1239 = vadd.f32 %v1190, %v590
  %v1240 = vadd.f32 %v1191, %v590
  %v1241 = vadd.f32 %v1192, %v590
  %v1242 = vadd.f32 %v1193, %v590
  %v1243 = vadd.f32 %v1194, %v590
  %v1244 = vadd.f32 %v1195, %v590
  %v1245 = vadd.f32 %v1196, %v590
  %v1246 = vadd.f32 %v1197, %v590
  %v1247 = vadd.f32 %v1198, %v590
  %v1248 = vadd.f32 %v1199, %v590
  %v1249 = vadd.f32 %v1200, %v590
  %v1250 = vadd.f32 %v1201, %v590
  %v1251 = vadd.f32 %v1202, %v590
  %v1252 = vadd.f32 %v1203, %v590
  %v1253 = vadd.f32 %v1204, %v590
  %v1254 = vadd.f32 %v1205, %v590
  %v1255 = vadd.f32 %v1206, %v590
  %v1256 = vadd.f32 %v1207, %v590
  %v1257 = vadd.f32 %v1208, %v590
  %v1258 = vadd.f32 %v1209, %v590
  %v1259 = vadd.f32 %v1210, %v590
  %v1260 = vadd.f32 %v1211, %v590
  %v1261 = vadd.f32 %v1212, %v590
  %v1262 = vadd.f32 %v1213, %v590
  %v1263 = vadd.f32 %v1214, %v590
  %v1264 = vadd.f32 %v1215, %v590
  %v1265 = vadd.f32 %v1216, %v590
  %v1266 = vadd.f32 %v1217, %v590
  %v1267 = vmax.f32 %v1218, 0.0
  %v1268 = vmax.f32 %v1219, 0.0
  %v1269 = vmax.f32 %v1220, 0.0
  %v1270 = vmax.f32 %v1221, 0.0
  %v1271 = vmax.f32 %v1222, 0.0
  %v1272 = vmax.f32 %v1223, 0.0
  %v1273 = vmax.f32 %v1224, 0.0
  %v1274 = vmax.f32 %v1225, 0.0
  %v1275 = vmax.f32 %v1226, 0.0
  %v1276 = vmax.f32 %v1227, 0.0
  %v1277 = vmax.f32 %v1228, 0.0
  %v1278 = vmax.f32 %v1229, 0.0
  %v1279 = vmax.f32 %v1230, 0.0
  %v1280 = vmax.f32 %v1231, 0.0
  %v1281 = vmax.f32 %v1232, 0.0
  %v1282 = vmax.f32 %v1233, 0.0
  %v1283 = vmax.f32 %v1234, 0.0
  %v1284 = vmax.f32 %v1235, 0.0
  %v1285 = vmax.f32 %v1236, 0.0
  %v1286 = vmax.f32 %v1237, 0.0
  %v1287 = vmax.f32 %v1238, 0.0
  %v1288 = vmax.f32 %v1239, 0.0
  %v1289 = vmax.f32 %v1240, 0.0
  %v1290 = vmax.f32 %v1241, 0.0
  %v1291 = vmax.f32 %v1242, 0.0
  %v1292 = vmax.f32 %v1243, 0.0
  %v1293 = vmax.f32 %v1244, 0.0
  %v1294 = vmax.f32 %v1245, 0.0
  %v1295 = vmax.f32 %v1246, 0.0
  %v1296 = vmax.f32 %v1247, 0.0
  %v1297 = vmax.f32 %v1248, 0.0
  %v1298 = vmax.f32 %v1249, 0.0
  %v1299 = vmax.f32 %v1250, 0.0
  %v1300 = vmax.f32 %v1251, 0.0
  %v1301 = vmax.f32 %v1252, 0.0
  %v1302 = vmax.f32 %v1253, 0.0
  %v1303 = vmax.f32 %v1254, 0.0
  %v1304 = vmax.f32 %v1255, 0.0
  %v1305 = vmax.f32 %v1256, 0.0
  %v1306 = vmax.f32 %v1257, 0.0
  %v1307 = vmax.f32 %v1258, 0.0
  %v1308 = vmax.f32 %v1259, 0.0
  %v1309 = vmax.f32 %v1260, 0.0
  %v1310 = vmax.f32 %v1261, 0.0
  %v1311 = vmax.f32 %v1262, 0.0
  %v1312 = vmax.f32 %v1263, 0.0
  %v1313 = vmax.f32 %v1264, 0.0
  %v1314 = vmax.f32 %v1265, 0.0
  %v1315 = vmax.f32 %v1266, 0.0
  %v1316 = vmax.f32 %v641, %v1267
  %v1317 = vmax.f32 %v642, %v1268
  %v1318 = vmax.f32 %v643, %v1269
  %v1319 = vmax.f32 %v644, %v1270
  %v1320 = vmax.f32 %v645, %v1271
  %v1321 = vmax.f32 %v646, %v1272
  %v1322 = vmax.f32 %v647, %v1273
  %v1323 = vmax.f32 %v648, %v1274
  %v1324 = vmax.f32 %v649, %v1275
  %v1325 = vmax.f32 %v650, %v1276
  %v1326 = vmax.f32 %v651, %v1277
  %v1327 = vmax.f32 %v652, %v1278
  %v1328 = vmax.f32 %v653, %v1279
  %v1329 = vmax.f32 %v654, %v1280
  %v1330 = vmax.f32 %v655, %v1281
  %v1331 = vmax.f32 %v656, %v1282
  %v1332 = vmax.f32 %v657, %v1283
  %v1333 = vmax.f32 %v658, %v1284
  %v1334 = vmax.f32 %v659, %v1285
  %v1335 = vmax.f32 %v660, %v1286
  %v1336 = vmax.f32 %v661, %v1287
  %v1337 = vmax.f32 %v662, %v1288
  %v1338 = vmax.f32 %v663, %v1289
  %v1339 = vmax.f32 %v664, %v1290
  %v1340 = vmax.f32 %v665, %v1291
  %v1341 = vmax.f32 %v666, %v1292
  %v1342 = vmax.f32 %v667, %v1293
  %v1343 = vmax.f32 %v668, %v1294
  %v1344 = vmax.f32 %v669, %v1295
  %v1345 = vmax.f32 %v670, %v1296
  %v1346 = vmax.f32 %v671, %v1297
  %v1347 = vmax.f32 %v672, %v1298
  %v1348 = vmax.f32 %v673, %v1299
  %v1349 = vmax.f32 %v674, %v1300
  %v1350 = vmax.f32 %v675, %v1301
  %v1351 = vmax.f32 %v676, %v1302
  %v1352 = vmax.f32 %v677, %v1303
  %v1353 = vmax.f32 %v678, %v1304
  %v1354 = vmax.f32 %v679, %v1305
  %v1355 = vmax.f32 %v680, %v1306
  %v1356 = vmax.f32 %v681, %v1307
  %v1357 = vmax.f32 %v682, %v1308
  %v1358 = vmax.f32 %v683, %v1309
  %v1359 = vmax.f32 %v684, %v1310
  %v1360 = vmax.f32 %v685, %v1311
  %v1361 = vmax.f32 %v686, %v1312
  %v1362 = vmax.f32 %v687, %v1313
  %v1363 = vmax.f32 %v688, %v1314
  %v1364 = vmax.f32 %v689, %v1315
  %v1365 = vld [vmem:[%s2] sm:$0xf]
  %v1366 = vld [vmem:[%s2 + $0x4] sm:$0xf]
  %v1367 = vld [vmem:[%s2 + $0x8] sm:$0xf]
  %v1368 = vld [vmem:[%s2 + $0xc] sm:$0xf]
  %v1369 = vld [vmem:[%s2 + $0x10] sm:$0xf]
  %v1370 = vld [vmem:[%s2 + $0x14] sm:$0xf]
  %v1371 = vld [vmem:[%s2 + $0x18] sm:$0xf]
  %v1372 = vld [vmem:[%s2 + $0x1c] sm:$0xf]
  %v1373 = vld [vmem:[%s2 + $0x20] sm:$0xf]
  %v1374 = vld [vmem:[%s2 + $0x24] sm:$0xf]
  %v1375 = vld [vmem:[%s2 + $0x28] sm:$0xf]
  %v1376 = vld [vmem:[%s2 + $0x2c] sm:$0xf]
  %v1377 = vld [vmem:[%s2 + $0x30] sm:$0xf]
  %v1378 = vld [vmem:[%s2 + $0x34] sm:$0xf]
  %v1379 = vld [vmem:[%s2 + $0x38] sm:$0xf]
  %v1380 = vld [vmem:[%s2 + $0x3c] sm:$0xf]
  %v1381 = vld [vmem:[%s2 + $0x40] sm:$0xf]
  %v1382 = vld [vmem:[%s2 + $0x44] sm:$0xf]
  %v1383 = vld [vmem:[%s2 + $0x48] sm:$0xf]
  %v1384 = vld [vmem:[%s2 + $0x4c] sm:$0xf]
  %v1385 = vld [vmem:[%s2 + $0x50] sm:$0xf]
  %v1386 = vld [vmem:[%s2 + $0x54] sm:$0xf]
  %v1387 = vld [vmem:[%s2 + $0x58] sm:$0xf]
  %v1388 = vld [vmem:[%s2 + $0x5c] sm:$0xf]
  %v1389 = vld [vmem:[%s2 + $0x60] sm:$0xf]
  %v1390 = vld [vmem:[%s2 + $0x64] sm:$0xf]
  %v1391 = vld [vmem:[%s2 + $0x68] sm:$0xf]
  %v1392 = vld [vmem:[%s2 + $0x6c] sm:$0xf]
  %v1393 = vld [vmem:[%s2 + $0x70] sm:$0xf]
  %v1394 = vld [vmem:[%s2 + $0x74] sm:$0xf]
  %v1395 = vld [vmem:[%s2 + $0x78] sm:$0xf]
  %v1396 = vld [vmem:[%s2 + $0x7c] sm:$0xf]
  %v1397 = vld [vmem:[%s2 + $0x80] sm:$0xf]
  %v1398 = vld [vmem:[%s2 + $0x84] sm:$0xf]
  %v1399 = vld [vmem:[%s2 + $0x88] sm:$0xf]
  %v1400 = vld [vmem:[%s2 + $0x8c] sm:$0xf]
  %v1401 = vld [vmem:[%s2 + $0x90] sm:$0xf]
  %v1402 = vld [vmem:[%s2 + $0x94] sm:$0xf]
  %v1403 = vld [vmem:[%s2 + $0x98] sm:$0xf]
  %v1404 = vld [vmem:[%s2 + $0x9c] sm:$0xf]
  %v1405 = vld [vmem:[%s2 + $0xa0] sm:$0xf]
  %v1406 = vld [vmem:[%s2 + $0xa4] sm:$0xf]
  %v1407 = vld [vmem:[%s2 + $0xa8] sm:$0xf]
  %v1408 = vld [vmem:[%s2 + $0xac] sm:$0xf]
  %v1409 = vld [vmem:[%s2 + $0xb0] sm:$0xf]
  %v1410 = vld [vmem:[%s2 + $0xb4] sm:$0xf]
  %v1411 = vld [vmem:[%s2 + $0xb8] sm:$0xf]
  %v1412 = vld [vmem:[%s2 + $0xbc] sm:$0xf]
  %v1413 = vld [vmem:[%s2 + $0xc0] sm:$0xf]
  %v1463 = vunpack.c.l.b16 %v1365
  %v1464 = vunpack.c.l.b16 %v1366
  %v1465 = vunpack.c.l.b16 %v1367
  %v1466 = vunpack.c.l.b16 %v1368
  %v1467 = vunpack.c.l.b16 %v1369
  %v1468 = vunpack.c.l.b16 %v1370
  %v1469 = vunpack.c.l.b16 %v1371
  %v1470 = vunpack.c.l.b16 %v1372
  %v1471 = vunpack.c.l.b16 %v1373
  %v1472 = vunpack.c.l.b16 %v1374
  %v1473 = vunpack.c.l.b16 %v1375
  %v1474 = vunpack.c.l.b16 %v1376
  %v1475 = vunpack.c.l.b16 %v1377
  %v1476 = vunpack.c.l.b16 %v1378
  %v1477 = vunpack.c.l.b16 %v1379
  %v1478 = vunpack.c.l.b16 %v1380
  %v1479 = vunpack.c.l.b16 %v1381
  %v1480 = vunpack.c.l.b16 %v1382
  %v1481 = vunpack.c.l.b16 %v1383
  %v1482 = vunpack.c.l.b16 %v1384
  %v1483 = vunpack.c.l.b16 %v1385
  %v1484 = vunpack.c.l.b16 %v1386
  %v1485 = vunpack.c.l.b16 %v1387
  %v1486 = vunpack.c.l.b16 %v1388
  %v1487 = vunpack.c.l.b16 %v1389
  %v1488 = vunpack.c.l.b16 %v1390
  %v1489 = vunpack.c.l.b16 %v1391
  %v1490 = vunpack.c.l.b16 %v1392
  %v1491 = vunpack.c.l.b16 %v1393
  %v1492 = vunpack.c.l.b16 %v1394
  %v1493 = vunpack.c.l.b16 %v1395
  %v1494 = vunpack.c.l.b16 %v1396
  %v1495 = vunpack.c.l.b16 %v1397
  %v1496 = vunpack.c.l.b16 %v1398
  %v1497 = vunpack.c.l.b16 %v1399
  %v1498 = vunpack.c.l.b16 %v1400
  %v1499 = vunpack.c.l.b16 %v1401
  %v1500 = vunpack.c.l.b16 %v1402
  %v1501 = vunpack.c.l.b16 %v1403
  %v1502 = vunpack.c.l.b16 %v1404
  %v1503 = vunpack.c.l.b16 %v1405
  %v1504 = vunpack.c.l.b16 %v1406
  %v1505 = vunpack.c.l.b16 %v1407
  %v1506 = vunpack.c.l.b16 %v1408
  %v1507 = vunpack.c.l.b16 %v1409
  %v1508 = vunpack.c.l.b16 %v1410
  %v1509 = vunpack.c.l.b16 %v1411
  %v1510 = vunpack.c.l.b16 %v1412
  %v1511 = vunpack.c.l.b16 %v1413
  %v1512 = vpack.c.b16 %v1464, %v1463
  %v1513 = vpack.c.b16 %v1466, %v1465
  %v1514 = vpack.c.b16 %v1468, %v1467
  %v1515 = vpack.c.b16 %v1470, %v1469
  %v1516 = vpack.c.b16 %v1472, %v1471
  %v1517 = vpack.c.b16 %v1474, %v1473
  %v1518 = vpack.c.b16 %v1476, %v1475
  %v1519 = vpack.c.b16 %v1478, %v1477
  %v1520 = vpack.c.b16 %v1480, %v1479
  %v1521 = vpack.c.b16 %v1482, %v1481
  %v1522 = vpack.c.b16 %v1484, %v1483
  %v1523 = vpack.c.b16 %v1486, %v1485
  %v1524 = vpack.c.b16 %v1488, %v1487
  %v1525 = vpack.c.b16 %v1490, %v1489
  %v1526 = vpack.c.b16 %v1492, %v1491
  %v1527 = vpack.c.b16 %v1494, %v1493
  %v1528 = vpack.c.b16 %v1496, %v1495
  %v1529 = vpack.c.b16 %v1498, %v1497
  %v1530 = vpack.c.b16 %v1500, %v1499
  %v1531 = vpack.c.b16 %v1502, %v1501
  %v1532 = vpack.c.b16 %v1504, %v1503
  %v1533 = vpack.c.b16 %v1506, %v1505
  %v1534 = vpack.c.b16 %v1508, %v1507
  %v1535 = vpack.c.b16 %v1510, %v1509
  %v1536 = vpack.c.b16 %v1511, %v1511
  %v1538 = vsel %vm216, %v1512, 0
  %v1541 = vsel %vm216, %v1513, 0
  %v1544 = vsel %vm216, %v1514, 0
  %v1547 = vsel %vm216, %v1515, 0
  %v1550 = vsel %vm216, %v1516, 0
  %v1553 = vsel %vm216, %v1517, 0
  %v1556 = vsel %vm216, %v1518, 0
  %v1559 = vsel %vm216, %v1519, 0
  %v1562 = vsel %vm216, %v1520, 0
  %v1565 = vsel %vm216, %v1521, 0
  %v1568 = vsel %vm216, %v1522, 0
  %v1571 = vsel %vm216, %v1523, 0
  %v1574 = vsel %vm216, %v1524, 0
  %v1577 = vsel %vm216, %v1525, 0
  %v1580 = vsel %vm216, %v1526, 0
  %v1583 = vsel %vm216, %v1527, 0
  %v1586 = vsel %vm216, %v1528, 0
  %v1589 = vsel %vm216, %v1529, 0
  %v1592 = vsel %vm216, %v1530, 0
  %v1595 = vsel %vm216, %v1531, 0
  %v1598 = vsel %vm216, %v1532, 0
  %v1601 = vsel %vm216, %v1533, 0
  %v1604 = vsel %vm216, %v1534, 0
  %v1607 = vsel %vm216, %v1535, 0
  %v1610 = vsel %vm216, %v1536, 0
  %1612 = vmatprep.subr.bf16.mxu0 0
  %1613 = vmatpush1.bf16.msra.mxu0 0
  %1614 = vmatprep.subr.bf16.mxu0 0
  %1615 = vmatpush1.bf16.msra.mxu0 0
  %1616 = vmatprep.subr.bf16.mxu0 0
  %1617 = vmatpush1.bf16.msra.mxu0 0
  %1618 = vmatprep.subr.bf16.mxu0 0
  %1619 = vmatpush1.bf16.msra.mxu0 0
  %1620 = vmatprep.subr.bf16.mxu0 0
  %1621 = vmatpush1.bf16.msra.mxu0 0
  %1622 = vmatprep.subr.bf16.mxu0 0
  %1623 = vmatpush1.bf16.msra.mxu0 0
  %1624 = vmatprep.subr.bf16.mxu0 0
  %1625 = vmatpush1.bf16.msra.mxu0 %v297
  %1626 = vmatprep.subr.bf16.mxu0 0
  %1627 = vmatpush1.bf16.msra.mxu0 %v213
  %1628 = vmatprep.subr.bf16.mxu0 0
  %1629 = vmatpush2.bf16.msra.mxu0 0
  %1630 = vmatprep.subr.bf16.mxu0 0
  %1631 = vmatpush2.bf16.msra.mxu0 0
  %1632 = vmatprep.subr.bf16.mxu0 0
  %1633 = vmatpush2.bf16.msra.mxu0 0
  %1634 = vmatprep.subr.bf16.mxu0 0
  %1635 = vmatpush2.bf16.msra.mxu0 0
  %1636 = vmatprep.subr.bf16.mxu0 0
  %1637 = vmatpush2.bf16.msra.mxu0 0
  %1638 = vmatprep.subr.bf16.mxu0 0
  %1639 = vmatpush2.bf16.msra.mxu0 0
  %1640 = vmatprep.subr.bf16.mxu0 0
  %1641 = vmatpush2.bf16.msra.mxu0 0
  %1642 = vmatprep.subr.bf16.mxu0 0
  %1643 = vmatpush2.bf16.msra.mxu0 0
  %1644 = vmatprep.mubr.bf16.mxu0 0
  %1645 = vmatmul.mubr.bf16.gmra.mxu0 %v1538
  %v1646 = vpop.f32.mrf.mxu0
  %v1647 = vadd.f32 0.0, %v1646
  %v1648 = vpop.f32.mrf.mxu0
  %v1649 = vpop.f32.mrf.mxu0
  %v1650 = vadd.f32 0.0, %v1649
  %v1651 = vpop.f32.mrf.mxu0
  %1652 = vmatprep.mubr.bf16.mxu0 0
  %1653 = vmatmul.mubr.bf16.gmra.mxu0 %v1541
  %v1654 = vpop.f32.mrf.mxu0
  %v1655 = vadd.f32 0.0, %v1654
  %v1656 = vpop.f32.mrf.mxu0
  %v1657 = vpop.f32.mrf.mxu0
  %v1658 = vadd.f32 0.0, %v1657
  %v1659 = vpop.f32.mrf.mxu0
  %1660 = vmatprep.mubr.bf16.mxu0 0
  %1661 = vmatmul.mubr.bf16.gmra.mxu0 %v1544
  %v1662 = vpop.f32.mrf.mxu0
  %v1663 = vadd.f32 0.0, %v1662
  %v1664 = vpop.f32.mrf.mxu0
  %v1665 = vpop.f32.mrf.mxu0
  %v1666 = vadd.f32 0.0, %v1665
  %v1667 = vpop.f32.mrf.mxu0
  %1668 = vmatprep.mubr.bf16.mxu0 0
  %1669 = vmatmul.mubr.bf16.gmra.mxu0 %v1547
  %v1670 = vpop.f32.mrf.mxu0
  %v1671 = vadd.f32 0.0, %v1670
  %v1672 = vpop.f32.mrf.mxu0
  %v1673 = vpop.f32.mrf.mxu0
  %v1674 = vadd.f32 0.0, %v1673
  %v1675 = vpop.f32.mrf.mxu0
  %1676 = vmatprep.mubr.bf16.mxu0 0
  %1677 = vmatmul.mubr.bf16.gmra.mxu0 %v1550
  %v1678 = vpop.f32.mrf.mxu0
  %v1679 = vadd.f32 0.0, %v1678
  %v1680 = vpop.f32.mrf.mxu0
  %v1681 = vpop.f32.mrf.mxu0
  %v1682 = vadd.f32 0.0, %v1681
  %v1683 = vpop.f32.mrf.mxu0
  %1684 = vmatprep.mubr.bf16.mxu0 0
  %1685 = vmatmul.mubr.bf16.gmra.mxu0 %v1553
  %v1686 = vpop.f32.mrf.mxu0
  %v1687 = vadd.f32 0.0, %v1686
  %v1688 = vpop.f32.mrf.mxu0
  %v1689 = vpop.f32.mrf.mxu0
  %v1690 = vadd.f32 0.0, %v1689
  %v1691 = vpop.f32.mrf.mxu0
  %1692 = vmatprep.mubr.bf16.mxu0 0
  %1693 = vmatmul.mubr.bf16.gmra.mxu0 %v1556
  %v1694 = vpop.f32.mrf.mxu0
  %v1695 = vadd.f32 0.0, %v1694
  %v1696 = vpop.f32.mrf.mxu0
  %v1697 = vpop.f32.mrf.mxu0
  %v1698 = vadd.f32 0.0, %v1697
  %v1699 = vpop.f32.mrf.mxu0
  %1700 = vmatprep.mubr.bf16.mxu0 0
  %1701 = vmatmul.mubr.bf16.gmra.mxu0 %v1559
  %v1702 = vpop.f32.mrf.mxu0
  %v1703 = vadd.f32 0.0, %v1702
  %v1704 = vpop.f32.mrf.mxu0
  %v1705 = vpop.f32.mrf.mxu0
  %v1706 = vadd.f32 0.0, %v1705
  %v1707 = vpop.f32.mrf.mxu0
  %1708 = vmatprep.mubr.bf16.mxu0 0
  %1709 = vmatmul.mubr.bf16.gmra.mxu0 %v1562
  %v1710 = vpop.f32.mrf.mxu0
  %v1711 = vadd.f32 0.0, %v1710
  %v1712 = vpop.f32.mrf.mxu0
  %v1713 = vpop.f32.mrf.mxu0
  %v1714 = vadd.f32 0.0, %v1713
  %v1715 = vpop.f32.mrf.mxu0
  %1716 = vmatprep.mubr.bf16.mxu0 0
  %1717 = vmatmul.mubr.bf16.gmra.mxu0 %v1565
  %v1718 = vpop.f32.mrf.mxu0
  %v1719 = vadd.f32 0.0, %v1718
  %v1720 = vpop.f32.mrf.mxu0
  %v1721 = vpop.f32.mrf.mxu0
  %v1722 = vadd.f32 0.0, %v1721
  %v1723 = vpop.f32.mrf.mxu0
  %1724 = vmatprep.mubr.bf16.mxu0 0
  %1725 = vmatmul.mubr.bf16.gmra.mxu0 %v1568
  %v1726 = vpop.f32.mrf.mxu0
  %v1727 = vadd.f32 0.0, %v1726
  %v1728 = vpop.f32.mrf.mxu0
  %v1729 = vpop.f32.mrf.mxu0
  %v1730 = vadd.f32 0.0, %v1729
  %v1731 = vpop.f32.mrf.mxu0
  %1732 = vmatprep.mubr.bf16.mxu0 0
  %1733 = vmatmul.mubr.bf16.gmra.mxu0 %v1571
  %v1734 = vpop.f32.mrf.mxu0
  %v1735 = vadd.f32 0.0, %v1734
  %v1736 = vpop.f32.mrf.mxu0
  %v1737 = vpop.f32.mrf.mxu0
  %v1738 = vadd.f32 0.0, %v1737
  %v1739 = vpop.f32.mrf.mxu0
  %1740 = vmatprep.mubr.bf16.mxu0 0
  %1741 = vmatmul.mubr.bf16.gmra.mxu0 %v1574
  %v1742 = vpop.f32.mrf.mxu0
  %v1743 = vadd.f32 0.0, %v1742
  %v1744 = vpop.f32.mrf.mxu0
  %v1745 = vpop.f32.mrf.mxu0
  %v1746 = vadd.f32 0.0, %v1745
  %v1747 = vpop.f32.mrf.mxu0
  %1748 = vmatprep.mubr.bf16.mxu0 0
  %1749 = vmatmul.mubr.bf16.gmra.mxu0 %v1577
  %v1750 = vpop.f32.mrf.mxu0
  %v1751 = vadd.f32 0.0, %v1750
  %v1752 = vpop.f32.mrf.mxu0
  %v1753 = vpop.f32.mrf.mxu0
  %v1754 = vadd.f32 0.0, %v1753
  %v1755 = vpop.f32.mrf.mxu0
  %1756 = vmatprep.mubr.bf16.mxu0 0
  %1757 = vmatmul.mubr.bf16.gmra.mxu0 %v1580
  %v1758 = vpop.f32.mrf.mxu0
  %v1759 = vadd.f32 0.0, %v1758
  %v1760 = vpop.f32.mrf.mxu0
  %v1761 = vpop.f32.mrf.mxu0
  %v1762 = vadd.f32 0.0, %v1761
  %v1763 = vpop.f32.mrf.mxu0
  %1764 = vmatprep.mubr.bf16.mxu0 0
  %1765 = vmatmul.mubr.bf16.gmra.mxu0 %v1583
  %v1766 = vpop.f32.mrf.mxu0
  %v1767 = vadd.f32 0.0, %v1766
  %v1768 = vpop.f32.mrf.mxu0
  %v1769 = vpop.f32.mrf.mxu0
  %v1770 = vadd.f32 0.0, %v1769
  %v1771 = vpop.f32.mrf.mxu0
  %1772 = vmatprep.mubr.bf16.mxu0 0
  %1773 = vmatmul.mubr.bf16.gmra.mxu0 %v1586
  %v1774 = vpop.f32.mrf.mxu0
  %v1775 = vadd.f32 0.0, %v1774
  %v1776 = vpop.f32.mrf.mxu0
  %v1777 = vpop.f32.mrf.mxu0
  %v1778 = vadd.f32 0.0, %v1777
  %v1779 = vpop.f32.mrf.mxu0
  %1780 = vmatprep.mubr.bf16.mxu0 0
  %1781 = vmatmul.mubr.bf16.gmra.mxu0 %v1589
  %v1782 = vpop.f32.mrf.mxu0
  %v1783 = vadd.f32 0.0, %v1782
  %v1784 = vpop.f32.mrf.mxu0
  %v1785 = vpop.f32.mrf.mxu0
  %v1786 = vadd.f32 0.0, %v1785
  %v1787 = vpop.f32.mrf.mxu0
  %1788 = vmatprep.mubr.bf16.mxu0 0
  %1789 = vmatmul.mubr.bf16.gmra.mxu0 %v1592
  %v1790 = vpop.f32.mrf.mxu0
  %v1791 = vadd.f32 0.0, %v1790
  %v1792 = vpop.f32.mrf.mxu0
  %v1793 = vpop.f32.mrf.mxu0
  %v1794 = vadd.f32 0.0, %v1793
  %v1795 = vpop.f32.mrf.mxu0
  %1796 = vmatprep.mubr.bf16.mxu0 0
  %1797 = vmatmul.mubr.bf16.gmra.mxu0 %v1595
  %v1798 = vpop.f32.mrf.mxu0
  %v1799 = vadd.f32 0.0, %v1798
  %v1800 = vpop.f32.mrf.mxu0
  %v1801 = vpop.f32.mrf.mxu0
  %v1802 = vadd.f32 0.0, %v1801
  %v1803 = vpop.f32.mrf.mxu0
  %1804 = vmatprep.mubr.bf16.mxu0 0
  %1805 = vmatmul.mubr.bf16.gmra.mxu0 %v1598
  %v1806 = vpop.f32.mrf.mxu0
  %v1807 = vadd.f32 0.0, %v1806
  %v1808 = vpop.f32.mrf.mxu0
  %v1809 = vpop.f32.mrf.mxu0
  %v1810 = vadd.f32 0.0, %v1809
  %v1811 = vpop.f32.mrf.mxu0
  %1812 = vmatprep.mubr.bf16.mxu0 0
  %1813 = vmatmul.mubr.bf16.gmra.mxu0 %v1601
  %v1814 = vpop.f32.mrf.mxu0
  %v1815 = vadd.f32 0.0, %v1814
  %v1816 = vpop.f32.mrf.mxu0
  %v1817 = vpop.f32.mrf.mxu0
  %v1818 = vadd.f32 0.0, %v1817
  %v1819 = vpop.f32.mrf.mxu0
  %1820 = vmatprep.mubr.bf16.mxu0 0
  %1821 = vmatmul.mubr.bf16.gmra.mxu0 %v1604
  %v1822 = vpop.f32.mrf.mxu0
  %v1823 = vadd.f32 0.0, %v1822
  %v1824 = vpop.f32.mrf.mxu0
  %v1825 = vpop.f32.mrf.mxu0
  %v1826 = vadd.f32 0.0, %v1825
  %v1827 = vpop.f32.mrf.mxu0
  %1828 = vmatprep.mubr.bf16.mxu0 0
  %1829 = vmatmul.mubr.bf16.gmra.mxu0 %v1607
  %v1830 = vpop.f32.mrf.mxu0
  %v1831 = vadd.f32 0.0, %v1830
  %v1832 = vpop.f32.mrf.mxu0
  %v1833 = vpop.f32.mrf.mxu0
  %v1834 = vadd.f32 0.0, %v1833
  %v1835 = vpop.f32.mrf.mxu0
  %1836 = vmatprep.mubr.bf16.mxu0 0
  %1837 = vmatmul.mubr.bf16.gmra.mxu0 %v1610
  %v1838 = vpop.f32.mrf.mxu0
  %v1839 = vadd.f32 0.0, %v1838
  %v1840 = vpop.f32.mrf.mxu0
  %v1841 = vpop.f32.mrf.mxu0
  %v1842 = vpop.f32.mrf.mxu0
  %1843 = vdwg.mxu0
  %v1844 = vmul.f32 %v1647, %v535
  %v1845 = vmul.f32 %v1650, %v535
  %v1846 = vmul.f32 %v1655, %v535
  %v1847 = vmul.f32 %v1658, %v535
  %v1848 = vmul.f32 %v1663, %v535
  %v1849 = vmul.f32 %v1666, %v535
  %v1850 = vmul.f32 %v1671, %v535
  %v1851 = vmul.f32 %v1674, %v535
  %v1852 = vmul.f32 %v1679, %v535
  %v1853 = vmul.f32 %v1682, %v535
  %v1854 = vmul.f32 %v1687, %v535
  %v1855 = vmul.f32 %v1690, %v535
  %v1856 = vmul.f32 %v1695, %v535
  %v1857 = vmul.f32 %v1698, %v535
  %v1858 = vmul.f32 %v1703, %v535
  %v1859 = vmul.f32 %v1706, %v535
  %v1860 = vmul.f32 %v1711, %v535
  %v1861 = vmul.f32 %v1714, %v535
  %v1862 = vmul.f32 %v1719, %v535
  %v1863 = vmul.f32 %v1722, %v535
  %v1864 = vmul.f32 %v1727, %v535
  %v1865 = vmul.f32 %v1730, %v535
  %v1866 = vmul.f32 %v1735, %v535
  %v1867 = vmul.f32 %v1738, %v535
  %v1868 = vmul.f32 %v1743, %v535
  %v1869 = vmul.f32 %v1746, %v535
  %v1870 = vmul.f32 %v1751, %v535
  %v1871 = vmul.f32 %v1754, %v535
  %v1872 = vmul.f32 %v1759, %v535
  %v1873 = vmul.f32 %v1762, %v535
  %v1874 = vmul.f32 %v1767, %v535
  %v1875 = vmul.f32 %v1770, %v535
  %v1876 = vmul.f32 %v1775, %v535
  %v1877 = vmul.f32 %v1778, %v535
  %v1878 = vmul.f32 %v1783, %v535
  %v1879 = vmul.f32 %v1786, %v535
  %v1880 = vmul.f32 %v1791, %v535
  %v1881 = vmul.f32 %v1794, %v535
  %v1882 = vmul.f32 %v1799, %v535
  %v1883 = vmul.f32 %v1802, %v535
  %v1884 = vmul.f32 %v1807, %v535
  %v1885 = vmul.f32 %v1810, %v535
  %v1886 = vmul.f32 %v1815, %v535
  %v1887 = vmul.f32 %v1818, %v535
  %v1888 = vmul.f32 %v1823, %v535
  %v1889 = vmul.f32 %v1826, %v535
  %v1890 = vmul.f32 %v1831, %v535
  %v1891 = vmul.f32 %v1834, %v535
  %v1892 = vmul.f32 %v1839, %v535
  %v1893 = vadd.f32 %v1844, %v590
  %v1894 = vadd.f32 %v1845, %v590
  %v1895 = vadd.f32 %v1846, %v590
  %v1896 = vadd.f32 %v1847, %v590
  %v1897 = vadd.f32 %v1848, %v590
  %v1898 = vadd.f32 %v1849, %v590
  %v1899 = vadd.f32 %v1850, %v590
  %v1900 = vadd.f32 %v1851, %v590
  %v1901 = vadd.f32 %v1852, %v590
  %v1902 = vadd.f32 %v1853, %v590
  %v1903 = vadd.f32 %v1854, %v590
  %v1904 = vadd.f32 %v1855, %v590
  %v1905 = vadd.f32 %v1856, %v590
  %v1906 = vadd.f32 %v1857, %v590
  %v1907 = vadd.f32 %v1858, %v590
  %v1908 = vadd.f32 %v1859, %v590
  %v1909 = vadd.f32 %v1860, %v590
  %v1910 = vadd.f32 %v1861, %v590
  %v1911 = vadd.f32 %v1862, %v590
  %v1912 = vadd.f32 %v1863, %v590
  %v1913 = vadd.f32 %v1864, %v590
  %v1914 = vadd.f32 %v1865, %v590
  %v1915 = vadd.f32 %v1866, %v590
  %v1916 = vadd.f32 %v1867, %v590
  %v1917 = vadd.f32 %v1868, %v590
  %v1918 = vadd.f32 %v1869, %v590
  %v1919 = vadd.f32 %v1870, %v590
  %v1920 = vadd.f32 %v1871, %v590
  %v1921 = vadd.f32 %v1872, %v590
  %v1922 = vadd.f32 %v1873, %v590
  %v1923 = vadd.f32 %v1874, %v590
  %v1924 = vadd.f32 %v1875, %v590
  %v1925 = vadd.f32 %v1876, %v590
  %v1926 = vadd.f32 %v1877, %v590
  %v1927 = vadd.f32 %v1878, %v590
  %v1928 = vadd.f32 %v1879, %v590
  %v1929 = vadd.f32 %v1880, %v590
  %v1930 = vadd.f32 %v1881, %v590
  %v1931 = vadd.f32 %v1882, %v590
  %v1932 = vadd.f32 %v1883, %v590
  %v1933 = vadd.f32 %v1884, %v590
  %v1934 = vadd.f32 %v1885, %v590
  %v1935 = vadd.f32 %v1886, %v590
  %v1936 = vadd.f32 %v1887, %v590
  %v1937 = vadd.f32 %v1888, %v590
  %v1938 = vadd.f32 %v1889, %v590
  %v1939 = vadd.f32 %v1890, %v590
  %v1940 = vadd.f32 %v1891, %v590
  %v1941 = vadd.f32 %v1892, %v590
  %v1942 = vmax.f32 %v1893, 0.0
  %v1943 = vmax.f32 %v1894, 0.0
  %v1944 = vmax.f32 %v1895, 0.0
  %v1945 = vmax.f32 %v1896, 0.0
  %v1946 = vmax.f32 %v1897, 0.0
  %v1947 = vmax.f32 %v1898, 0.0
  %v1948 = vmax.f32 %v1899, 0.0
  %v1949 = vmax.f32 %v1900, 0.0
  %v1950 = vmax.f32 %v1901, 0.0
  %v1951 = vmax.f32 %v1902, 0.0
  %v1952 = vmax.f32 %v1903, 0.0
  %v1953 = vmax.f32 %v1904, 0.0
  %v1954 = vmax.f32 %v1905, 0.0
  %v1955 = vmax.f32 %v1906, 0.0
  %v1956 = vmax.f32 %v1907, 0.0
  %v1957 = vmax.f32 %v1908, 0.0
  %v1958 = vmax.f32 %v1909, 0.0
  %v1959 = vmax.f32 %v1910, 0.0
  %v1960 = vmax.f32 %v1911, 0.0
  %v1961 = vmax.f32 %v1912, 0.0
  %v1962 = vmax.f32 %v1913, 0.0
  %v1963 = vmax.f32 %v1914, 0.0
  %v1964 = vmax.f32 %v1915, 0.0
  %v1965 = vmax.f32 %v1916, 0.0
  %v1966 = vmax.f32 %v1917, 0.0
  %v1967 = vmax.f32 %v1918, 0.0
  %v1968 = vmax.f32 %v1919, 0.0
  %v1969 = vmax.f32 %v1920, 0.0
  %v1970 = vmax.f32 %v1921, 0.0
  %v1971 = vmax.f32 %v1922, 0.0
  %v1972 = vmax.f32 %v1923, 0.0
  %v1973 = vmax.f32 %v1924, 0.0
  %v1974 = vmax.f32 %v1925, 0.0
  %v1975 = vmax.f32 %v1926, 0.0
  %v1976 = vmax.f32 %v1927, 0.0
  %v1977 = vmax.f32 %v1928, 0.0
  %v1978 = vmax.f32 %v1929, 0.0
  %v1979 = vmax.f32 %v1930, 0.0
  %v1980 = vmax.f32 %v1931, 0.0
  %v1981 = vmax.f32 %v1932, 0.0
  %v1982 = vmax.f32 %v1933, 0.0
  %v1983 = vmax.f32 %v1934, 0.0
  %v1984 = vmax.f32 %v1935, 0.0
  %v1985 = vmax.f32 %v1936, 0.0
  %v1986 = vmax.f32 %v1937, 0.0
  %v1987 = vmax.f32 %v1938, 0.0
  %v1988 = vmax.f32 %v1939, 0.0
  %v1989 = vmax.f32 %v1940, 0.0
  %v1990 = vmax.f32 %v1941, 0.0
  %v1991 = vmax.f32 %v1316, %v1942
  %v1992 = vmax.f32 %v1317, %v1943
  %v1993 = vmax.f32 %v1318, %v1944
  %v1994 = vmax.f32 %v1319, %v1945
  %v1995 = vmax.f32 %v1320, %v1946
  %v1996 = vmax.f32 %v1321, %v1947
  %v1997 = vmax.f32 %v1322, %v1948
  %v1998 = vmax.f32 %v1323, %v1949
  %v1999 = vmax.f32 %v1324, %v1950
  %v2000 = vmax.f32 %v1325, %v1951
  %v2001 = vmax.f32 %v1326, %v1952
  %v2002 = vmax.f32 %v1327, %v1953
  %v2003 = vmax.f32 %v1328, %v1954
  %v2004 = vmax.f32 %v1329, %v1955
  %v2005 = vmax.f32 %v1330, %v1956
  %v2006 = vmax.f32 %v1331, %v1957
  %v2007 = vmax.f32 %v1332, %v1958
  %v2008 = vmax.f32 %v1333, %v1959
  %v2009 = vmax.f32 %v1334, %v1960
  %v2010 = vmax.f32 %v1335, %v1961
  %v2011 = vmax.f32 %v1336, %v1962
  %v2012 = vmax.f32 %v1337, %v1963
  %v2013 = vmax.f32 %v1338, %v1964
  %v2014 = vmax.f32 %v1339, %v1965
  %v2015 = vmax.f32 %v1340, %v1966
  %v2016 = vmax.f32 %v1341, %v1967
  %v2017 = vmax.f32 %v1342, %v1968
  %v2018 = vmax.f32 %v1343, %v1969
  %v2019 = vmax.f32 %v1344, %v1970
  %v2020 = vmax.f32 %v1345, %v1971
  %v2021 = vmax.f32 %v1346, %v1972
  %v2022 = vmax.f32 %v1347, %v1973
  %v2023 = vmax.f32 %v1348, %v1974
  %v2024 = vmax.f32 %v1349, %v1975
  %v2025 = vmax.f32 %v1350, %v1976
  %v2026 = vmax.f32 %v1351, %v1977
  %v2027 = vmax.f32 %v1352, %v1978
  %v2028 = vmax.f32 %v1353, %v1979
  %v2029 = vmax.f32 %v1354, %v1980
  %v2030 = vmax.f32 %v1355, %v1981
  %v2031 = vmax.f32 %v1356, %v1982
  %v2032 = vmax.f32 %v1357, %v1983
  %v2033 = vmax.f32 %v1358, %v1984
  %v2034 = vmax.f32 %v1359, %v1985
  %v2035 = vmax.f32 %v1360, %v1986
  %v2036 = vmax.f32 %v1361, %v1987
  %v2037 = vmax.f32 %v1362, %v1988
  %v2038 = vmax.f32 %v1363, %v1989
  %v2039 = vmax.f32 %v1364, %v1990
  %v2040 = vld [vmem:[%s3] sm:$0xf]
  %v2041 = vld [vmem:[%s3 + $0x4] sm:$0xf]
  %v2042 = vld [vmem:[%s3 + $0x8] sm:$0xf]
  %v2043 = vld [vmem:[%s3 + $0xc] sm:$0xf]
  %v2044 = vld [vmem:[%s3 + $0x10] sm:$0xf]
  %v2045 = vld [vmem:[%s3 + $0x14] sm:$0xf]
  %v2046 = vld [vmem:[%s3 + $0x18] sm:$0xf]
  %v2047 = vld [vmem:[%s3 + $0x1c] sm:$0xf]
  %v2048 = vld [vmem:[%s3 + $0x20] sm:$0xf]
  %v2049 = vld [vmem:[%s3 + $0x24] sm:$0xf]
  %v2050 = vld [vmem:[%s3 + $0x28] sm:$0xf]
  %v2051 = vld [vmem:[%s3 + $0x2c] sm:$0xf]
  %v2052 = vld [vmem:[%s3 + $0x30] sm:$0xf]
  %v2053 = vld [vmem:[%s3 + $0x34] sm:$0xf]
  %v2054 = vld [vmem:[%s3 + $0x38] sm:$0xf]
  %v2055 = vld [vmem:[%s3 + $0x3c] sm:$0xf]
  %v2056 = vld [vmem:[%s3 + $0x40] sm:$0xf]
  %v2057 = vld [vmem:[%s3 + $0x44] sm:$0xf]
  %v2058 = vld [vmem:[%s3 + $0x48] sm:$0xf]
  %v2059 = vld [vmem:[%s3 + $0x4c] sm:$0xf]
  %v2060 = vld [vmem:[%s3 + $0x50] sm:$0xf]
  %v2061 = vld [vmem:[%s3 + $0x54] sm:$0xf]
  %v2062 = vld [vmem:[%s3 + $0x58] sm:$0xf]
  %v2063 = vld [vmem:[%s3 + $0x5c] sm:$0xf]
  %v2064 = vld [vmem:[%s3 + $0x60] sm:$0xf]
  %v2065 = vld [vmem:[%s3 + $0x64] sm:$0xf]
  %v2066 = vld [vmem:[%s3 + $0x68] sm:$0xf]
  %v2067 = vld [vmem:[%s3 + $0x6c] sm:$0xf]
  %v2068 = vld [vmem:[%s3 + $0x70] sm:$0xf]
  %v2069 = vld [vmem:[%s3 + $0x74] sm:$0xf]
  %v2070 = vld [vmem:[%s3 + $0x78] sm:$0xf]
  %v2071 = vld [vmem:[%s3 + $0x7c] sm:$0xf]
  %v2072 = vld [vmem:[%s3 + $0x80] sm:$0xf]
  %v2073 = vld [vmem:[%s3 + $0x84] sm:$0xf]
  %v2074 = vld [vmem:[%s3 + $0x88] sm:$0xf]
  %v2075 = vld [vmem:[%s3 + $0x8c] sm:$0xf]
  %v2076 = vld [vmem:[%s3 + $0x90] sm:$0xf]
  %v2077 = vld [vmem:[%s3 + $0x94] sm:$0xf]
  %v2078 = vld [vmem:[%s3 + $0x98] sm:$0xf]
  %v2079 = vld [vmem:[%s3 + $0x9c] sm:$0xf]
  %v2080 = vld [vmem:[%s3 + $0xa0] sm:$0xf]
  %v2081 = vld [vmem:[%s3 + $0xa4] sm:$0xf]
  %v2082 = vld [vmem:[%s3 + $0xa8] sm:$0xf]
  %v2083 = vld [vmem:[%s3 + $0xac] sm:$0xf]
  %v2084 = vld [vmem:[%s3 + $0xb0] sm:$0xf]
  %v2085 = vld [vmem:[%s3 + $0xb4] sm:$0xf]
  %v2086 = vld [vmem:[%s3 + $0xb8] sm:$0xf]
  %v2087 = vld [vmem:[%s3 + $0xbc] sm:$0xf]
  %v2088 = vld [vmem:[%s3 + $0xc0] sm:$0xf]
  %v2138 = vunpack.c.l.b16 %v2040
  %v2139 = vunpack.c.l.b16 %v2041
  %v2140 = vunpack.c.l.b16 %v2042
  %v2141 = vunpack.c.l.b16 %v2043
  %v2142 = vunpack.c.l.b16 %v2044
  %v2143 = vunpack.c.l.b16 %v2045
  %v2144 = vunpack.c.l.b16 %v2046
  %v2145 = vunpack.c.l.b16 %v2047
  %v2146 = vunpack.c.l.b16 %v2048
  %v2147 = vunpack.c.l.b16 %v2049
  %v2148 = vunpack.c.l.b16 %v2050
  %v2149 = vunpack.c.l.b16 %v2051
  %v2150 = vunpack.c.l.b16 %v2052
  %v2151 = vunpack.c.l.b16 %v2053
  %v2152 = vunpack.c.l.b16 %v2054
  %v2153 = vunpack.c.l.b16 %v2055
  %v2154 = vunpack.c.l.b16 %v2056
  %v2155 = vunpack.c.l.b16 %v2057
  %v2156 = vunpack.c.l.b16 %v2058
  %v2157 = vunpack.c.l.b16 %v2059
  %v2158 = vunpack.c.l.b16 %v2060
  %v2159 = vunpack.c.l.b16 %v2061
  %v2160 = vunpack.c.l.b16 %v2062
  %v2161 = vunpack.c.l.b16 %v2063
  %v2162 = vunpack.c.l.b16 %v2064
  %v2163 = vunpack.c.l.b16 %v2065
  %v2164 = vunpack.c.l.b16 %v2066
  %v2165 = vunpack.c.l.b16 %v2067
  %v2166 = vunpack.c.l.b16 %v2068
  %v2167 = vunpack.c.l.b16 %v2069
  %v2168 = vunpack.c.l.b16 %v2070
  %v2169 = vunpack.c.l.b16 %v2071
  %v2170 = vunpack.c.l.b16 %v2072
  %v2171 = vunpack.c.l.b16 %v2073
  %v2172 = vunpack.c.l.b16 %v2074
  %v2173 = vunpack.c.l.b16 %v2075
  %v2174 = vunpack.c.l.b16 %v2076
  %v2175 = vunpack.c.l.b16 %v2077
  %v2176 = vunpack.c.l.b16 %v2078
  %v2177 = vunpack.c.l.b16 %v2079
  %v2178 = vunpack.c.l.b16 %v2080
  %v2179 = vunpack.c.l.b16 %v2081
  %v2180 = vunpack.c.l.b16 %v2082
  %v2181 = vunpack.c.l.b16 %v2083
  %v2182 = vunpack.c.l.b16 %v2084
  %v2183 = vunpack.c.l.b16 %v2085
  %v2184 = vunpack.c.l.b16 %v2086
  %v2185 = vunpack.c.l.b16 %v2087
  %v2186 = vunpack.c.l.b16 %v2088
  %v2187 = vpack.c.b16 %v2139, %v2138
  %v2188 = vpack.c.b16 %v2141, %v2140
  %v2189 = vpack.c.b16 %v2143, %v2142
  %v2190 = vpack.c.b16 %v2145, %v2144
  %v2191 = vpack.c.b16 %v2147, %v2146
  %v2192 = vpack.c.b16 %v2149, %v2148
  %v2193 = vpack.c.b16 %v2151, %v2150
  %v2194 = vpack.c.b16 %v2153, %v2152
  %v2195 = vpack.c.b16 %v2155, %v2154
  %v2196 = vpack.c.b16 %v2157, %v2156
  %v2197 = vpack.c.b16 %v2159, %v2158
  %v2198 = vpack.c.b16 %v2161, %v2160
  %v2199 = vpack.c.b16 %v2163, %v2162
  %v2200 = vpack.c.b16 %v2165, %v2164
  %v2201 = vpack.c.b16 %v2167, %v2166
  %v2202 = vpack.c.b16 %v2169, %v2168
  %v2203 = vpack.c.b16 %v2171, %v2170
  %v2204 = vpack.c.b16 %v2173, %v2172
  %v2205 = vpack.c.b16 %v2175, %v2174
  %v2206 = vpack.c.b16 %v2177, %v2176
  %v2207 = vpack.c.b16 %v2179, %v2178
  %v2208 = vpack.c.b16 %v2181, %v2180
  %v2209 = vpack.c.b16 %v2183, %v2182
  %v2210 = vpack.c.b16 %v2185, %v2184
  %v2211 = vpack.c.b16 %v2186, %v2186
  %v2213 = vsel %vm216, %v2187, 0
  %v2216 = vsel %vm216, %v2188, 0
  %v2219 = vsel %vm216, %v2189, 0
  %v2222 = vsel %vm216, %v2190, 0
  %v2225 = vsel %vm216, %v2191, 0
  %v2228 = vsel %vm216, %v2192, 0
  %v2231 = vsel %vm216, %v2193, 0
  %v2234 = vsel %vm216, %v2194, 0
  %v2237 = vsel %vm216, %v2195, 0
  %v2240 = vsel %vm216, %v2196, 0
  %v2243 = vsel %vm216, %v2197, 0
  %v2246 = vsel %vm216, %v2198, 0
  %v2249 = vsel %vm216, %v2199, 0
  %v2252 = vsel %vm216, %v2200, 0
  %v2255 = vsel %vm216, %v2201, 0
  %v2258 = vsel %vm216, %v2202, 0
  %v2261 = vsel %vm216, %v2203, 0
  %v2264 = vsel %vm216, %v2204, 0
  %v2267 = vsel %vm216, %v2205, 0
  %v2270 = vsel %vm216, %v2206, 0
  %v2273 = vsel %vm216, %v2207, 0
  %v2276 = vsel %vm216, %v2208, 0
  %v2279 = vsel %vm216, %v2209, 0
  %v2282 = vsel %vm216, %v2210, 0
  %v2285 = vsel %vm216, %v2211, 0
  %2287 = vmatprep.subr.bf16.mxu0 0
  %2288 = vmatpush1.bf16.msra.mxu0 0
  %2289 = vmatprep.subr.bf16.mxu0 0
  %2290 = vmatpush1.bf16.msra.mxu0 0
  %2291 = vmatprep.subr.bf16.mxu0 0
  %2292 = vmatpush1.bf16.msra.mxu0 0
  %2293 = vmatprep.subr.bf16.mxu0 0
  %2294 = vmatpush1.bf16.msra.mxu0 0
  %2295 = vmatprep.subr.bf16.mxu0 0
  %2296 = vmatpush1.bf16.msra.mxu0 0
  %2297 = vmatprep.subr.bf16.mxu0 0
  %2298 = vmatpush1.bf16.msra.mxu0 0
  %2299 = vmatprep.subr.bf16.mxu0 0
  %2300 = vmatpush1.bf16.msra.mxu0 %v297
  %2301 = vmatprep.subr.bf16.mxu0 0
  %2302 = vmatpush1.bf16.msra.mxu0 %v213
  %2303 = vmatprep.subr.bf16.mxu0 0
  %2304 = vmatpush2.bf16.msra.mxu0 0
  %2305 = vmatprep.subr.bf16.mxu0 0
  %2306 = vmatpush2.bf16.msra.mxu0 0
  %2307 = vmatprep.subr.bf16.mxu0 0
  %2308 = vmatpush2.bf16.msra.mxu0 0
  %2309 = vmatprep.subr.bf16.mxu0 0
  %2310 = vmatpush2.bf16.msra.mxu0 0
  %2311 = vmatprep.subr.bf16.mxu0 0
  %2312 = vmatpush2.bf16.msra.mxu0 0
  %2313 = vmatprep.subr.bf16.mxu0 0
  %2314 = vmatpush2.bf16.msra.mxu0 0
  %2315 = vmatprep.subr.bf16.mxu0 0
  %2316 = vmatpush2.bf16.msra.mxu0 0
  %2317 = vmatprep.subr.bf16.mxu0 0
  %2318 = vmatpush2.bf16.msra.mxu0 0
  %2319 = vmatprep.mubr.bf16.mxu0 0
  %2320 = vmatmul.mubr.bf16.gmra.mxu0 %v2213
  %v2321 = vpop.f32.mrf.mxu0
  %v2322 = vadd.f32 0.0, %v2321
  %v2323 = vpop.f32.mrf.mxu0
  %v2324 = vpop.f32.mrf.mxu0
  %v2325 = vadd.f32 0.0, %v2324
  %v2326 = vpop.f32.mrf.mxu0
  %2327 = vmatprep.mubr.bf16.mxu0 0
  %2328 = vmatmul.mubr.bf16.gmra.mxu0 %v2216
  %v2329 = vpop.f32.mrf.mxu0
  %v2330 = vadd.f32 0.0, %v2329
  %v2331 = vpop.f32.mrf.mxu0
  %v2332 = vpop.f32.mrf.mxu0
  %v2333 = vadd.f32 0.0, %v2332
  %v2334 = vpop.f32.mrf.mxu0
  %2335 = vmatprep.mubr.bf16.mxu0 0
  %2336 = vmatmul.mubr.bf16.gmra.mxu0 %v2219
  %v2337 = vpop.f32.mrf.mxu0
  %v2338 = vadd.f32 0.0, %v2337
  %v2339 = vpop.f32.mrf.mxu0
  %v2340 = vpop.f32.mrf.mxu0
  %v2341 = vadd.f32 0.0, %v2340
  %v2342 = vpop.f32.mrf.mxu0
  %2343 = vmatprep.mubr.bf16.mxu0 0
  %2344 = vmatmul.mubr.bf16.gmra.mxu0 %v2222
  %v2345 = vpop.f32.mrf.mxu0
  %v2346 = vadd.f32 0.0, %v2345
  %v2347 = vpop.f32.mrf.mxu0
  %v2348 = vpop.f32.mrf.mxu0
  %v2349 = vadd.f32 0.0, %v2348
  %v2350 = vpop.f32.mrf.mxu0
  %2351 = vmatprep.mubr.bf16.mxu0 0
  %2352 = vmatmul.mubr.bf16.gmra.mxu0 %v2225
  %v2353 = vpop.f32.mrf.mxu0
  %v2354 = vadd.f32 0.0, %v2353
  %v2355 = vpop.f32.mrf.mxu0
  %v2356 = vpop.f32.mrf.mxu0
  %v2357 = vadd.f32 0.0, %v2356
  %v2358 = vpop.f32.mrf.mxu0
  %2359 = vmatprep.mubr.bf16.mxu0 0
  %2360 = vmatmul.mubr.bf16.gmra.mxu0 %v2228
  %v2361 = vpop.f32.mrf.mxu0
  %v2362 = vadd.f32 0.0, %v2361
  %v2363 = vpop.f32.mrf.mxu0
  %v2364 = vpop.f32.mrf.mxu0
  %v2365 = vadd.f32 0.0, %v2364
  %v2366 = vpop.f32.mrf.mxu0
  %2367 = vmatprep.mubr.bf16.mxu0 0
  %2368 = vmatmul.mubr.bf16.gmra.mxu0 %v2231
  %v2369 = vpop.f32.mrf.mxu0
  %v2370 = vadd.f32 0.0, %v2369
  %v2371 = vpop.f32.mrf.mxu0
  %v2372 = vpop.f32.mrf.mxu0
  %v2373 = vadd.f32 0.0, %v2372
  %v2374 = vpop.f32.mrf.mxu0
  %2375 = vmatprep.mubr.bf16.mxu0 0
  %2376 = vmatmul.mubr.bf16.gmra.mxu0 %v2234
  %v2377 = vpop.f32.mrf.mxu0
  %v2378 = vadd.f32 0.0, %v2377
  %v2379 = vpop.f32.mrf.mxu0
  %v2380 = vpop.f32.mrf.mxu0
  %v2381 = vadd.f32 0.0, %v2380
  %v2382 = vpop.f32.mrf.mxu0
  %2383 = vmatprep.mubr.bf16.mxu0 0
  %2384 = vmatmul.mubr.bf16.gmra.mxu0 %v2237
  %v2385 = vpop.f32.mrf.mxu0
  %v2386 = vadd.f32 0.0, %v2385
  %v2387 = vpop.f32.mrf.mxu0
  %v2388 = vpop.f32.mrf.mxu0
  %v2389 = vadd.f32 0.0, %v2388
  %v2390 = vpop.f32.mrf.mxu0
  %2391 = vmatprep.mubr.bf16.mxu0 0
  %2392 = vmatmul.mubr.bf16.gmra.mxu0 %v2240
  %v2393 = vpop.f32.mrf.mxu0
  %v2394 = vadd.f32 0.0, %v2393
  %v2395 = vpop.f32.mrf.mxu0
  %v2396 = vpop.f32.mrf.mxu0
  %v2397 = vadd.f32 0.0, %v2396
  %v2398 = vpop.f32.mrf.mxu0
  %2399 = vmatprep.mubr.bf16.mxu0 0
  %2400 = vmatmul.mubr.bf16.gmra.mxu0 %v2243
  %v2401 = vpop.f32.mrf.mxu0
  %v2402 = vadd.f32 0.0, %v2401
  %v2403 = vpop.f32.mrf.mxu0
  %v2404 = vpop.f32.mrf.mxu0
  %v2405 = vadd.f32 0.0, %v2404
  %v2406 = vpop.f32.mrf.mxu0
  %2407 = vmatprep.mubr.bf16.mxu0 0
  %2408 = vmatmul.mubr.bf16.gmra.mxu0 %v2246
  %v2409 = vpop.f32.mrf.mxu0
  %v2410 = vadd.f32 0.0, %v2409
  %v2411 = vpop.f32.mrf.mxu0
  %v2412 = vpop.f32.mrf.mxu0
  %v2413 = vadd.f32 0.0, %v2412
  %v2414 = vpop.f32.mrf.mxu0
  %2415 = vmatprep.mubr.bf16.mxu0 0
  %2416 = vmatmul.mubr.bf16.gmra.mxu0 %v2249
  %v2417 = vpop.f32.mrf.mxu0
  %v2418 = vadd.f32 0.0, %v2417
  %v2419 = vpop.f32.mrf.mxu0
  %v2420 = vpop.f32.mrf.mxu0
  %v2421 = vadd.f32 0.0, %v2420
  %v2422 = vpop.f32.mrf.mxu0
  %2423 = vmatprep.mubr.bf16.mxu0 0
  %2424 = vmatmul.mubr.bf16.gmra.mxu0 %v2252
  %v2425 = vpop.f32.mrf.mxu0
  %v2426 = vadd.f32 0.0, %v2425
  %v2427 = vpop.f32.mrf.mxu0
  %v2428 = vpop.f32.mrf.mxu0
  %v2429 = vadd.f32 0.0, %v2428
  %v2430 = vpop.f32.mrf.mxu0
  %2431 = vmatprep.mubr.bf16.mxu0 0
  %2432 = vmatmul.mubr.bf16.gmra.mxu0 %v2255
  %v2433 = vpop.f32.mrf.mxu0
  %v2434 = vadd.f32 0.0, %v2433
  %v2435 = vpop.f32.mrf.mxu0
  %v2436 = vpop.f32.mrf.mxu0
  %v2437 = vadd.f32 0.0, %v2436
  %v2438 = vpop.f32.mrf.mxu0
  %2439 = vmatprep.mubr.bf16.mxu0 0
  %2440 = vmatmul.mubr.bf16.gmra.mxu0 %v2258
  %v2441 = vpop.f32.mrf.mxu0
  %v2442 = vadd.f32 0.0, %v2441
  %v2443 = vpop.f32.mrf.mxu0
  %v2444 = vpop.f32.mrf.mxu0
  %v2445 = vadd.f32 0.0, %v2444
  %v2446 = vpop.f32.mrf.mxu0
  %2447 = vmatprep.mubr.bf16.mxu0 0
  %2448 = vmatmul.mubr.bf16.gmra.mxu0 %v2261
  %v2449 = vpop.f32.mrf.mxu0
  %v2450 = vadd.f32 0.0, %v2449
  %v2451 = vpop.f32.mrf.mxu0
  %v2452 = vpop.f32.mrf.mxu0
  %v2453 = vadd.f32 0.0, %v2452
  %v2454 = vpop.f32.mrf.mxu0
  %2455 = vmatprep.mubr.bf16.mxu0 0
  %2456 = vmatmul.mubr.bf16.gmra.mxu0 %v2264
  %v2457 = vpop.f32.mrf.mxu0
  %v2458 = vadd.f32 0.0, %v2457
  %v2459 = vpop.f32.mrf.mxu0
  %v2460 = vpop.f32.mrf.mxu0
  %v2461 = vadd.f32 0.0, %v2460
  %v2462 = vpop.f32.mrf.mxu0
  %2463 = vmatprep.mubr.bf16.mxu0 0
  %2464 = vmatmul.mubr.bf16.gmra.mxu0 %v2267
  %v2465 = vpop.f32.mrf.mxu0
  %v2466 = vadd.f32 0.0, %v2465
  %v2467 = vpop.f32.mrf.mxu0
  %v2468 = vpop.f32.mrf.mxu0
  %v2469 = vadd.f32 0.0, %v2468
  %v2470 = vpop.f32.mrf.mxu0
  %2471 = vmatprep.mubr.bf16.mxu0 0
  %2472 = vmatmul.mubr.bf16.gmra.mxu0 %v2270
  %v2473 = vpop.f32.mrf.mxu0
  %v2474 = vadd.f32 0.0, %v2473
  %v2475 = vpop.f32.mrf.mxu0
  %v2476 = vpop.f32.mrf.mxu0
  %v2477 = vadd.f32 0.0, %v2476
  %v2478 = vpop.f32.mrf.mxu0
  %2479 = vmatprep.mubr.bf16.mxu0 0
  %2480 = vmatmul.mubr.bf16.gmra.mxu0 %v2273
  %v2481 = vpop.f32.mrf.mxu0
  %v2482 = vadd.f32 0.0, %v2481
  %v2483 = vpop.f32.mrf.mxu0
  %v2484 = vpop.f32.mrf.mxu0
  %v2485 = vadd.f32 0.0, %v2484
  %v2486 = vpop.f32.mrf.mxu0
  %2487 = vmatprep.mubr.bf16.mxu0 0
  %2488 = vmatmul.mubr.bf16.gmra.mxu0 %v2276
  %v2489 = vpop.f32.mrf.mxu0
  %v2490 = vadd.f32 0.0, %v2489
  %v2491 = vpop.f32.mrf.mxu0
  %v2492 = vpop.f32.mrf.mxu0
  %v2493 = vadd.f32 0.0, %v2492
  %v2494 = vpop.f32.mrf.mxu0
  %2495 = vmatprep.mubr.bf16.mxu0 0
  %2496 = vmatmul.mubr.bf16.gmra.mxu0 %v2279
  %v2497 = vpop.f32.mrf.mxu0
  %v2498 = vadd.f32 0.0, %v2497
  %v2499 = vpop.f32.mrf.mxu0
  %v2500 = vpop.f32.mrf.mxu0
  %v2501 = vadd.f32 0.0, %v2500
  %v2502 = vpop.f32.mrf.mxu0
  %2503 = vmatprep.mubr.bf16.mxu0 0
  %2504 = vmatmul.mubr.bf16.gmra.mxu0 %v2282
  %v2505 = vpop.f32.mrf.mxu0
  %v2506 = vadd.f32 0.0, %v2505
  %v2507 = vpop.f32.mrf.mxu0
  %v2508 = vpop.f32.mrf.mxu0
  %v2509 = vadd.f32 0.0, %v2508
  %v2510 = vpop.f32.mrf.mxu0
  %2511 = vmatprep.mubr.bf16.mxu0 0
  %2512 = vmatmul.mubr.bf16.gmra.mxu0 %v2285
  %v2513 = vpop.f32.mrf.mxu0
  %v2514 = vadd.f32 0.0, %v2513
  %v2515 = vpop.f32.mrf.mxu0
  %v2516 = vpop.f32.mrf.mxu0
  %v2517 = vpop.f32.mrf.mxu0
  %2518 = vdwg.mxu0
  %v2519 = vmul.f32 %v2322, %v535
  %v2520 = vmul.f32 %v2325, %v535
  %v2521 = vmul.f32 %v2330, %v535
  %v2522 = vmul.f32 %v2333, %v535
  %v2523 = vmul.f32 %v2338, %v535
  %v2524 = vmul.f32 %v2341, %v535
  %v2525 = vmul.f32 %v2346, %v535
  %v2526 = vmul.f32 %v2349, %v535
  %v2527 = vmul.f32 %v2354, %v535
  %v2528 = vmul.f32 %v2357, %v535
  %v2529 = vmul.f32 %v2362, %v535
  %v2530 = vmul.f32 %v2365, %v535
  %v2531 = vmul.f32 %v2370, %v535
  %v2532 = vmul.f32 %v2373, %v535
  %v2533 = vmul.f32 %v2378, %v535
  %v2534 = vmul.f32 %v2381, %v535
  %v2535 = vmul.f32 %v2386, %v535
  %v2536 = vmul.f32 %v2389, %v535
  %v2537 = vmul.f32 %v2394, %v535
  %v2538 = vmul.f32 %v2397, %v535
  %v2539 = vmul.f32 %v2402, %v535
  %v2540 = vmul.f32 %v2405, %v535
  %v2541 = vmul.f32 %v2410, %v535
  %v2542 = vmul.f32 %v2413, %v535
  %v2543 = vmul.f32 %v2418, %v535
  %v2544 = vmul.f32 %v2421, %v535
  %v2545 = vmul.f32 %v2426, %v535
  %v2546 = vmul.f32 %v2429, %v535
  %v2547 = vmul.f32 %v2434, %v535
  %v2548 = vmul.f32 %v2437, %v535
  %v2549 = vmul.f32 %v2442, %v535
  %v2550 = vmul.f32 %v2445, %v535
  %v2551 = vmul.f32 %v2450, %v535
  %v2552 = vmul.f32 %v2453, %v535
  %v2553 = vmul.f32 %v2458, %v535
  %v2554 = vmul.f32 %v2461, %v535
  %v2555 = vmul.f32 %v2466, %v535
  %v2556 = vmul.f32 %v2469, %v535
  %v2557 = vmul.f32 %v2474, %v535
  %v2558 = vmul.f32 %v2477, %v535
  %v2559 = vmul.f32 %v2482, %v535
  %v2560 = vmul.f32 %v2485, %v535
  %v2561 = vmul.f32 %v2490, %v535
  %v2562 = vmul.f32 %v2493, %v535
  %v2563 = vmul.f32 %v2498, %v535
  %v2564 = vmul.f32 %v2501, %v535
  %v2565 = vmul.f32 %v2506, %v535
  %v2566 = vmul.f32 %v2509, %v535
  %v2567 = vmul.f32 %v2514, %v535
  %v2568 = vadd.f32 %v2519, %v590
  %v2569 = vadd.f32 %v2520, %v590
  %v2570 = vadd.f32 %v2521, %v590
  %v2571 = vadd.f32 %v2522, %v590
  %v2572 = vadd.f32 %v2523, %v590
  %v2573 = vadd.f32 %v2524, %v590
  %v2574 = vadd.f32 %v2525, %v590
  %v2575 = vadd.f32 %v2526, %v590
  %v2576 = vadd.f32 %v2527, %v590
  %v2577 = vadd.f32 %v2528, %v590
  %v2578 = vadd.f32 %v2529, %v590
  %v2579 = vadd.f32 %v2530, %v590
  %v2580 = vadd.f32 %v2531, %v590
  %v2581 = vadd.f32 %v2532, %v590
  %v2582 = vadd.f32 %v2533, %v590
  %v2583 = vadd.f32 %v2534, %v590
  %v2584 = vadd.f32 %v2535, %v590
  %v2585 = vadd.f32 %v2536, %v590
  %v2586 = vadd.f32 %v2537, %v590
  %v2587 = vadd.f32 %v2538, %v590
  %v2588 = vadd.f32 %v2539, %v590
  %v2589 = vadd.f32 %v2540, %v590
  %v2590 = vadd.f32 %v2541, %v590
  %v2591 = vadd.f32 %v2542, %v590
  %v2592 = vadd.f32 %v2543, %v590
  %v2593 = vadd.f32 %v2544, %v590
  %v2594 = vadd.f32 %v2545, %v590
  %v2595 = vadd.f32 %v2546, %v590
  %v2596 = vadd.f32 %v2547, %v590
  %v2597 = vadd.f32 %v2548, %v590
  %v2598 = vadd.f32 %v2549, %v590
  %v2599 = vadd.f32 %v2550, %v590
  %v2600 = vadd.f32 %v2551, %v590
  %v2601 = vadd.f32 %v2552, %v590
  %v2602 = vadd.f32 %v2553, %v590
  %v2603 = vadd.f32 %v2554, %v590
  %v2604 = vadd.f32 %v2555, %v590
  %v2605 = vadd.f32 %v2556, %v590
  %v2606 = vadd.f32 %v2557, %v590
  %v2607 = vadd.f32 %v2558, %v590
  %v2608 = vadd.f32 %v2559, %v590
  %v2609 = vadd.f32 %v2560, %v590
  %v2610 = vadd.f32 %v2561, %v590
  %v2611 = vadd.f32 %v2562, %v590
  %v2612 = vadd.f32 %v2563, %v590
  %v2613 = vadd.f32 %v2564, %v590
  %v2614 = vadd.f32 %v2565, %v590
  %v2615 = vadd.f32 %v2566, %v590
  %v2616 = vadd.f32 %v2567, %v590
  %v2617 = vmax.f32 %v2568, 0.0
  %v2618 = vmax.f32 %v2569, 0.0
  %v2619 = vmax.f32 %v2570, 0.0
  %v2620 = vmax.f32 %v2571, 0.0
  %v2621 = vmax.f32 %v2572, 0.0
  %v2622 = vmax.f32 %v2573, 0.0
  %v2623 = vmax.f32 %v2574, 0.0
  %v2624 = vmax.f32 %v2575, 0.0
  %v2625 = vmax.f32 %v2576, 0.0
  %v2626 = vmax.f32 %v2577, 0.0
  %v2627 = vmax.f32 %v2578, 0.0
  %v2628 = vmax.f32 %v2579, 0.0
  %v2629 = vmax.f32 %v2580, 0.0
  %v2630 = vmax.f32 %v2581, 0.0
  %v2631 = vmax.f32 %v2582, 0.0
  %v2632 = vmax.f32 %v2583, 0.0
  %v2633 = vmax.f32 %v2584, 0.0
  %v2634 = vmax.f32 %v2585, 0.0
  %v2635 = vmax.f32 %v2586, 0.0
  %v2636 = vmax.f32 %v2587, 0.0
  %v2637 = vmax.f32 %v2588, 0.0
  %v2638 = vmax.f32 %v2589, 0.0
  %v2639 = vmax.f32 %v2590, 0.0
  %v2640 = vmax.f32 %v2591, 0.0
  %v2641 = vmax.f32 %v2592, 0.0
  %v2642 = vmax.f32 %v2593, 0.0
  %v2643 = vmax.f32 %v2594, 0.0
  %v2644 = vmax.f32 %v2595, 0.0
  %v2645 = vmax.f32 %v2596, 0.0
  %v2646 = vmax.f32 %v2597, 0.0
  %v2647 = vmax.f32 %v2598, 0.0
  %v2648 = vmax.f32 %v2599, 0.0
  %v2649 = vmax.f32 %v2600, 0.0
  %v2650 = vmax.f32 %v2601, 0.0
  %v2651 = vmax.f32 %v2602, 0.0
  %v2652 = vmax.f32 %v2603, 0.0
  %v2653 = vmax.f32 %v2604, 0.0
  %v2654 = vmax.f32 %v2605, 0.0
  %v2655 = vmax.f32 %v2606, 0.0
  %v2656 = vmax.f32 %v2607, 0.0
  %v2657 = vmax.f32 %v2608, 0.0
  %v2658 = vmax.f32 %v2609, 0.0
  %v2659 = vmax.f32 %v2610, 0.0
  %v2660 = vmax.f32 %v2611, 0.0
  %v2661 = vmax.f32 %v2612, 0.0
  %v2662 = vmax.f32 %v2613, 0.0
  %v2663 = vmax.f32 %v2614, 0.0
  %v2664 = vmax.f32 %v2615, 0.0
  %v2665 = vmax.f32 %v2616, 0.0
  %v2666 = vmax.f32 %v1991, %v2617
  %v2667 = vmax.f32 %v1992, %v2618
  %v2668 = vmax.f32 %v1993, %v2619
  %v2669 = vmax.f32 %v1994, %v2620
  %v2670 = vmax.f32 %v1995, %v2621
  %v2671 = vmax.f32 %v1996, %v2622
  %v2672 = vmax.f32 %v1997, %v2623
  %v2673 = vmax.f32 %v1998, %v2624
  %v2674 = vmax.f32 %v1999, %v2625
  %v2675 = vmax.f32 %v2000, %v2626
  %v2676 = vmax.f32 %v2001, %v2627
  %v2677 = vmax.f32 %v2002, %v2628
  %v2678 = vmax.f32 %v2003, %v2629
  %v2679 = vmax.f32 %v2004, %v2630
  %v2680 = vmax.f32 %v2005, %v2631
  %v2681 = vmax.f32 %v2006, %v2632
  %v2682 = vmax.f32 %v2007, %v2633
  %v2683 = vmax.f32 %v2008, %v2634
  %v2684 = vmax.f32 %v2009, %v2635
  %v2685 = vmax.f32 %v2010, %v2636
  %v2686 = vmax.f32 %v2011, %v2637
  %v2687 = vmax.f32 %v2012, %v2638
  %v2688 = vmax.f32 %v2013, %v2639
  %v2689 = vmax.f32 %v2014, %v2640
  %v2690 = vmax.f32 %v2015, %v2641
  %v2691 = vmax.f32 %v2016, %v2642
  %v2692 = vmax.f32 %v2017, %v2643
  %v2693 = vmax.f32 %v2018, %v2644
  %v2694 = vmax.f32 %v2019, %v2645
  %v2695 = vmax.f32 %v2020, %v2646
  %v2696 = vmax.f32 %v2021, %v2647
  %v2697 = vmax.f32 %v2022, %v2648
  %v2698 = vmax.f32 %v2023, %v2649
  %v2699 = vmax.f32 %v2024, %v2650
  %v2700 = vmax.f32 %v2025, %v2651
  %v2701 = vmax.f32 %v2026, %v2652
  %v2702 = vmax.f32 %v2027, %v2653
  %v2703 = vmax.f32 %v2028, %v2654
  %v2704 = vmax.f32 %v2029, %v2655
  %v2705 = vmax.f32 %v2030, %v2656
  %v2706 = vmax.f32 %v2031, %v2657
  %v2707 = vmax.f32 %v2032, %v2658
  %v2708 = vmax.f32 %v2033, %v2659
  %v2709 = vmax.f32 %v2034, %v2660
  %v2710 = vmax.f32 %v2035, %v2661
  %v2711 = vmax.f32 %v2036, %v2662
  %v2712 = vmax.f32 %v2037, %v2663
  %v2713 = vmax.f32 %v2038, %v2664
  %v2714 = vmax.f32 %v2039, %v2665
  %vm2715 = vcmask 130048
  %2716 = vst.msk [vmem:[%s7] sm:$0xff] %vm2715, %v2666
  %2717 = vst.msk [vmem:[%s7 + $0x8] sm:$0xff] %vm2715, %v2667
  %2718 = vst.msk [vmem:[%s7 + $0x10] sm:$0xff] %vm2715, %v2668
  %2719 = vst.msk [vmem:[%s7 + $0x18] sm:$0xff] %vm2715, %v2669
  %2720 = vst.msk [vmem:[%s7 + $0x20] sm:$0xff] %vm2715, %v2670
  %2721 = vst.msk [vmem:[%s7 + $0x28] sm:$0xff] %vm2715, %v2671
  %2722 = vst.msk [vmem:[%s7 + $0x30] sm:$0xff] %vm2715, %v2672
  %2723 = vst.msk [vmem:[%s7 + $0x38] sm:$0xff] %vm2715, %v2673
  %2724 = vst.msk [vmem:[%s7 + $0x40] sm:$0xff] %vm2715, %v2674
  %2725 = vst.msk [vmem:[%s7 + $0x48] sm:$0xff] %vm2715, %v2675
  %2726 = vst.msk [vmem:[%s7 + $0x50] sm:$0xff] %vm2715, %v2676
  %2727 = vst.msk [vmem:[%s7 + $0x58] sm:$0xff] %vm2715, %v2677
  %2728 = vst.msk [vmem:[%s7 + $0x60] sm:$0xff] %vm2715, %v2678
  %2729 = vst.msk [vmem:[%s7 + $0x68] sm:$0xff] %vm2715, %v2679
  %2730 = vst.msk [vmem:[%s7 + $0x70] sm:$0xff] %vm2715, %v2680
  %2731 = vst.msk [vmem:[%s7 + $0x78] sm:$0xff] %vm2715, %v2681
  %2732 = vst.msk [vmem:[%s7 + $0x80] sm:$0xff] %vm2715, %v2682
  %2733 = vst.msk [vmem:[%s7 + $0x88] sm:$0xff] %vm2715, %v2683
  %2734 = vst.msk [vmem:[%s7 + $0x90] sm:$0xff] %vm2715, %v2684
  %2735 = vst.msk [vmem:[%s7 + $0x98] sm:$0xff] %vm2715, %v2685
  %2736 = vst.msk [vmem:[%s7 + $0xa0] sm:$0xff] %vm2715, %v2686
  %2737 = vst.msk [vmem:[%s7 + $0xa8] sm:$0xff] %vm2715, %v2687
  %2738 = vst.msk [vmem:[%s7 + $0xb0] sm:$0xff] %vm2715, %v2688
  %2739 = vst.msk [vmem:[%s7 + $0xb8] sm:$0xff] %vm2715, %v2689
  %2740 = vst.msk [vmem:[%s7 + $0xc0] sm:$0xff] %vm2715, %v2690
  %2741 = vst.msk [vmem:[%s7 + $0xc8] sm:$0xff] %vm2715, %v2691
  %2742 = vst.msk [vmem:[%s7 + $0xd0] sm:$0xff] %vm2715, %v2692
  %2743 = vst.msk [vmem:[%s7 + $0xd8] sm:$0xff] %vm2715, %v2693
  %2744 = vst.msk [vmem:[%s7 + $0xe0] sm:$0xff] %vm2715, %v2694
  %2745 = vst.msk [vmem:[%s7 + $0xe8] sm:$0xff] %vm2715, %v2695
  %2746 = vst.msk [vmem:[%s7 + $0xf0] sm:$0xff] %vm2715, %v2696
  %2747 = vst.msk [vmem:[%s7 + $0xf8] sm:$0xff] %vm2715, %v2697
  %2748 = vst.msk [vmem:[%s7 + $0x100] sm:$0xff] %vm2715, %v2698
  %2749 = vst.msk [vmem:[%s7 + $0x108] sm:$0xff] %vm2715, %v2699
  %2750 = vst.msk [vmem:[%s7 + $0x110] sm:$0xff] %vm2715, %v2700
  %2751 = vst.msk [vmem:[%s7 + $0x118] sm:$0xff] %vm2715, %v2701
  %2752 = vst.msk [vmem:[%s7 + $0x120] sm:$0xff] %vm2715, %v2702
  %2753 = vst.msk [vmem:[%s7 + $0x128] sm:$0xff] %vm2715, %v2703
  %2754 = vst.msk [vmem:[%s7 + $0x130] sm:$0xff] %vm2715, %v2704
  %2755 = vst.msk [vmem:[%s7 + $0x138] sm:$0xff] %vm2715, %v2705
  %2756 = vst.msk [vmem:[%s7 + $0x140] sm:$0xff] %vm2715, %v2706
  %2757 = vst.msk [vmem:[%s7 + $0x148] sm:$0xff] %vm2715, %v2707
  %2758 = vst.msk [vmem:[%s7 + $0x150] sm:$0xff] %vm2715, %v2708
  %2759 = vst.msk [vmem:[%s7 + $0x158] sm:$0xff] %vm2715, %v2709
  %2760 = vst.msk [vmem:[%s7 + $0x160] sm:$0xff] %vm2715, %v2710
  %2761 = vst.msk [vmem:[%s7 + $0x168] sm:$0xff] %vm2715, %v2711
  %2762 = vst.msk [vmem:[%s7 + $0x170] sm:$0xff] %vm2715, %v2712
  %2763 = vst.msk [vmem:[%s7 + $0x178] sm:$0xff] %vm2715, %v2713
  %2764 = vst.msk [vmem:[%s7 + $0x180] sm:$0xff] %vm2715, %v2714
  // Predicated region
  $region30: #{cnn_fashion_mnist_forward.3} parent=0 // pred_check
    _
  $region31: #{cnn_fashion_mnist_forward.3} parent=0 // pred_check_branch
    %2766 = sbr.rel (0) target = $region33
  $region32: #{cnn_fashion_mnist_forward.3} parent=0 // pred_region
    _
  $region33: #{cnn_fashion_mnist_forward.3} parent=0 // pred_fallthru
    _
  // Predicated region
  $region34: #{cnn_fashion_mnist_forward.3} parent=0 // pred_check
    _
  $region35: #{cnn_fashion_mnist_forward.3} parent=0 // pred_check_branch
    %2768 = sbr.rel (0) target = $region37
  $region36: #{cnn_fashion_mnist_forward.3} parent=0 // pred_region
    _
  $region37: #{cnn_fashion_mnist_forward.3} parent=0 // pred_fallthru
    _

// kernel: cnn_fashion_mnist_forward.4
$region0: #{cnn_fashion_mnist_forward.4}
  #allocation0 [shape = 'u32[]', space=smem, size = 0x4, offset = 0x4, fixed_abs, tag = 'smem constant byte address 0x4 - core index']
  #allocation1 [shape = 'u32[144,128]{1,0:T(1,128)}', space=vmem, size = 0x12000, scoped, tag = 'internal scratch']
  %s0 = inlined_call_operand.vmem [shape: bf16[98,400], index: 0, kind: input, shape index: {}]
  %s1 = inlined_call_operand.vmem [shape: bf16[98,400], index: 1, kind: input, shape index: {}]
  %s2 = inlined_call_operand.vmem [shape: bf16[98,400], index: 2, kind: input, shape index: {}]
  %s3 = inlined_call_operand.vmem [shape: bf16[98,400], index: 3, kind: input, shape index: {}]
  %s4 = inlined_call_operand.vmem [shape: bf16[400,32], index: 4, kind: input, shape index: {}]
  %s5 = inlined_call_operand.vmem [shape: f32[1,32], index: 5, kind: input, shape index: {}]
  %s6 = inlined_call_operand.vmem [shape: f32[1,32], index: 6, kind: input, shape index: {}]
  %s7 = inlined_call_operand.vmem [shape: f32[98,32], index: 7, kind: output, shape index: {}]
  %s8 = sld [smem:[#allocation0]]
  $region38: #{cnn_fashion_mnist_forward.4} parent=0
    _
  %s10 = ssub.s32 1, %s8
  %s11 = scalar_select 0, %s10, %s8
  // Predicated region
  $region2: #{cnn_fashion_mnist_forward.4} parent=0 // pred_check
    _
  $region3: #{cnn_fashion_mnist_forward.4} parent=0 // pred_check_branch
    %13 = sbr.rel (0) target = $region5
  $region4: #{cnn_fashion_mnist_forward.4} parent=0 // pred_region
    _
  $region5: #{cnn_fashion_mnist_forward.4} parent=0 // pred_fallthru
    _
  // Predicated region
  $region6: #{cnn_fashion_mnist_forward.4} parent=0 // pred_check
    _
  $region7: #{cnn_fashion_mnist_forward.4} parent=0 // pred_check_branch
    %15 = sbr.rel (0) target = $region9
  $region8: #{cnn_fashion_mnist_forward.4} parent=0 // pred_region
    _
  $region9: #{cnn_fashion_mnist_forward.4} parent=0 // pred_fallthru
    _
  // Predicated region
  $region10: #{cnn_fashion_mnist_forward.4} parent=0 // pred_check
    _
  $region11: #{cnn_fashion_mnist_forward.4} parent=0 // pred_check_branch
    %17 = sbr.rel (0) target = $region13
  $region12: #{cnn_fashion_mnist_forward.4} parent=0 // pred_region
    _
  $region13: #{cnn_fashion_mnist_forward.4} parent=0 // pred_fallthru
    _
  // Predicated region
  $region14: #{cnn_fashion_mnist_forward.4} parent=0 // pred_check
    _
  $region15: #{cnn_fashion_mnist_forward.4} parent=0 // pred_check_branch
    %19 = sbr.rel (0) target = $region17
  $region16: #{cnn_fashion_mnist_forward.4} parent=0 // pred_region
    _
  $region17: #{cnn_fashion_mnist_forward.4} parent=0 // pred_fallthru
    _
  // Predicated region
  $region18: #{cnn_fashion_mnist_forward.4} parent=0 // pred_check
    _
  $region19: #{cnn_fashion_mnist_forward.4} parent=0 // pred_check_branch
    %21 = sbr.rel (0) target = $region21
  $region20: #{cnn_fashion_mnist_forward.4} parent=0 // pred_region
    _
  $region21: #{cnn_fashion_mnist_forward.4} parent=0 // pred_fallthru
    _
  // Predicated region
  $region22: #{cnn_fashion_mnist_forward.4} parent=0 // pred_check
    _
  $region23: #{cnn_fashion_mnist_forward.4} parent=0 // pred_check_branch
    %23 = sbr.rel (0) target = $region25
  $region24: #{cnn_fashion_mnist_forward.4} parent=0 // pred_region
    _
  $region25: #{cnn_fashion_mnist_forward.4} parent=0 // pred_fallthru
    _
  // Predicated region
  $region26: #{cnn_fashion_mnist_forward.4} parent=0 // pred_check
    _
  $region27: #{cnn_fashion_mnist_forward.4} parent=0 // pred_check_branch
    %25 = sbr.rel (0) target = $region29
  $region28: #{cnn_fashion_mnist_forward.4} parent=0 // pred_region
    _
  $region29: #{cnn_fashion_mnist_forward.4} parent=0 // pred_fallthru
    _
  %v27 = vld [vmem:[%s4] sm:$0xf]
  %v28 = vld [vmem:[%s4 + $0x4] sm:$0xf]
  %v29 = vld [vmem:[%s4 + $0x8] sm:$0xf]
  %v30 = vld [vmem:[%s4 + $0xc] sm:$0xf]
  %v31 = vld [vmem:[%s4 + $0x10] sm:$0xf]
  %v32 = vld [vmem:[%s4 + $0x14] sm:$0xf]
  %v33 = vld [vmem:[%s4 + $0x18] sm:$0xf]
  %v34 = vld [vmem:[%s4 + $0x1c] sm:$0xf]
  %v35 = vld [vmem:[%s4 + $0x20] sm:$0xf]
  %v36 = vld [vmem:[%s4 + $0x24] sm:$0xf]
  %v37 = vld [vmem:[%s4 + $0x28] sm:$0xf]
  %v38 = vld [vmem:[%s4 + $0x2c] sm:$0xf]
  %v39 = vld [vmem:[%s4 + $0x30] sm:$0xf]
  %v40 = vld [vmem:[%s4 + $0x34] sm:$0xf]
  %v41 = vld [vmem:[%s4 + $0x38] sm:$0xf]
  %v42 = vld [vmem:[%s4 + $0x3c] sm:$0xf]
  %v43 = vld [vmem:[%s4 + $0x40] sm:$0xf]
  %v44 = vld [vmem:[%s4 + $0x44] sm:$0xf]
  %v45 = vld [vmem:[%s4 + $0x48] sm:$0xf]
  %v46 = vld [vmem:[%s4 + $0x4c] sm:$0xf]
  %v47 = vld [vmem:[%s4 + $0x50] sm:$0xf]
  %v48 = vld [vmem:[%s4 + $0x54] sm:$0xf]
  %v49 = vld [vmem:[%s4 + $0x58] sm:$0xf]
  %v50 = vld [vmem:[%s4 + $0x5c] sm:$0xf]
  %v51 = vld [vmem:[%s4 + $0x60] sm:$0xf]
  %v52 = vld [vmem:[%s4 + $0x64] sm:$0xf]
  %v53 = vld [vmem:[%s4 + $0x68] sm:$0xf]
  %v54 = vld [vmem:[%s4 + $0x6c] sm:$0xf]
  %v55 = vld [vmem:[%s4 + $0x70] sm:$0xf]
  %v56 = vld [vmem:[%s4 + $0x74] sm:$0xf]
  %v57 = vld [vmem:[%s4 + $0x78] sm:$0xf]
  %v58 = vld [vmem:[%s4 + $0x7c] sm:$0xf]
  %v59 = vld [vmem:[%s4 + $0x80] sm:$0xf]
  %v60 = vld [vmem:[%s4 + $0x84] sm:$0xf]
  %v61 = vld [vmem:[%s4 + $0x88] sm:$0xf]
  %v62 = vld [vmem:[%s4 + $0x8c] sm:$0xf]
  %v63 = vld [vmem:[%s4 + $0x90] sm:$0xf]
  %v64 = vld [vmem:[%s4 + $0x94] sm:$0xf]
  %v65 = vld [vmem:[%s4 + $0x98] sm:$0xf]
  %v66 = vld [vmem:[%s4 + $0x9c] sm:$0xf]
  %v67 = vld [vmem:[%s4 + $0xa0] sm:$0xf]
  %v68 = vld [vmem:[%s4 + $0xa4] sm:$0xf]
  %v69 = vld [vmem:[%s4 + $0xa8] sm:$0xf]
  %v70 = vld [vmem:[%s4 + $0xac] sm:$0xf]
  %v71 = vld [vmem:[%s4 + $0xb0] sm:$0xf]
  %v72 = vld [vmem:[%s4 + $0xb4] sm:$0xf]
  %v73 = vld [vmem:[%s4 + $0xb8] sm:$0xf]
  %v74 = vld [vmem:[%s4 + $0xbc] sm:$0xf]
  %v75 = vld [vmem:[%s4 + $0xc0] sm:$0xf]
  %v76 = vld [vmem:[%s4 + $0xc4] sm:$0xf]
  %v77 = vld [vmem:[%s5] sm:$0x1]
  %v78 = vld [vmem:[%s6] sm:$0x1]
  %v79 = vld [vmem:[%s0] sm:$0xff]
  %v80 = vld [vmem:[%s0 + $0x8] sm:$0xff]
  %v81 = vld [vmem:[%s0 + $0x10] sm:$0xff]
  %v82 = vld [vmem:[%s0 + $0x18] sm:$0xff]
  %v83 = vld [vmem:[%s0 + $0x20] sm:$0xff]
  %v84 = vld [vmem:[%s0 + $0x28] sm:$0xff]
  %v85 = vld [vmem:[%s0 + $0x30] sm:$0xff]
  %v86 = vld [vmem:[%s0 + $0x38] sm:$0xff]
  %v87 = vld [vmem:[%s0 + $0x40] sm:$0xff]
  %v88 = vld [vmem:[%s0 + $0x48] sm:$0xff]
  %v89 = vld [vmem:[%s0 + $0x50] sm:$0xff]
  %v90 = vld [vmem:[%s0 + $0x58] sm:$0xff]
  %v91 = vld [vmem:[%s0 + $0x60] sm:$0xff]
  %v92 = vld [vmem:[%s0 + $0x68] sm:$0xff]
  %v93 = vld [vmem:[%s0 + $0x70] sm:$0xff]
  %v94 = vld [vmem:[%s0 + $0x78] sm:$0xff]
  %v95 = vld [vmem:[%s0 + $0x80] sm:$0xff]
  %v96 = vld [vmem:[%s0 + $0x88] sm:$0xff]
  %v97 = vld [vmem:[%s0 + $0x90] sm:$0xff]
  %v98 = vld [vmem:[%s0 + $0x98] sm:$0xff]
  %v99 = vld [vmem:[%s0 + $0xa0] sm:$0xff]
  %v100 = vld [vmem:[%s0 + $0xa8] sm:$0xff]
  %v101 = vld [vmem:[%s0 + $0xb0] sm:$0xff]
  %v102 = vld [vmem:[%s0 + $0xb8] sm:$0xff]
  %v103 = vld [vmem:[%s0 + $0xc0] sm:$0x11]
  %v104 = vld [vmem:[%s0 + $0xc8] sm:$0x11]
  %v131 = vunpack.c.l.b16 %v79
  %v132 = vunpack.c.h.b16 %v79
  %v133 = vunpack.c.l.b16 %v80
  %v134 = vunpack.c.h.b16 %v80
  %v135 = vunpack.c.l.b16 %v81
  %v136 = vunpack.c.h.b16 %v81
  %v137 = vunpack.c.l.b16 %v82
  %v138 = vunpack.c.h.b16 %v82
  %v139 = vunpack.c.l.b16 %v83
  %v140 = vunpack.c.h.b16 %v83
  %v141 = vunpack.c.l.b16 %v84
  %v142 = vunpack.c.h.b16 %v84
  %v143 = vunpack.c.l.b16 %v85
  %v144 = vunpack.c.h.b16 %v85
  %v145 = vunpack.c.l.b16 %v86
  %v146 = vunpack.c.h.b16 %v86
  %v147 = vunpack.c.l.b16 %v87
  %v148 = vunpack.c.h.b16 %v87
  %v149 = vunpack.c.l.b16 %v88
  %v150 = vunpack.c.h.b16 %v88
  %v151 = vunpack.c.l.b16 %v89
  %v152 = vunpack.c.h.b16 %v89
  %v153 = vunpack.c.l.b16 %v90
  %v154 = vunpack.c.h.b16 %v90
  %v155 = vunpack.c.l.b16 %v91
  %v156 = vunpack.c.h.b16 %v91
  %v157 = vunpack.c.l.b16 %v92
  %v158 = vunpack.c.h.b16 %v92
  %v159 = vunpack.c.l.b16 %v93
  %v160 = vunpack.c.h.b16 %v93
  %v161 = vunpack.c.l.b16 %v94
  %v162 = vunpack.c.h.b16 %v94
  %v163 = vunpack.c.l.b16 %v95
  %v164 = vunpack.c.h.b16 %v95
  %v165 = vunpack.c.l.b16 %v96
  %v166 = vunpack.c.h.b16 %v96
  %v167 = vunpack.c.l.b16 %v97
  %v168 = vunpack.c.h.b16 %v97
  %v169 = vunpack.c.l.b16 %v98
  %v170 = vunpack.c.h.b16 %v98
  %v171 = vunpack.c.l.b16 %v99
  %v172 = vunpack.c.h.b16 %v99
  %v173 = vunpack.c.l.b16 %v100
  %v174 = vunpack.c.h.b16 %v100
  %v175 = vunpack.c.l.b16 %v101
  %v176 = vunpack.c.h.b16 %v101
  %v177 = vunpack.c.l.b16 %v102
  %v178 = vunpack.c.h.b16 %v102
  %v179 = vunpack.c.l.b16 %v103
  %v180 = vunpack.c.h.b16 %v103
  %v181 = vunpack.c.l.b16 %v104
  %v182 = vunpack.c.h.b16 %v104
  %v183 = vpack.c.b16 %v135, %v131
  %v184 = vpack.c.b16 %v136, %v132
  %v185 = vpack.c.b16 %v137, %v133
  %v186 = vpack.c.b16 %v138, %v134
  %v187 = vpack.c.b16 %v143, %v139
  %v188 = vpack.c.b16 %v144, %v140
  %v189 = vpack.c.b16 %v145, %v141
  %v190 = vpack.c.b16 %v146, %v142
  %v191 = vpack.c.b16 %v151, %v147
  %v192 = vpack.c.b16 %v152, %v148
  %v193 = vpack.c.b16 %v153, %v149
  %v194 = vpack.c.b16 %v154, %v150
  %v195 = vpack.c.b16 %v159, %v155
  %v196 = vpack.c.b16 %v160, %v156
  %v197 = vpack.c.b16 %v161, %v157
  %v198 = vpack.c.b16 %v162, %v158
  %v199 = vpack.c.b16 %v167, %v163
  %v200 = vpack.c.b16 %v168, %v164
  %v201 = vpack.c.b16 %v169, %v165
  %v202 = vpack.c.b16 %v170, %v166
  %v203 = vpack.c.b16 %v175, %v171
  %v204 = vpack.c.b16 %v176, %v172
  %v205 = vpack.c.b16 %v177, %v173
  %v206 = vpack.c.b16 %v178, %v174
  %v207 = vpack.c.b16 %v179, %v179
  %v208 = vpack.c.b16 %v180, %v180
  %v209 = vpack.c.b16 %v181, %v181
  %v210 = vpack.c.b16 %v182, %v182
  %v282 = vunpack.c.l.b16 %v27
  %v283 = vunpack.c.l.b16 %v28
  %v284 = vunpack.c.l.b16 %v29
  %v285 = vunpack.c.l.b16 %v30
  %v286 = vunpack.c.l.b16 %v31
  %v287 = vunpack.c.l.b16 %v32
  %v288 = vunpack.c.l.b16 %v33
  %v289 = vunpack.c.l.b16 %v34
  %v290 = vunpack.c.l.b16 %v35
  %v291 = vunpack.c.l.b16 %v36
  %v292 = vunpack.c.l.b16 %v37
  %v293 = vunpack.c.l.b16 %v38
  %v294 = vunpack.c.l.b16 %v39
  %v295 = vunpack.c.l.b16 %v40
  %v296 = vunpack.c.l.b16 %v41
  %v297 = vunpack.c.l.b16 %v42
  %v298 = vunpack.c.l.b16 %v43
  %v299 = vunpack.c.l.b16 %v44
  %v300 = vunpack.c.l.b16 %v45
  %v301 = vunpack.c.l.b16 %v46
  %v302 = vunpack.c.l.b16 %v47
  %v303 = vunpack.c.l.b16 %v48
  %v304 = vunpack.c.l.b16 %v49
  %v305 = vunpack.c.l.b16 %v50
  %v306 = vunpack.c.l.b16 %v51
  %v307 = vunpack.c.l.b16 %v52
  %v308 = vunpack.c.l.b16 %v53
  %v309 = vunpack.c.l.b16 %v54
  %v310 = vunpack.c.l.b16 %v55
  %v311 = vunpack.c.l.b16 %v56
  %v312 = vunpack.c.l.b16 %v57
  %v313 = vunpack.c.l.b16 %v58
  %v314 = vunpack.c.l.b16 %v59
  %v315 = vunpack.c.l.b16 %v60
  %v316 = vunpack.c.l.b16 %v61
  %v317 = vunpack.c.l.b16 %v62
  %v318 = vunpack.c.l.b16 %v63
  %v319 = vunpack.c.l.b16 %v64
  %v320 = vunpack.c.l.b16 %v65
  %v321 = vunpack.c.l.b16 %v66
  %v322 = vunpack.c.l.b16 %v67
  %v323 = vunpack.c.l.b16 %v68
  %v324 = vunpack.c.l.b16 %v69
  %v325 = vunpack.c.l.b16 %v70
  %v326 = vunpack.c.l.b16 %v71
  %v327 = vunpack.c.l.b16 %v72
  %v328 = vunpack.c.l.b16 %v73
  %v329 = vunpack.c.l.b16 %v74
  %v330 = vunpack.c.l.b16 %v75
  %v331 = vunpack.c.l.b16 %v76
  %v332 = vpack.c.b16 %v283, %v282
  %v333 = vpack.c.b16 %v285, %v284
  %v334 = vpack.c.b16 %v287, %v286
  %v335 = vpack.c.b16 %v289, %v288
  %v336 = vpack.c.b16 %v291, %v290
  %v337 = vpack.c.b16 %v293, %v292
  %v338 = vpack.c.b16 %v295, %v294
  %v339 = vpack.c.b16 %v297, %v296
  %v340 = vpack.c.b16 %v299, %v298
  %v341 = vpack.c.b16 %v301, %v300
  %v342 = vpack.c.b16 %v303, %v302
  %v343 = vpack.c.b16 %v305, %v304
  %v344 = vpack.c.b16 %v307, %v306
  %v345 = vpack.c.b16 %v309, %v308
  %v346 = vpack.c.b16 %v311, %v310
  %v347 = vpack.c.b16 %v313, %v312
  %v348 = vpack.c.b16 %v315, %v314
  %v349 = vpack.c.b16 %v317, %v316
  %v350 = vpack.c.b16 %v319, %v318
  %v351 = vpack.c.b16 %v321, %v320
  %v352 = vpack.c.b16 %v323, %v322
  %v353 = vpack.c.b16 %v325, %v324
  %v354 = vpack.c.b16 %v327, %v326
  %v355 = vpack.c.b16 %v329, %v328
  %v356 = vpack.c.b16 %v331, %v330
  %vm382 = vcmask 130048
  %v384 = vsel %vm382, %v186, 0
  %v387 = vsel %vm382, %v190, 0
  %v390 = vsel %vm382, %v194, 0
  %v393 = vsel %vm382, %v198, 0
  %v396 = vsel %vm382, %v202, 0
  %v399 = vsel %vm382, %v206, 0
  %v402 = vsel %vm382, %v210, 0
  %404 = vmatprep.subr.bf16.mxu0 0
  %405 = vmatpush1.bf16.msra.mxu0 %v339
  %406 = vmatprep.subr.bf16.mxu0 0
  %407 = vmatpush1.bf16.msra.mxu0 %v338
  %408 = vmatprep.subr.bf16.mxu0 0
  %409 = vmatpush1.bf16.msra.mxu0 %v337
  %410 = vmatprep.subr.bf16.mxu0 0
  %411 = vmatpush1.bf16.msra.mxu0 %v336
  %412 = vmatprep.subr.bf16.mxu0 0
  %413 = vmatpush1.bf16.msra.mxu0 %v335
  %414 = vmatprep.subr.bf16.mxu0 0
  %415 = vmatpush1.bf16.msra.mxu0 %v334
  %416 = vmatprep.subr.bf16.mxu0 0
  %417 = vmatpush1.bf16.msra.mxu0 %v333
  %418 = vmatprep.subr.bf16.mxu0 0
  %419 = vmatpush1.bf16.msra.mxu0 %v332
  %420 = vmatprep.subr.bf16.mxu0 0
  %421 = vmatpush2.bf16.msra.mxu0 %v347
  %422 = vmatprep.subr.bf16.mxu0 0
  %423 = vmatpush2.bf16.msra.mxu0 %v346
  %424 = vmatprep.subr.bf16.mxu0 0
  %425 = vmatpush2.bf16.msra.mxu0 %v345
  %426 = vmatprep.subr.bf16.mxu0 0
  %427 = vmatpush2.bf16.msra.mxu0 %v344
  %428 = vmatprep.subr.bf16.mxu0 0
  %429 = vmatpush2.bf16.msra.mxu0 %v343
  %430 = vmatprep.subr.bf16.mxu0 0
  %431 = vmatpush2.bf16.msra.mxu0 %v342
  %432 = vmatprep.subr.bf16.mxu0 0
  %433 = vmatpush2.bf16.msra.mxu0 %v341
  %434 = vmatprep.subr.bf16.mxu0 0
  %435 = vmatpush2.bf16.msra.mxu0 %v340
  %436 = vmatprep.mubr.bf16.mxu0 %v184
  %437 = vmatmul.mubr.bf16.gmra.mxu0 %v183
  %v438 = vpop.f32.mrf.mxu0
  %v439 = vadd.f32 0.0, %v438
  %v440 = vpop.f32.mrf.mxu0
  %v441 = vpop.f32.mrf.mxu0
  %v442 = vadd.f32 0.0, %v441
  %v443 = vpop.f32.mrf.mxu0
  %444 = vmatprep.mubr.bf16.mxu0 %v188
  %445 = vmatmul.mubr.bf16.gmra.mxu0 %v187
  %v446 = vpop.f32.mrf.mxu0
  %v447 = vadd.f32 0.0, %v446
  %v448 = vpop.f32.mrf.mxu0
  %v449 = vpop.f32.mrf.mxu0
  %v450 = vadd.f32 0.0, %v449
  %v451 = vpop.f32.mrf.mxu0
  %452 = vmatprep.mubr.bf16.mxu0 %v192
  %453 = vmatmul.mubr.bf16.gmra.mxu0 %v191
  %v454 = vpop.f32.mrf.mxu0
  %v455 = vadd.f32 0.0, %v454
  %v456 = vpop.f32.mrf.mxu0
  %v457 = vpop.f32.mrf.mxu0
  %v458 = vadd.f32 0.0, %v457
  %v459 = vpop.f32.mrf.mxu0
  %460 = vmatprep.mubr.bf16.mxu0 %v196
  %461 = vmatmul.mubr.bf16.gmra.mxu0 %v195
  %v462 = vpop.f32.mrf.mxu0
  %v463 = vadd.f32 0.0, %v462
  %v464 = vpop.f32.mrf.mxu0
  %v465 = vpop.f32.mrf.mxu0
  %v466 = vadd.f32 0.0, %v465
  %v467 = vpop.f32.mrf.mxu0
  %468 = vmatprep.mubr.bf16.mxu0 %v200
  %469 = vmatmul.mubr.bf16.gmra.mxu0 %v199
  %v470 = vpop.f32.mrf.mxu0
  %v471 = vadd.f32 0.0, %v470
  %v472 = vpop.f32.mrf.mxu0
  %v473 = vpop.f32.mrf.mxu0
  %v474 = vadd.f32 0.0, %v473
  %v475 = vpop.f32.mrf.mxu0
  %476 = vmatprep.mubr.bf16.mxu0 %v204
  %477 = vmatmul.mubr.bf16.gmra.mxu0 %v203
  %v478 = vpop.f32.mrf.mxu0
  %v479 = vadd.f32 0.0, %v478
  %v480 = vpop.f32.mrf.mxu0
  %v481 = vpop.f32.mrf.mxu0
  %v482 = vadd.f32 0.0, %v481
  %v483 = vpop.f32.mrf.mxu0
  %484 = vmatprep.mubr.bf16.mxu0 %v208
  %485 = vmatmul.mubr.bf16.gmra.mxu0 %v207
  %v486 = vpop.f32.mrf.mxu0
  %v487 = vadd.f32 0.0, %v486
  %v488 = vpop.f32.mrf.mxu0
  %v489 = vpop.f32.mrf.mxu0
  %v490 = vpop.f32.mrf.mxu0
  %491 = vdwg.mxu0
  %492 = vmatprep.subr.bf16.mxu0 0
  %493 = vmatpush1.bf16.msra.mxu0 %v355
  %494 = vmatprep.subr.bf16.mxu0 0
  %495 = vmatpush1.bf16.msra.mxu0 %v354
  %496 = vmatprep.subr.bf16.mxu0 0
  %497 = vmatpush1.bf16.msra.mxu0 %v353
  %498 = vmatprep.subr.bf16.mxu0 0
  %499 = vmatpush1.bf16.msra.mxu0 %v352
  %500 = vmatprep.subr.bf16.mxu0 0
  %501 = vmatpush1.bf16.msra.mxu0 %v351
  %502 = vmatprep.subr.bf16.mxu0 0
  %503 = vmatpush1.bf16.msra.mxu0 %v350
  %504 = vmatprep.subr.bf16.mxu0 0
  %505 = vmatpush1.bf16.msra.mxu0 %v349
  %506 = vmatprep.subr.bf16.mxu0 0
  %507 = vmatpush1.bf16.msra.mxu0 %v348
  %508 = vmatprep.subr.bf16.mxu0 0
  %509 = vmatpush2.bf16.msra.mxu0 0
  %510 = vmatprep.subr.bf16.mxu0 0
  %511 = vmatpush2.bf16.msra.mxu0 0
  %512 = vmatprep.subr.bf16.mxu0 0
  %513 = vmatpush2.bf16.msra.mxu0 0
  %514 = vmatprep.subr.bf16.mxu0 0
  %515 = vmatpush2.bf16.msra.mxu0 0
  %516 = vmatprep.subr.bf16.mxu0 0
  %517 = vmatpush2.bf16.msra.mxu0 0
  %518 = vmatprep.subr.bf16.mxu0 0
  %519 = vmatpush2.bf16.msra.mxu0 0
  %520 = vmatprep.subr.bf16.mxu0 0
  %521 = vmatpush2.bf16.msra.mxu0 0
  %522 = vmatprep.subr.bf16.mxu0 0
  %523 = vmatpush2.bf16.msra.mxu0 %v356
  %524 = vmatprep.mubr.bf16.mxu0 %v384
  %525 = vmatmul.mubr.bf16.gmra.mxu0 %v185
  %v526 = vpop.f32.mrf.mxu0
  %v527 = vadd.f32 %v439, %v526
  %v528 = vpop.f32.mrf.mxu0
  %v529 = vpop.f32.mrf.mxu0
  %v530 = vadd.f32 %v442, %v529
  %v531 = vpop.f32.mrf.mxu0
  %532 = vmatprep.mubr.bf16.mxu0 %v387
  %533 = vmatmul.mubr.bf16.gmra.mxu0 %v189
  %v534 = vpop.f32.mrf.mxu0
  %v535 = vadd.f32 %v447, %v534
  %v536 = vpop.f32.mrf.mxu0
  %v537 = vpop.f32.mrf.mxu0
  %v538 = vadd.f32 %v450, %v537
  %v539 = vpop.f32.mrf.mxu0
  %540 = vmatprep.mubr.bf16.mxu0 %v390
  %541 = vmatmul.mubr.bf16.gmra.mxu0 %v193
  %v542 = vpop.f32.mrf.mxu0
  %v543 = vadd.f32 %v455, %v542
  %v544 = vpop.f32.mrf.mxu0
  %v545 = vpop.f32.mrf.mxu0
  %v546 = vadd.f32 %v458, %v545
  %v547 = vpop.f32.mrf.mxu0
  %548 = vmatprep.mubr.bf16.mxu0 %v393
  %549 = vmatmul.mubr.bf16.gmra.mxu0 %v197
  %v550 = vpop.f32.mrf.mxu0
  %v551 = vadd.f32 %v463, %v550
  %v552 = vpop.f32.mrf.mxu0
  %v553 = vpop.f32.mrf.mxu0
  %v554 = vadd.f32 %v466, %v553
  %v555 = vpop.f32.mrf.mxu0
  %556 = vmatprep.mubr.bf16.mxu0 %v396
  %557 = vmatmul.mubr.bf16.gmra.mxu0 %v201
  %v558 = vpop.f32.mrf.mxu0
  %v559 = vadd.f32 %v471, %v558
  %v560 = vpop.f32.mrf.mxu0
  %v561 = vpop.f32.mrf.mxu0
  %v562 = vadd.f32 %v474, %v561
  %v563 = vpop.f32.mrf.mxu0
  %564 = vmatprep.mubr.bf16.mxu0 %v399
  %565 = vmatmul.mubr.bf16.gmra.mxu0 %v205
  %v566 = vpop.f32.mrf.mxu0
  %v567 = vadd.f32 %v479, %v566
  %v568 = vpop.f32.mrf.mxu0
  %v569 = vpop.f32.mrf.mxu0
  %v570 = vadd.f32 %v482, %v569
  %v571 = vpop.f32.mrf.mxu0
  %572 = vmatprep.mubr.bf16.mxu0 %v402
  %573 = vmatmul.mubr.bf16.gmra.mxu0 %v209
  %v574 = vpop.f32.mrf.mxu0
  %v575 = vadd.f32 %v487, %v574
  %v576 = vpop.f32.mrf.mxu0
  %v577 = vpop.f32.mrf.mxu0
  %v578 = vpop.f32.mrf.mxu0
  %579 = vdwg.mxu0
  %v581 = vlaneseq
  %v582 = vshrl.u32 %v581, 7
  %v583 = vsub.s32 0, %v582
  %v584 = vrot.slane %v77, %v583
  %v586 = vmul.f32 %v527, %v584
  %v587 = vmul.f32 %v530, %v584
  %v588 = vmul.f32 %v535, %v584
  %v589 = vmul.f32 %v538, %v584
  %v590 = vmul.f32 %v543, %v584
  %v591 = vmul.f32 %v546, %v584
  %v592 = vmul.f32 %v551, %v584
  %v593 = vmul.f32 %v554, %v584
  %v594 = vmul.f32 %v559, %v584
  %v595 = vmul.f32 %v562, %v584
  %v596 = vmul.f32 %v567, %v584
  %v597 = vmul.f32 %v570, %v584
  %v598 = vmul.f32 %v575, %v584
  %v600 = vlaneseq
  %v601 = vshrl.u32 %v600, 7
  %v602 = vsub.s32 0, %v601
  %v603 = vrot.slane %v78, %v602
  %v605 = vadd.f32 %v586, %v603
  %v606 = vadd.f32 %v587, %v603
  %v607 = vadd.f32 %v588, %v603
  %v608 = vadd.f32 %v589, %v603
  %v609 = vadd.f32 %v590, %v603
  %v610 = vadd.f32 %v591, %v603
  %v611 = vadd.f32 %v592, %v603
  %v612 = vadd.f32 %v593, %v603
  %v613 = vadd.f32 %v594, %v603
  %v614 = vadd.f32 %v595, %v603
  %v615 = vadd.f32 %v596, %v603
  %v616 = vadd.f32 %v597, %v603
  %v617 = vadd.f32 %v598, %v603
  %v618 = vmax.f32 %v605, 0.0
  %v619 = vmax.f32 %v606, 0.0
  %v620 = vmax.f32 %v607, 0.0
  %v621 = vmax.f32 %v608, 0.0
  %v622 = vmax.f32 %v609, 0.0
  %v623 = vmax.f32 %v610, 0.0
  %v624 = vmax.f32 %v611, 0.0
  %v625 = vmax.f32 %v612, 0.0
  %v626 = vmax.f32 %v613, 0.0
  %v627 = vmax.f32 %v614, 0.0
  %v628 = vmax.f32 %v615, 0.0
  %v629 = vmax.f32 %v616, 0.0
  %v630 = vmax.f32 %v617, 0.0
  %v631 = vld [vmem:[%s1] sm:$0xff]
  %v632 = vld [vmem:[%s1 + $0x8] sm:$0xff]
  %v633 = vld [vmem:[%s1 + $0x10] sm:$0xff]
  %v634 = vld [vmem:[%s1 + $0x18] sm:$0xff]
  %v635 = vld [vmem:[%s1 + $0x20] sm:$0xff]
  %v636 = vld [vmem:[%s1 + $0x28] sm:$0xff]
  %v637 = vld [vmem:[%s1 + $0x30] sm:$0xff]
  %v638 = vld [vmem:[%s1 + $0x38] sm:$0xff]
  %v639 = vld [vmem:[%s1 + $0x40] sm:$0xff]
  %v640 = vld [vmem:[%s1 + $0x48] sm:$0xff]
  %v641 = vld [vmem:[%s1 + $0x50] sm:$0xff]
  %v642 = vld [vmem:[%s1 + $0x58] sm:$0xff]
  %v643 = vld [vmem:[%s1 + $0x60] sm:$0xff]
  %v644 = vld [vmem:[%s1 + $0x68] sm:$0xff]
  %v645 = vld [vmem:[%s1 + $0x70] sm:$0xff]
  %v646 = vld [vmem:[%s1 + $0x78] sm:$0xff]
  %v647 = vld [vmem:[%s1 + $0x80] sm:$0xff]
  %v648 = vld [vmem:[%s1 + $0x88] sm:$0xff]
  %v649 = vld [vmem:[%s1 + $0x90] sm:$0xff]
  %v650 = vld [vmem:[%s1 + $0x98] sm:$0xff]
  %v651 = vld [vmem:[%s1 + $0xa0] sm:$0xff]
  %v652 = vld [vmem:[%s1 + $0xa8] sm:$0xff]
  %v653 = vld [vmem:[%s1 + $0xb0] sm:$0xff]
  %v654 = vld [vmem:[%s1 + $0xb8] sm:$0xff]
  %v655 = vld [vmem:[%s1 + $0xc0] sm:$0x11]
  %v656 = vld [vmem:[%s1 + $0xc8] sm:$0x11]
  %v683 = vunpack.c.l.b16 %v631
  %v684 = vunpack.c.h.b16 %v631
  %v685 = vunpack.c.l.b16 %v632
  %v686 = vunpack.c.h.b16 %v632
  %v687 = vunpack.c.l.b16 %v633
  %v688 = vunpack.c.h.b16 %v633
  %v689 = vunpack.c.l.b16 %v634
  %v690 = vunpack.c.h.b16 %v634
  %v691 = vunpack.c.l.b16 %v635
  %v692 = vunpack.c.h.b16 %v635
  %v693 = vunpack.c.l.b16 %v636
  %v694 = vunpack.c.h.b16 %v636
  %v695 = vunpack.c.l.b16 %v637
  %v696 = vunpack.c.h.b16 %v637
  %v697 = vunpack.c.l.b16 %v638
  %v698 = vunpack.c.h.b16 %v638
  %v699 = vunpack.c.l.b16 %v639
  %v700 = vunpack.c.h.b16 %v639
  %v701 = vunpack.c.l.b16 %v640
  %v702 = vunpack.c.h.b16 %v640
  %v703 = vunpack.c.l.b16 %v641
  %v704 = vunpack.c.h.b16 %v641
  %v705 = vunpack.c.l.b16 %v642
  %v706 = vunpack.c.h.b16 %v642
  %v707 = vunpack.c.l.b16 %v643
  %v708 = vunpack.c.h.b16 %v643
  %v709 = vunpack.c.l.b16 %v644
  %v710 = vunpack.c.h.b16 %v644
  %v711 = vunpack.c.l.b16 %v645
  %v712 = vunpack.c.h.b16 %v645
  %v713 = vunpack.c.l.b16 %v646
  %v714 = vunpack.c.h.b16 %v646
  %v715 = vunpack.c.l.b16 %v647
  %v716 = vunpack.c.h.b16 %v647
  %v717 = vunpack.c.l.b16 %v648
  %v718 = vunpack.c.h.b16 %v648
  %v719 = vunpack.c.l.b16 %v649
  %v720 = vunpack.c.h.b16 %v649
  %v721 = vunpack.c.l.b16 %v650
  %v722 = vunpack.c.h.b16 %v650
  %v723 = vunpack.c.l.b16 %v651
  %v724 = vunpack.c.h.b16 %v651
  %v725 = vunpack.c.l.b16 %v652
  %v726 = vunpack.c.h.b16 %v652
  %v727 = vunpack.c.l.b16 %v653
  %v728 = vunpack.c.h.b16 %v653
  %v729 = vunpack.c.l.b16 %v654
  %v730 = vunpack.c.h.b16 %v654
  %v731 = vunpack.c.l.b16 %v655
  %v732 = vunpack.c.h.b16 %v655
  %v733 = vunpack.c.l.b16 %v656
  %v734 = vunpack.c.h.b16 %v656
  %v735 = vpack.c.b16 %v687, %v683
  %v736 = vpack.c.b16 %v688, %v684
  %v737 = vpack.c.b16 %v689, %v685
  %v738 = vpack.c.b16 %v690, %v686
  %v739 = vpack.c.b16 %v695, %v691
  %v740 = vpack.c.b16 %v696, %v692
  %v741 = vpack.c.b16 %v697, %v693
  %v742 = vpack.c.b16 %v698, %v694
  %v743 = vpack.c.b16 %v703, %v699
  %v744 = vpack.c.b16 %v704, %v700
  %v745 = vpack.c.b16 %v705, %v701
  %v746 = vpack.c.b16 %v706, %v702
  %v747 = vpack.c.b16 %v711, %v707
  %v748 = vpack.c.b16 %v712, %v708
  %v749 = vpack.c.b16 %v713, %v709
  %v750 = vpack.c.b16 %v714, %v710
  %v751 = vpack.c.b16 %v719, %v715
  %v752 = vpack.c.b16 %v720, %v716
  %v753 = vpack.c.b16 %v721, %v717
  %v754 = vpack.c.b16 %v722, %v718
  %v755 = vpack.c.b16 %v727, %v723
  %v756 = vpack.c.b16 %v728, %v724
  %v757 = vpack.c.b16 %v729, %v725
  %v758 = vpack.c.b16 %v730, %v726
  %v759 = vpack.c.b16 %v731, %v731
  %v760 = vpack.c.b16 %v732, %v732
  %v761 = vpack.c.b16 %v733, %v733
  %v762 = vpack.c.b16 %v734, %v734
  %v785 = vsel %vm382, %v738, 0
  %v788 = vsel %vm382, %v742, 0
  %v791 = vsel %vm382, %v746, 0
  %v794 = vsel %vm382, %v750, 0
  %v797 = vsel %vm382, %v754, 0
  %v800 = vsel %vm382, %v758, 0
  %v803 = vsel %vm382, %v762, 0
  %805 = vmatprep.subr.bf16.mxu0 0
  %806 = vmatpush1.bf16.msra.mxu0 %v339
  %807 = vmatprep.subr.bf16.mxu0 0
  %808 = vmatpush1.bf16.msra.mxu0 %v338
  %809 = vmatprep.subr.bf16.mxu0 0
  %810 = vmatpush1.bf16.msra.mxu0 %v337
  %811 = vmatprep.subr.bf16.mxu0 0
  %812 = vmatpush1.bf16.msra.mxu0 %v336
  %813 = vmatprep.subr.bf16.mxu0 0
  %814 = vmatpush1.bf16.msra.mxu0 %v335
  %815 = vmatprep.subr.bf16.mxu0 0
  %816 = vmatpush1.bf16.msra.mxu0 %v334
  %817 = vmatprep.subr.bf16.mxu0 0
  %818 = vmatpush1.bf16.msra.mxu0 %v333
  %819 = vmatprep.subr.bf16.mxu0 0
  %820 = vmatpush1.bf16.msra.mxu0 %v332
  %821 = vmatprep.subr.bf16.mxu0 0
  %822 = vmatpush2.bf16.msra.mxu0 %v347
  %823 = vmatprep.subr.bf16.mxu0 0
  %824 = vmatpush2.bf16.msra.mxu0 %v346
  %825 = vmatprep.subr.bf16.mxu0 0
  %826 = vmatpush2.bf16.msra.mxu0 %v345
  %827 = vmatprep.subr.bf16.mxu0 0
  %828 = vmatpush2.bf16.msra.mxu0 %v344
  %829 = vmatprep.subr.bf16.mxu0 0
  %830 = vmatpush2.bf16.msra.mxu0 %v343
  %831 = vmatprep.subr.bf16.mxu0 0
  %832 = vmatpush2.bf16.msra.mxu0 %v342
  %833 = vmatprep.subr.bf16.mxu0 0
  %834 = vmatpush2.bf16.msra.mxu0 %v341
  %835 = vmatprep.subr.bf16.mxu0 0
  %836 = vmatpush2.bf16.msra.mxu0 %v340
  %837 = vmatprep.mubr.bf16.mxu0 %v736
  %838 = vmatmul.mubr.bf16.gmra.mxu0 %v735
  %v839 = vpop.f32.mrf.mxu0
  %v840 = vadd.f32 0.0, %v839
  %v841 = vpop.f32.mrf.mxu0
  %v842 = vpop.f32.mrf.mxu0
  %v843 = vadd.f32 0.0, %v842
  %v844 = vpop.f32.mrf.mxu0
  %845 = vmatprep.mubr.bf16.mxu0 %v740
  %846 = vmatmul.mubr.bf16.gmra.mxu0 %v739
  %v847 = vpop.f32.mrf.mxu0
  %v848 = vadd.f32 0.0, %v847
  %v849 = vpop.f32.mrf.mxu0
  %v850 = vpop.f32.mrf.mxu0
  %v851 = vadd.f32 0.0, %v850
  %v852 = vpop.f32.mrf.mxu0
  %853 = vmatprep.mubr.bf16.mxu0 %v744
  %854 = vmatmul.mubr.bf16.gmra.mxu0 %v743
  %v855 = vpop.f32.mrf.mxu0
  %v856 = vadd.f32 0.0, %v855
  %v857 = vpop.f32.mrf.mxu0
  %v858 = vpop.f32.mrf.mxu0
  %v859 = vadd.f32 0.0, %v858
  %v860 = vpop.f32.mrf.mxu0
  %861 = vmatprep.mubr.bf16.mxu0 %v748
  %862 = vmatmul.mubr.bf16.gmra.mxu0 %v747
  %v863 = vpop.f32.mrf.mxu0
  %v864 = vadd.f32 0.0, %v863
  %v865 = vpop.f32.mrf.mxu0
  %v866 = vpop.f32.mrf.mxu0
  %v867 = vadd.f32 0.0, %v866
  %v868 = vpop.f32.mrf.mxu0
  %869 = vmatprep.mubr.bf16.mxu0 %v752
  %870 = vmatmul.mubr.bf16.gmra.mxu0 %v751
  %v871 = vpop.f32.mrf.mxu0
  %v872 = vadd.f32 0.0, %v871
  %v873 = vpop.f32.mrf.mxu0
  %v874 = vpop.f32.mrf.mxu0
  %v875 = vadd.f32 0.0, %v874
  %v876 = vpop.f32.mrf.mxu0
  %877 = vmatprep.mubr.bf16.mxu0 %v756
  %878 = vmatmul.mubr.bf16.gmra.mxu0 %v755
  %v879 = vpop.f32.mrf.mxu0
  %v880 = vadd.f32 0.0, %v879
  %v881 = vpop.f32.mrf.mxu0
  %v882 = vpop.f32.mrf.mxu0
  %v883 = vadd.f32 0.0, %v882
  %v884 = vpop.f32.mrf.mxu0
  %885 = vmatprep.mubr.bf16.mxu0 %v760
  %886 = vmatmul.mubr.bf16.gmra.mxu0 %v759
  %v887 = vpop.f32.mrf.mxu0
  %v888 = vadd.f32 0.0, %v887
  %v889 = vpop.f32.mrf.mxu0
  %v890 = vpop.f32.mrf.mxu0
  %v891 = vpop.f32.mrf.mxu0
  %892 = vdwg.mxu0
  %893 = vmatprep.subr.bf16.mxu0 0
  %894 = vmatpush1.bf16.msra.mxu0 %v355
  %895 = vmatprep.subr.bf16.mxu0 0
  %896 = vmatpush1.bf16.msra.mxu0 %v354
  %897 = vmatprep.subr.bf16.mxu0 0
  %898 = vmatpush1.bf16.msra.mxu0 %v353
  %899 = vmatprep.subr.bf16.mxu0 0
  %900 = vmatpush1.bf16.msra.mxu0 %v352
  %901 = vmatprep.subr.bf16.mxu0 0
  %902 = vmatpush1.bf16.msra.mxu0 %v351
  %903 = vmatprep.subr.bf16.mxu0 0
  %904 = vmatpush1.bf16.msra.mxu0 %v350
  %905 = vmatprep.subr.bf16.mxu0 0
  %906 = vmatpush1.bf16.msra.mxu0 %v349
  %907 = vmatprep.subr.bf16.mxu0 0
  %908 = vmatpush1.bf16.msra.mxu0 %v348
  %909 = vmatprep.subr.bf16.mxu0 0
  %910 = vmatpush2.bf16.msra.mxu0 0
  %911 = vmatprep.subr.bf16.mxu0 0
  %912 = vmatpush2.bf16.msra.mxu0 0
  %913 = vmatprep.subr.bf16.mxu0 0
  %914 = vmatpush2.bf16.msra.mxu0 0
  %915 = vmatprep.subr.bf16.mxu0 0
  %916 = vmatpush2.bf16.msra.mxu0 0
  %917 = vmatprep.subr.bf16.mxu0 0
  %918 = vmatpush2.bf16.msra.mxu0 0
  %919 = vmatprep.subr.bf16.mxu0 0
  %920 = vmatpush2.bf16.msra.mxu0 0
  %921 = vmatprep.subr.bf16.mxu0 0
  %922 = vmatpush2.bf16.msra.mxu0 0
  %923 = vmatprep.subr.bf16.mxu0 0
  %924 = vmatpush2.bf16.msra.mxu0 %v356
  %925 = vmatprep.mubr.bf16.mxu0 %v785
  %926 = vmatmul.mubr.bf16.gmra.mxu0 %v737
  %v927 = vpop.f32.mrf.mxu0
  %v928 = vadd.f32 %v840, %v927
  %v929 = vpop.f32.mrf.mxu0
  %v930 = vpop.f32.mrf.mxu0
  %v931 = vadd.f32 %v843, %v930
  %v932 = vpop.f32.mrf.mxu0
  %933 = vmatprep.mubr.bf16.mxu0 %v788
  %934 = vmatmul.mubr.bf16.gmra.mxu0 %v741
  %v935 = vpop.f32.mrf.mxu0
  %v936 = vadd.f32 %v848, %v935
  %v937 = vpop.f32.mrf.mxu0
  %v938 = vpop.f32.mrf.mxu0
  %v939 = vadd.f32 %v851, %v938
  %v940 = vpop.f32.mrf.mxu0
  %941 = vmatprep.mubr.bf16.mxu0 %v791
  %942 = vmatmul.mubr.bf16.gmra.mxu0 %v745
  %v943 = vpop.f32.mrf.mxu0
  %v944 = vadd.f32 %v856, %v943
  %v945 = vpop.f32.mrf.mxu0
  %v946 = vpop.f32.mrf.mxu0
  %v947 = vadd.f32 %v859, %v946
  %v948 = vpop.f32.mrf.mxu0
  %949 = vmatprep.mubr.bf16.mxu0 %v794
  %950 = vmatmul.mubr.bf16.gmra.mxu0 %v749
  %v951 = vpop.f32.mrf.mxu0
  %v952 = vadd.f32 %v864, %v951
  %v953 = vpop.f32.mrf.mxu0
  %v954 = vpop.f32.mrf.mxu0
  %v955 = vadd.f32 %v867, %v954
  %v956 = vpop.f32.mrf.mxu0
  %957 = vmatprep.mubr.bf16.mxu0 %v797
  %958 = vmatmul.mubr.bf16.gmra.mxu0 %v753
  %v959 = vpop.f32.mrf.mxu0
  %v960 = vadd.f32 %v872, %v959
  %v961 = vpop.f32.mrf.mxu0
  %v962 = vpop.f32.mrf.mxu0
  %v963 = vadd.f32 %v875, %v962
  %v964 = vpop.f32.mrf.mxu0
  %965 = vmatprep.mubr.bf16.mxu0 %v800
  %966 = vmatmul.mubr.bf16.gmra.mxu0 %v757
  %v967 = vpop.f32.mrf.mxu0
  %v968 = vadd.f32 %v880, %v967
  %v969 = vpop.f32.mrf.mxu0
  %v970 = vpop.f32.mrf.mxu0
  %v971 = vadd.f32 %v883, %v970
  %v972 = vpop.f32.mrf.mxu0
  %973 = vmatprep.mubr.bf16.mxu0 %v803
  %974 = vmatmul.mubr.bf16.gmra.mxu0 %v761
  %v975 = vpop.f32.mrf.mxu0
  %v976 = vadd.f32 %v888, %v975
  %v977 = vpop.f32.mrf.mxu0
  %v978 = vpop.f32.mrf.mxu0
  %v979 = vpop.f32.mrf.mxu0
  %980 = vdwg.mxu0
  %v981 = vmul.f32 %v928, %v584
  %v982 = vmul.f32 %v931, %v584
  %v983 = vmul.f32 %v936, %v584
  %v984 = vmul.f32 %v939, %v584
  %v985 = vmul.f32 %v944, %v584
  %v986 = vmul.f32 %v947, %v584
  %v987 = vmul.f32 %v952, %v584
  %v988 = vmul.f32 %v955, %v584
  %v989 = vmul.f32 %v960, %v584
  %v990 = vmul.f32 %v963, %v584
  %v991 = vmul.f32 %v968, %v584
  %v992 = vmul.f32 %v971, %v584
  %v993 = vmul.f32 %v976, %v584
  %v994 = vadd.f32 %v981, %v603
  %v995 = vadd.f32 %v982, %v603
  %v996 = vadd.f32 %v983, %v603
  %v997 = vadd.f32 %v984, %v603
  %v998 = vadd.f32 %v985, %v603
  %v999 = vadd.f32 %v986, %v603
  %v1000 = vadd.f32 %v987, %v603
  %v1001 = vadd.f32 %v988, %v603
  %v1002 = vadd.f32 %v989, %v603
  %v1003 = vadd.f32 %v990, %v603
  %v1004 = vadd.f32 %v991, %v603
  %v1005 = vadd.f32 %v992, %v603
  %v1006 = vadd.f32 %v993, %v603
  %v1007 = vmax.f32 %v994, 0.0
  %v1008 = vmax.f32 %v995, 0.0
  %v1009 = vmax.f32 %v996, 0.0
  %v1010 = vmax.f32 %v997, 0.0
  %v1011 = vmax.f32 %v998, 0.0
  %v1012 = vmax.f32 %v999, 0.0
  %v1013 = vmax.f32 %v1000, 0.0
  %v1014 = vmax.f32 %v1001, 0.0
  %v1015 = vmax.f32 %v1002, 0.0
  %v1016 = vmax.f32 %v1003, 0.0
  %v1017 = vmax.f32 %v1004, 0.0
  %v1018 = vmax.f32 %v1005, 0.0
  %v1019 = vmax.f32 %v1006, 0.0
  %v1020 = vmax.f32 %v618, %v1007
  %v1021 = vmax.f32 %v619, %v1008
  %v1022 = vmax.f32 %v620, %v1009
  %v1023 = vmax.f32 %v621, %v1010
  %v1024 = vmax.f32 %v622, %v1011
  %v1025 = vmax.f32 %v623, %v1012
  %v1026 = vmax.f32 %v624, %v1013
  %v1027 = vmax.f32 %v625, %v1014
  %v1028 = vmax.f32 %v626, %v1015
  %v1029 = vmax.f32 %v627, %v1016
  %v1030 = vmax.f32 %v628, %v1017
  %v1031 = vmax.f32 %v629, %v1018
  %v1032 = vmax.f32 %v630, %v1019
  %v1033 = vld [vmem:[%s2] sm:$0xff]
  %v1034 = vld [vmem:[%s2 + $0x8] sm:$0xff]
  %v1035 = vld [vmem:[%s2 + $0x10] sm:$0xff]
  %v1036 = vld [vmem:[%s2 + $0x18] sm:$0xff]
  %v1037 = vld [vmem:[%s2 + $0x20] sm:$0xff]
  %v1038 = vld [vmem:[%s2 + $0x28] sm:$0xff]
  %v1039 = vld [vmem:[%s2 + $0x30] sm:$0xff]
  %v1040 = vld [vmem:[%s2 + $0x38] sm:$0xff]
  %v1041 = vld [vmem:[%s2 + $0x40] sm:$0xff]
  %v1042 = vld [vmem:[%s2 + $0x48] sm:$0xff]
  %v1043 = vld [vmem:[%s2 + $0x50] sm:$0xff]
  %v1044 = vld [vmem:[%s2 + $0x58] sm:$0xff]
  %v1045 = vld [vmem:[%s2 + $0x60] sm:$0xff]
  %v1046 = vld [vmem:[%s2 + $0x68] sm:$0xff]
  %v1047 = vld [vmem:[%s2 + $0x70] sm:$0xff]
  %v1048 = vld [vmem:[%s2 + $0x78] sm:$0xff]
  %v1049 = vld [vmem:[%s2 + $0x80] sm:$0xff]
  %v1050 = vld [vmem:[%s2 + $0x88] sm:$0xff]
  %v1051 = vld [vmem:[%s2 + $0x90] sm:$0xff]
  %v1052 = vld [vmem:[%s2 + $0x98] sm:$0xff]
  %v1053 = vld [vmem:[%s2 + $0xa0] sm:$0xff]
  %v1054 = vld [vmem:[%s2 + $0xa8] sm:$0xff]
  %v1055 = vld [vmem:[%s2 + $0xb0] sm:$0xff]
  %v1056 = vld [vmem:[%s2 + $0xb8] sm:$0xff]
  %v1057 = vld [vmem:[%s2 + $0xc0] sm:$0x11]
  %v1058 = vld [vmem:[%s2 + $0xc8] sm:$0x11]
  %v1085 = vunpack.c.l.b16 %v1033
  %v1086 = vunpack.c.h.b16 %v1033
  %v1087 = vunpack.c.l.b16 %v1034
  %v1088 = vunpack.c.h.b16 %v1034
  %v1089 = vunpack.c.l.b16 %v1035
  %v1090 = vunpack.c.h.b16 %v1035
  %v1091 = vunpack.c.l.b16 %v1036
  %v1092 = vunpack.c.h.b16 %v1036
  %v1093 = vunpack.c.l.b16 %v1037
  %v1094 = vunpack.c.h.b16 %v1037
  %v1095 = vunpack.c.l.b16 %v1038
  %v1096 = vunpack.c.h.b16 %v1038
  %v1097 = vunpack.c.l.b16 %v1039
  %v1098 = vunpack.c.h.b16 %v1039
  %v1099 = vunpack.c.l.b16 %v1040
  %v1100 = vunpack.c.h.b16 %v1040
  %v1101 = vunpack.c.l.b16 %v1041
  %v1102 = vunpack.c.h.b16 %v1041
  %v1103 = vunpack.c.l.b16 %v1042
  %v1104 = vunpack.c.h.b16 %v1042
  %v1105 = vunpack.c.l.b16 %v1043
  %v1106 = vunpack.c.h.b16 %v1043
  %v1107 = vunpack.c.l.b16 %v1044
  %v1108 = vunpack.c.h.b16 %v1044
  %v1109 = vunpack.c.l.b16 %v1045
  %v1110 = vunpack.c.h.b16 %v1045
  %v1111 = vunpack.c.l.b16 %v1046
  %v1112 = vunpack.c.h.b16 %v1046
  %v1113 = vunpack.c.l.b16 %v1047
  %v1114 = vunpack.c.h.b16 %v1047
  %v1115 = vunpack.c.l.b16 %v1048
  %v1116 = vunpack.c.h.b16 %v1048
  %v1117 = vunpack.c.l.b16 %v1049
  %v1118 = vunpack.c.h.b16 %v1049
  %v1119 = vunpack.c.l.b16 %v1050
  %v1120 = vunpack.c.h.b16 %v1050
  %v1121 = vunpack.c.l.b16 %v1051
  %v1122 = vunpack.c.h.b16 %v1051
  %v1123 = vunpack.c.l.b16 %v1052
  %v1124 = vunpack.c.h.b16 %v1052
  %v1125 = vunpack.c.l.b16 %v1053
  %v1126 = vunpack.c.h.b16 %v1053
  %v1127 = vunpack.c.l.b16 %v1054
  %v1128 = vunpack.c.h.b16 %v1054
  %v1129 = vunpack.c.l.b16 %v1055
  %v1130 = vunpack.c.h.b16 %v1055
  %v1131 = vunpack.c.l.b16 %v1056
  %v1132 = vunpack.c.h.b16 %v1056
  %v1133 = vunpack.c.l.b16 %v1057
  %v1134 = vunpack.c.h.b16 %v1057
  %v1135 = vunpack.c.l.b16 %v1058
  %v1136 = vunpack.c.h.b16 %v1058
  %v1137 = vpack.c.b16 %v1089, %v1085
  %v1138 = vpack.c.b16 %v1090, %v1086
  %v1139 = vpack.c.b16 %v1091, %v1087
  %v1140 = vpack.c.b16 %v1092, %v1088
  %v1141 = vpack.c.b16 %v1097, %v1093
  %v1142 = vpack.c.b16 %v1098, %v1094
  %v1143 = vpack.c.b16 %v1099, %v1095
  %v1144 = vpack.c.b16 %v1100, %v1096
  %v1145 = vpack.c.b16 %v1105, %v1101
  %v1146 = vpack.c.b16 %v1106, %v1102
  %v1147 = vpack.c.b16 %v1107, %v1103
  %v1148 = vpack.c.b16 %v1108, %v1104
  %v1149 = vpack.c.b16 %v1113, %v1109
  %v1150 = vpack.c.b16 %v1114, %v1110
  %v1151 = vpack.c.b16 %v1115, %v1111
  %v1152 = vpack.c.b16 %v1116, %v1112
  %v1153 = vpack.c.b16 %v1121, %v1117
  %v1154 = vpack.c.b16 %v1122, %v1118
  %v1155 = vpack.c.b16 %v1123, %v1119
  %v1156 = vpack.c.b16 %v1124, %v1120
  %v1157 = vpack.c.b16 %v1129, %v1125
  %v1158 = vpack.c.b16 %v1130, %v1126
  %v1159 = vpack.c.b16 %v1131, %v1127
  %v1160 = vpack.c.b16 %v1132, %v1128
  %v1161 = vpack.c.b16 %v1133, %v1133
  %v1162 = vpack.c.b16 %v1134, %v1134
  %v1163 = vpack.c.b16 %v1135, %v1135
  %v1164 = vpack.c.b16 %v1136, %v1136
  %v1187 = vsel %vm382, %v1140, 0
  %v1190 = vsel %vm382, %v1144, 0
  %v1193 = vsel %vm382, %v1148, 0
  %v1196 = vsel %vm382, %v1152, 0
  %v1199 = vsel %vm382, %v1156, 0
  %v1202 = vsel %vm382, %v1160, 0
  %v1205 = vsel %vm382, %v1164, 0
  %1207 = vmatprep.subr.bf16.mxu0 0
  %1208 = vmatpush1.bf16.msra.mxu0 %v339
  %1209 = vmatprep.subr.bf16.mxu0 0
  %1210 = vmatpush1.bf16.msra.mxu0 %v338
  %1211 = vmatprep.subr.bf16.mxu0 0
  %1212 = vmatpush1.bf16.msra.mxu0 %v337
  %1213 = vmatprep.subr.bf16.mxu0 0
  %1214 = vmatpush1.bf16.msra.mxu0 %v336
  %1215 = vmatprep.subr.bf16.mxu0 0
  %1216 = vmatpush1.bf16.msra.mxu0 %v335
  %1217 = vmatprep.subr.bf16.mxu0 0
  %1218 = vmatpush1.bf16.msra.mxu0 %v334
  %1219 = vmatprep.subr.bf16.mxu0 0
  %1220 = vmatpush1.bf16.msra.mxu0 %v333
  %1221 = vmatprep.subr.bf16.mxu0 0
  %1222 = vmatpush1.bf16.msra.mxu0 %v332
  %1223 = vmatprep.subr.bf16.mxu0 0
  %1224 = vmatpush2.bf16.msra.mxu0 %v347
  %1225 = vmatprep.subr.bf16.mxu0 0
  %1226 = vmatpush2.bf16.msra.mxu0 %v346
  %1227 = vmatprep.subr.bf16.mxu0 0
  %1228 = vmatpush2.bf16.msra.mxu0 %v345
  %1229 = vmatprep.subr.bf16.mxu0 0
  %1230 = vmatpush2.bf16.msra.mxu0 %v344
  %1231 = vmatprep.subr.bf16.mxu0 0
  %1232 = vmatpush2.bf16.msra.mxu0 %v343
  %1233 = vmatprep.subr.bf16.mxu0 0
  %1234 = vmatpush2.bf16.msra.mxu0 %v342
  %1235 = vmatprep.subr.bf16.mxu0 0
  %1236 = vmatpush2.bf16.msra.mxu0 %v341
  %1237 = vmatprep.subr.bf16.mxu0 0
  %1238 = vmatpush2.bf16.msra.mxu0 %v340
  %1239 = vmatprep.mubr.bf16.mxu0 %v1138
  %1240 = vmatmul.mubr.bf16.gmra.mxu0 %v1137
  %v1241 = vpop.f32.mrf.mxu0
  %v1242 = vadd.f32 0.0, %v1241
  %v1243 = vpop.f32.mrf.mxu0
  %v1244 = vpop.f32.mrf.mxu0
  %v1245 = vadd.f32 0.0, %v1244
  %v1246 = vpop.f32.mrf.mxu0
  %1247 = vmatprep.mubr.bf16.mxu0 %v1142
  %1248 = vmatmul.mubr.bf16.gmra.mxu0 %v1141
  %v1249 = vpop.f32.mrf.mxu0
  %v1250 = vadd.f32 0.0, %v1249
  %v1251 = vpop.f32.mrf.mxu0
  %v1252 = vpop.f32.mrf.mxu0
  %v1253 = vadd.f32 0.0, %v1252
  %v1254 = vpop.f32.mrf.mxu0
  %1255 = vmatprep.mubr.bf16.mxu0 %v1146
  %1256 = vmatmul.mubr.bf16.gmra.mxu0 %v1145
  %v1257 = vpop.f32.mrf.mxu0
  %v1258 = vadd.f32 0.0, %v1257
  %v1259 = vpop.f32.mrf.mxu0
  %v1260 = vpop.f32.mrf.mxu0
  %v1261 = vadd.f32 0.0, %v1260
  %v1262 = vpop.f32.mrf.mxu0
  %1263 = vmatprep.mubr.bf16.mxu0 %v1150
  %1264 = vmatmul.mubr.bf16.gmra.mxu0 %v1149
  %v1265 = vpop.f32.mrf.mxu0
  %v1266 = vadd.f32 0.0, %v1265
  %v1267 = vpop.f32.mrf.mxu0
  %v1268 = vpop.f32.mrf.mxu0
  %v1269 = vadd.f32 0.0, %v1268
  %v1270 = vpop.f32.mrf.mxu0
  %1271 = vmatprep.mubr.bf16.mxu0 %v1154
  %1272 = vmatmul.mubr.bf16.gmra.mxu0 %v1153
  %v1273 = vpop.f32.mrf.mxu0
  %v1274 = vadd.f32 0.0, %v1273
  %v1275 = vpop.f32.mrf.mxu0
  %v1276 = vpop.f32.mrf.mxu0
  %v1277 = vadd.f32 0.0, %v1276
  %v1278 = vpop.f32.mrf.mxu0
  %1279 = vmatprep.mubr.bf16.mxu0 %v1158
  %1280 = vmatmul.mubr.bf16.gmra.mxu0 %v1157
  %v1281 = vpop.f32.mrf.mxu0
  %v1282 = vadd.f32 0.0, %v1281
  %v1283 = vpop.f32.mrf.mxu0
  %v1284 = vpop.f32.mrf.mxu0
  %v1285 = vadd.f32 0.0, %v1284
  %v1286 = vpop.f32.mrf.mxu0
  %1287 = vmatprep.mubr.bf16.mxu0 %v1162
  %1288 = vmatmul.mubr.bf16.gmra.mxu0 %v1161
  %v1289 = vpop.f32.mrf.mxu0
  %v1290 = vadd.f32 0.0, %v1289
  %v1291 = vpop.f32.mrf.mxu0
  %v1292 = vpop.f32.mrf.mxu0
  %v1293 = vpop.f32.mrf.mxu0
  %1294 = vdwg.mxu0
  %1295 = vmatprep.subr.bf16.mxu0 0
  %1296 = vmatpush1.bf16.msra.mxu0 %v355
  %1297 = vmatprep.subr.bf16.mxu0 0
  %1298 = vmatpush1.bf16.msra.mxu0 %v354
  %1299 = vmatprep.subr.bf16.mxu0 0
  %1300 = vmatpush1.bf16.msra.mxu0 %v353
  %1301 = vmatprep.subr.bf16.mxu0 0
  %1302 = vmatpush1.bf16.msra.mxu0 %v352
  %1303 = vmatprep.subr.bf16.mxu0 0
  %1304 = vmatpush1.bf16.msra.mxu0 %v351
  %1305 = vmatprep.subr.bf16.mxu0 0
  %1306 = vmatpush1.bf16.msra.mxu0 %v350
  %1307 = vmatprep.subr.bf16.mxu0 0
  %1308 = vmatpush1.bf16.msra.mxu0 %v349
  %1309 = vmatprep.subr.bf16.mxu0 0
  %1310 = vmatpush1.bf16.msra.mxu0 %v348
  %1311 = vmatprep.subr.bf16.mxu0 0
  %1312 = vmatpush2.bf16.msra.mxu0 0
  %1313 = vmatprep.subr.bf16.mxu0 0
  %1314 = vmatpush2.bf16.msra.mxu0 0
  %1315 = vmatprep.subr.bf16.mxu0 0
  %1316 = vmatpush2.bf16.msra.mxu0 0
  %1317 = vmatprep.subr.bf16.mxu0 0
  %1318 = vmatpush2.bf16.msra.mxu0 0
  %1319 = vmatprep.subr.bf16.mxu0 0
  %1320 = vmatpush2.bf16.msra.mxu0 0
  %1321 = vmatprep.subr.bf16.mxu0 0
  %1322 = vmatpush2.bf16.msra.mxu0 0
  %1323 = vmatprep.subr.bf16.mxu0 0
  %1324 = vmatpush2.bf16.msra.mxu0 0
  %1325 = vmatprep.subr.bf16.mxu0 0
  %1326 = vmatpush2.bf16.msra.mxu0 %v356
  %1327 = vmatprep.mubr.bf16.mxu0 %v1187
  %1328 = vmatmul.mubr.bf16.gmra.mxu0 %v1139
  %v1329 = vpop.f32.mrf.mxu0
  %v1330 = vadd.f32 %v1242, %v1329
  %v1331 = vpop.f32.mrf.mxu0
  %v1332 = vpop.f32.mrf.mxu0
  %v1333 = vadd.f32 %v1245, %v1332
  %v1334 = vpop.f32.mrf.mxu0
  %1335 = vmatprep.mubr.bf16.mxu0 %v1190
  %1336 = vmatmul.mubr.bf16.gmra.mxu0 %v1143
  %v1337 = vpop.f32.mrf.mxu0
  %v1338 = vadd.f32 %v1250, %v1337
  %v1339 = vpop.f32.mrf.mxu0
  %v1340 = vpop.f32.mrf.mxu0
  %v1341 = vadd.f32 %v1253, %v1340
  %v1342 = vpop.f32.mrf.mxu0
  %1343 = vmatprep.mubr.bf16.mxu0 %v1193
  %1344 = vmatmul.mubr.bf16.gmra.mxu0 %v1147
  %v1345 = vpop.f32.mrf.mxu0
  %v1346 = vadd.f32 %v1258, %v1345
  %v1347 = vpop.f32.mrf.mxu0
  %v1348 = vpop.f32.mrf.mxu0
  %v1349 = vadd.f32 %v1261, %v1348
  %v1350 = vpop.f32.mrf.mxu0
  %1351 = vmatprep.mubr.bf16.mxu0 %v1196
  %1352 = vmatmul.mubr.bf16.gmra.mxu0 %v1151
  %v1353 = vpop.f32.mrf.mxu0
  %v1354 = vadd.f32 %v1266, %v1353
  %v1355 = vpop.f32.mrf.mxu0
  %v1356 = vpop.f32.mrf.mxu0
  %v1357 = vadd.f32 %v1269, %v1356
  %v1358 = vpop.f32.mrf.mxu0
  %1359 = vmatprep.mubr.bf16.mxu0 %v1199
  %1360 = vmatmul.mubr.bf16.gmra.mxu0 %v1155
  %v1361 = vpop.f32.mrf.mxu0
  %v1362 = vadd.f32 %v1274, %v1361
  %v1363 = vpop.f32.mrf.mxu0
  %v1364 = vpop.f32.mrf.mxu0
  %v1365 = vadd.f32 %v1277, %v1364
  %v1366 = vpop.f32.mrf.mxu0
  %1367 = vmatprep.mubr.bf16.mxu0 %v1202
  %1368 = vmatmul.mubr.bf16.gmra.mxu0 %v1159
  %v1369 = vpop.f32.mrf.mxu0
  %v1370 = vadd.f32 %v1282, %v1369
  %v1371 = vpop.f32.mrf.mxu0
  %v1372 = vpop.f32.mrf.mxu0
  %v1373 = vadd.f32 %v1285, %v1372
  %v1374 = vpop.f32.mrf.mxu0
  %1375 = vmatprep.mubr.bf16.mxu0 %v1205
  %1376 = vmatmul.mubr.bf16.gmra.mxu0 %v1163
  %v1377 = vpop.f32.mrf.mxu0
  %v1378 = vadd.f32 %v1290, %v1377
  %v1379 = vpop.f32.mrf.mxu0
  %v1380 = vpop.f32.mrf.mxu0
  %v1381 = vpop.f32.mrf.mxu0
  %1382 = vdwg.mxu0
  %v1383 = vmul.f32 %v1330, %v584
  %v1384 = vmul.f32 %v1333, %v584
  %v1385 = vmul.f32 %v1338, %v584
  %v1386 = vmul.f32 %v1341, %v584
  %v1387 = vmul.f32 %v1346, %v584
  %v1388 = vmul.f32 %v1349, %v584
  %v1389 = vmul.f32 %v1354, %v584
  %v1390 = vmul.f32 %v1357, %v584
  %v1391 = vmul.f32 %v1362, %v584
  %v1392 = vmul.f32 %v1365, %v584
  %v1393 = vmul.f32 %v1370, %v584
  %v1394 = vmul.f32 %v1373, %v584
  %v1395 = vmul.f32 %v1378, %v584
  %v1396 = vadd.f32 %v1383, %v603
  %v1397 = vadd.f32 %v1384, %v603
  %v1398 = vadd.f32 %v1385, %v603
  %v1399 = vadd.f32 %v1386, %v603
  %v1400 = vadd.f32 %v1387, %v603
  %v1401 = vadd.f32 %v1388, %v603
  %v1402 = vadd.f32 %v1389, %v603
  %v1403 = vadd.f32 %v1390, %v603
  %v1404 = vadd.f32 %v1391, %v603
  %v1405 = vadd.f32 %v1392, %v603
  %v1406 = vadd.f32 %v1393, %v603
  %v1407 = vadd.f32 %v1394, %v603
  %v1408 = vadd.f32 %v1395, %v603
  %v1409 = vmax.f32 %v1396, 0.0
  %v1410 = vmax.f32 %v1397, 0.0
  %v1411 = vmax.f32 %v1398, 0.0
  %v1412 = vmax.f32 %v1399, 0.0
  %v1413 = vmax.f32 %v1400, 0.0
  %v1414 = vmax.f32 %v1401, 0.0
  %v1415 = vmax.f32 %v1402, 0.0
  %v1416 = vmax.f32 %v1403, 0.0
  %v1417 = vmax.f32 %v1404, 0.0
  %v1418 = vmax.f32 %v1405, 0.0
  %v1419 = vmax.f32 %v1406, 0.0
  %v1420 = vmax.f32 %v1407, 0.0
  %v1421 = vmax.f32 %v1408, 0.0
  %v1422 = vmax.f32 %v1020, %v1409
  %v1423 = vmax.f32 %v1021, %v1410
  %v1424 = vmax.f32 %v1022, %v1411
  %v1425 = vmax.f32 %v1023, %v1412
  %v1426 = vmax.f32 %v1024, %v1413
  %v1427 = vmax.f32 %v1025, %v1414
  %v1428 = vmax.f32 %v1026, %v1415
  %v1429 = vmax.f32 %v1027, %v1416
  %v1430 = vmax.f32 %v1028, %v1417
  %v1431 = vmax.f32 %v1029, %v1418
  %v1432 = vmax.f32 %v1030, %v1419
  %v1433 = vmax.f32 %v1031, %v1420
  %v1434 = vmax.f32 %v1032, %v1421
  %v1435 = vld [vmem:[%s3] sm:$0xff]
  %v1436 = vld [vmem:[%s3 + $0x8] sm:$0xff]
  %v1437 = vld [vmem:[%s3 + $0x10] sm:$0xff]
  %v1438 = vld [vmem:[%s3 + $0x18] sm:$0xff]
  %v1439 = vld [vmem:[%s3 + $0x20] sm:$0xff]
  %v1440 = vld [vmem:[%s3 + $0x28] sm:$0xff]
  %v1441 = vld [vmem:[%s3 + $0x30] sm:$0xff]
  %v1442 = vld [vmem:[%s3 + $0x38] sm:$0xff]
  %v1443 = vld [vmem:[%s3 + $0x40] sm:$0xff]
  %v1444 = vld [vmem:[%s3 + $0x48] sm:$0xff]
  %v1445 = vld [vmem:[%s3 + $0x50] sm:$0xff]
  %v1446 = vld [vmem:[%s3 + $0x58] sm:$0xff]
  %v1447 = vld [vmem:[%s3 + $0x60] sm:$0xff]
  %v1448 = vld [vmem:[%s3 + $0x68] sm:$0xff]
  %v1449 = vld [vmem:[%s3 + $0x70] sm:$0xff]
  %v1450 = vld [vmem:[%s3 + $0x78] sm:$0xff]
  %v1451 = vld [vmem:[%s3 + $0x80] sm:$0xff]
  %v1452 = vld [vmem:[%s3 + $0x88] sm:$0xff]
  %v1453 = vld [vmem:[%s3 + $0x90] sm:$0xff]
  %v1454 = vld [vmem:[%s3 + $0x98] sm:$0xff]
  %v1455 = vld [vmem:[%s3 + $0xa0] sm:$0xff]
  %v1456 = vld [vmem:[%s3 + $0xa8] sm:$0xff]
  %v1457 = vld [vmem:[%s3 + $0xb0] sm:$0xff]
  %v1458 = vld [vmem:[%s3 + $0xb8] sm:$0xff]
  %v1459 = vld [vmem:[%s3 + $0xc0] sm:$0x11]
  %v1460 = vld [vmem:[%s3 + $0xc8] sm:$0x11]
  %v1487 = vunpack.c.l.b16 %v1435
  %v1488 = vunpack.c.h.b16 %v1435
  %v1489 = vunpack.c.l.b16 %v1436
  %v1490 = vunpack.c.h.b16 %v1436
  %v1491 = vunpack.c.l.b16 %v1437
  %v1492 = vunpack.c.h.b16 %v1437
  %v1493 = vunpack.c.l.b16 %v1438
  %v1494 = vunpack.c.h.b16 %v1438
  %v1495 = vunpack.c.l.b16 %v1439
  %v1496 = vunpack.c.h.b16 %v1439
  %v1497 = vunpack.c.l.b16 %v1440
  %v1498 = vunpack.c.h.b16 %v1440
  %v1499 = vunpack.c.l.b16 %v1441
  %v1500 = vunpack.c.h.b16 %v1441
  %v1501 = vunpack.c.l.b16 %v1442
  %v1502 = vunpack.c.h.b16 %v1442
  %v1503 = vunpack.c.l.b16 %v1443
  %v1504 = vunpack.c.h.b16 %v1443
  %v1505 = vunpack.c.l.b16 %v1444
  %v1506 = vunpack.c.h.b16 %v1444
  %v1507 = vunpack.c.l.b16 %v1445
  %v1508 = vunpack.c.h.b16 %v1445
  %v1509 = vunpack.c.l.b16 %v1446
  %v1510 = vunpack.c.h.b16 %v1446
  %v1511 = vunpack.c.l.b16 %v1447
  %v1512 = vunpack.c.h.b16 %v1447
  %v1513 = vunpack.c.l.b16 %v1448
  %v1514 = vunpack.c.h.b16 %v1448
  %v1515 = vunpack.c.l.b16 %v1449
  %v1516 = vunpack.c.h.b16 %v1449
  %v1517 = vunpack.c.l.b16 %v1450
  %v1518 = vunpack.c.h.b16 %v1450
  %v1519 = vunpack.c.l.b16 %v1451
  %v1520 = vunpack.c.h.b16 %v1451
  %v1521 = vunpack.c.l.b16 %v1452
  %v1522 = vunpack.c.h.b16 %v1452
  %v1523 = vunpack.c.l.b16 %v1453
  %v1524 = vunpack.c.h.b16 %v1453
  %v1525 = vunpack.c.l.b16 %v1454
  %v1526 = vunpack.c.h.b16 %v1454
  %v1527 = vunpack.c.l.b16 %v1455
  %v1528 = vunpack.c.h.b16 %v1455
  %v1529 = vunpack.c.l.b16 %v1456
  %v1530 = vunpack.c.h.b16 %v1456
  %v1531 = vunpack.c.l.b16 %v1457
  %v1532 = vunpack.c.h.b16 %v1457
  %v1533 = vunpack.c.l.b16 %v1458
  %v1534 = vunpack.c.h.b16 %v1458
  %v1535 = vunpack.c.l.b16 %v1459
  %v1536 = vunpack.c.h.b16 %v1459
  %v1537 = vunpack.c.l.b16 %v1460
  %v1538 = vunpack.c.h.b16 %v1460
  %v1539 = vpack.c.b16 %v1491, %v1487
  %v1540 = vpack.c.b16 %v1492, %v1488
  %v1541 = vpack.c.b16 %v1493, %v1489
  %v1542 = vpack.c.b16 %v1494, %v1490
  %v1543 = vpack.c.b16 %v1499, %v1495
  %v1544 = vpack.c.b16 %v1500, %v1496
  %v1545 = vpack.c.b16 %v1501, %v1497
  %v1546 = vpack.c.b16 %v1502, %v1498
  %v1547 = vpack.c.b16 %v1507, %v1503
  %v1548 = vpack.c.b16 %v1508, %v1504
  %v1549 = vpack.c.b16 %v1509, %v1505
  %v1550 = vpack.c.b16 %v1510, %v1506
  %v1551 = vpack.c.b16 %v1515, %v1511
  %v1552 = vpack.c.b16 %v1516, %v1512
  %v1553 = vpack.c.b16 %v1517, %v1513
  %v1554 = vpack.c.b16 %v1518, %v1514
  %v1555 = vpack.c.b16 %v1523, %v1519
  %v1556 = vpack.c.b16 %v1524, %v1520
  %v1557 = vpack.c.b16 %v1525, %v1521
  %v1558 = vpack.c.b16 %v1526, %v1522
  %v1559 = vpack.c.b16 %v1531, %v1527
  %v1560 = vpack.c.b16 %v1532, %v1528
  %v1561 = vpack.c.b16 %v1533, %v1529
  %v1562 = vpack.c.b16 %v1534, %v1530
  %v1563 = vpack.c.b16 %v1535, %v1535
  %v1564 = vpack.c.b16 %v1536, %v1536
  %v1565 = vpack.c.b16 %v1537, %v1537
  %v1566 = vpack.c.b16 %v1538, %v1538
  %v1589 = vsel %vm382, %v1542, 0
  %v1592 = vsel %vm382, %v1546, 0
  %v1595 = vsel %vm382, %v1550, 0
  %v1598 = vsel %vm382, %v1554, 0
  %v1601 = vsel %vm382, %v1558, 0
  %v1604 = vsel %vm382, %v1562, 0
  %v1607 = vsel %vm382, %v1566, 0
  %1609 = vmatprep.subr.bf16.mxu0 0
  %1610 = vmatpush1.bf16.msra.mxu0 %v339
  %1611 = vmatprep.subr.bf16.mxu0 0
  %1612 = vmatpush1.bf16.msra.mxu0 %v338
  %1613 = vmatprep.subr.bf16.mxu0 0
  %1614 = vmatpush1.bf16.msra.mxu0 %v337
  %1615 = vmatprep.subr.bf16.mxu0 0
  %1616 = vmatpush1.bf16.msra.mxu0 %v336
  %1617 = vmatprep.subr.bf16.mxu0 0
  %1618 = vmatpush1.bf16.msra.mxu0 %v335
  %1619 = vmatprep.subr.bf16.mxu0 0
  %1620 = vmatpush1.bf16.msra.mxu0 %v334
  %1621 = vmatprep.subr.bf16.mxu0 0
  %1622 = vmatpush1.bf16.msra.mxu0 %v333
  %1623 = vmatprep.subr.bf16.mxu0 0
  %1624 = vmatpush1.bf16.msra.mxu0 %v332
  %1625 = vmatprep.subr.bf16.mxu0 0
  %1626 = vmatpush2.bf16.msra.mxu0 %v347
  %1627 = vmatprep.subr.bf16.mxu0 0
  %1628 = vmatpush2.bf16.msra.mxu0 %v346
  %1629 = vmatprep.subr.bf16.mxu0 0
  %1630 = vmatpush2.bf16.msra.mxu0 %v345
  %1631 = vmatprep.subr.bf16.mxu0 0
  %1632 = vmatpush2.bf16.msra.mxu0 %v344
  %1633 = vmatprep.subr.bf16.mxu0 0
  %1634 = vmatpush2.bf16.msra.mxu0 %v343
  %1635 = vmatprep.subr.bf16.mxu0 0
  %1636 = vmatpush2.bf16.msra.mxu0 %v342
  %1637 = vmatprep.subr.bf16.mxu0 0
  %1638 = vmatpush2.bf16.msra.mxu0 %v341
  %1639 = vmatprep.subr.bf16.mxu0 0
  %1640 = vmatpush2.bf16.msra.mxu0 %v340
  %1641 = vmatprep.mubr.bf16.mxu0 %v1540
  %1642 = vmatmul.mubr.bf16.gmra.mxu0 %v1539
  %v1643 = vpop.f32.mrf.mxu0
  %v1644 = vadd.f32 0.0, %v1643
  %v1645 = vpop.f32.mrf.mxu0
  %v1646 = vpop.f32.mrf.mxu0
  %v1647 = vadd.f32 0.0, %v1646
  %v1648 = vpop.f32.mrf.mxu0
  %1649 = vmatprep.mubr.bf16.mxu0 %v1544
  %1650 = vmatmul.mubr.bf16.gmra.mxu0 %v1543
  %v1651 = vpop.f32.mrf.mxu0
  %v1652 = vadd.f32 0.0, %v1651
  %v1653 = vpop.f32.mrf.mxu0
  %v1654 = vpop.f32.mrf.mxu0
  %v1655 = vadd.f32 0.0, %v1654
  %v1656 = vpop.f32.mrf.mxu0
  %1657 = vmatprep.mubr.bf16.mxu0 %v1548
  %1658 = vmatmul.mubr.bf16.gmra.mxu0 %v1547
  %v1659 = vpop.f32.mrf.mxu0
  %v1660 = vadd.f32 0.0, %v1659
  %v1661 = vpop.f32.mrf.mxu0
  %v1662 = vpop.f32.mrf.mxu0
  %v1663 = vadd.f32 0.0, %v1662
  %v1664 = vpop.f32.mrf.mxu0
  %1665 = vmatprep.mubr.bf16.mxu0 %v1552
  %1666 = vmatmul.mubr.bf16.gmra.mxu0 %v1551
  %v1667 = vpop.f32.mrf.mxu0
  %v1668 = vadd.f32 0.0, %v1667
  %v1669 = vpop.f32.mrf.mxu0
  %v1670 = vpop.f32.mrf.mxu0
  %v1671 = vadd.f32 0.0, %v1670
  %v1672 = vpop.f32.mrf.mxu0
  %1673 = vmatprep.mubr.bf16.mxu0 %v1556
  %1674 = vmatmul.mubr.bf16.gmra.mxu0 %v1555
  %v1675 = vpop.f32.mrf.mxu0
  %v1676 = vadd.f32 0.0, %v1675
  %v1677 = vpop.f32.mrf.mxu0
  %v1678 = vpop.f32.mrf.mxu0
  %v1679 = vadd.f32 0.0, %v1678
  %v1680 = vpop.f32.mrf.mxu0
  %1681 = vmatprep.mubr.bf16.mxu0 %v1560
  %1682 = vmatmul.mubr.bf16.gmra.mxu0 %v1559
  %v1683 = vpop.f32.mrf.mxu0
  %v1684 = vadd.f32 0.0, %v1683
  %v1685 = vpop.f32.mrf.mxu0
  %v1686 = vpop.f32.mrf.mxu0
  %v1687 = vadd.f32 0.0, %v1686
  %v1688 = vpop.f32.mrf.mxu0
  %1689 = vmatprep.mubr.bf16.mxu0 %v1564
  %1690 = vmatmul.mubr.bf16.gmra.mxu0 %v1563
  %v1691 = vpop.f32.mrf.mxu0
  %v1692 = vadd.f32 0.0, %v1691
  %v1693 = vpop.f32.mrf.mxu0
  %v1694 = vpop.f32.mrf.mxu0
  %v1695 = vpop.f32.mrf.mxu0
  %1696 = vdwg.mxu0
  %1697 = vmatprep.subr.bf16.mxu0 0
  %1698 = vmatpush1.bf16.msra.mxu0 %v355
  %1699 = vmatprep.subr.bf16.mxu0 0
  %1700 = vmatpush1.bf16.msra.mxu0 %v354
  %1701 = vmatprep.subr.bf16.mxu0 0
  %1702 = vmatpush1.bf16.msra.mxu0 %v353
  %1703 = vmatprep.subr.bf16.mxu0 0
  %1704 = vmatpush1.bf16.msra.mxu0 %v352
  %1705 = vmatprep.subr.bf16.mxu0 0
  %1706 = vmatpush1.bf16.msra.mxu0 %v351
  %1707 = vmatprep.subr.bf16.mxu0 0
  %1708 = vmatpush1.bf16.msra.mxu0 %v350
  %1709 = vmatprep.subr.bf16.mxu0 0
  %1710 = vmatpush1.bf16.msra.mxu0 %v349
  %1711 = vmatprep.subr.bf16.mxu0 0
  %1712 = vmatpush1.bf16.msra.mxu0 %v348
  %1713 = vmatprep.subr.bf16.mxu0 0
  %1714 = vmatpush2.bf16.msra.mxu0 0
  %1715 = vmatprep.subr.bf16.mxu0 0
  %1716 = vmatpush2.bf16.msra.mxu0 0
  %1717 = vmatprep.subr.bf16.mxu0 0
  %1718 = vmatpush2.bf16.msra.mxu0 0
  %1719 = vmatprep.subr.bf16.mxu0 0
  %1720 = vmatpush2.bf16.msra.mxu0 0
  %1721 = vmatprep.subr.bf16.mxu0 0
  %1722 = vmatpush2.bf16.msra.mxu0 0
  %1723 = vmatprep.subr.bf16.mxu0 0
  %1724 = vmatpush2.bf16.msra.mxu0 0
  %1725 = vmatprep.subr.bf16.mxu0 0
  %1726 = vmatpush2.bf16.msra.mxu0 0
  %1727 = vmatprep.subr.bf16.mxu0 0
  %1728 = vmatpush2.bf16.msra.mxu0 %v356
  %1729 = vmatprep.mubr.bf16.mxu0 %v1589
  %1730 = vmatmul.mubr.bf16.gmra.mxu0 %v1541
  %v1731 = vpop.f32.mrf.mxu0
  %v1732 = vadd.f32 %v1644, %v1731
  %v1733 = vpop.f32.mrf.mxu0
  %v1734 = vpop.f32.mrf.mxu0
  %v1735 = vadd.f32 %v1647, %v1734
  %v1736 = vpop.f32.mrf.mxu0
  %1737 = vmatprep.mubr.bf16.mxu0 %v1592
  %1738 = vmatmul.mubr.bf16.gmra.mxu0 %v1545
  %v1739 = vpop.f32.mrf.mxu0
  %v1740 = vadd.f32 %v1652, %v1739
  %v1741 = vpop.f32.mrf.mxu0
  %v1742 = vpop.f32.mrf.mxu0
  %v1743 = vadd.f32 %v1655, %v1742
  %v1744 = vpop.f32.mrf.mxu0
  %1745 = vmatprep.mubr.bf16.mxu0 %v1595
  %1746 = vmatmul.mubr.bf16.gmra.mxu0 %v1549
  %v1747 = vpop.f32.mrf.mxu0
  %v1748 = vadd.f32 %v1660, %v1747
  %v1749 = vpop.f32.mrf.mxu0
  %v1750 = vpop.f32.mrf.mxu0
  %v1751 = vadd.f32 %v1663, %v1750
  %v1752 = vpop.f32.mrf.mxu0
  %1753 = vmatprep.mubr.bf16.mxu0 %v1598
  %1754 = vmatmul.mubr.bf16.gmra.mxu0 %v1553
  %v1755 = vpop.f32.mrf.mxu0
  %v1756 = vadd.f32 %v1668, %v1755
  %v1757 = vpop.f32.mrf.mxu0
  %v1758 = vpop.f32.mrf.mxu0
  %v1759 = vadd.f32 %v1671, %v1758
  %v1760 = vpop.f32.mrf.mxu0
  %1761 = vmatprep.mubr.bf16.mxu0 %v1601
  %1762 = vmatmul.mubr.bf16.gmra.mxu0 %v1557
  %v1763 = vpop.f32.mrf.mxu0
  %v1764 = vadd.f32 %v1676, %v1763
  %v1765 = vpop.f32.mrf.mxu0
  %v1766 = vpop.f32.mrf.mxu0
  %v1767 = vadd.f32 %v1679, %v1766
  %v1768 = vpop.f32.mrf.mxu0
  %1769 = vmatprep.mubr.bf16.mxu0 %v1604
  %1770 = vmatmul.mubr.bf16.gmra.mxu0 %v1561
  %v1771 = vpop.f32.mrf.mxu0
  %v1772 = vadd.f32 %v1684, %v1771
  %v1773 = vpop.f32.mrf.mxu0
  %v1774 = vpop.f32.mrf.mxu0
  %v1775 = vadd.f32 %v1687, %v1774
  %v1776 = vpop.f32.mrf.mxu0
  %1777 = vmatprep.mubr.bf16.mxu0 %v1607
  %1778 = vmatmul.mubr.bf16.gmra.mxu0 %v1565
  %v1779 = vpop.f32.mrf.mxu0
  %v1780 = vadd.f32 %v1692, %v1779
  %v1781 = vpop.f32.mrf.mxu0
  %v1782 = vpop.f32.mrf.mxu0
  %v1783 = vpop.f32.mrf.mxu0
  %1784 = vdwg.mxu0
  %v1785 = vmul.f32 %v1732, %v584
  %v1786 = vmul.f32 %v1735, %v584
  %v1787 = vmul.f32 %v1740, %v584
  %v1788 = vmul.f32 %v1743, %v584
  %v1789 = vmul.f32 %v1748, %v584
  %v1790 = vmul.f32 %v1751, %v584
  %v1791 = vmul.f32 %v1756, %v584
  %v1792 = vmul.f32 %v1759, %v584
  %v1793 = vmul.f32 %v1764, %v584
  %v1794 = vmul.f32 %v1767, %v584
  %v1795 = vmul.f32 %v1772, %v584
  %v1796 = vmul.f32 %v1775, %v584
  %v1797 = vmul.f32 %v1780, %v584
  %v1798 = vadd.f32 %v1785, %v603
  %v1799 = vadd.f32 %v1786, %v603
  %v1800 = vadd.f32 %v1787, %v603
  %v1801 = vadd.f32 %v1788, %v603
  %v1802 = vadd.f32 %v1789, %v603
  %v1803 = vadd.f32 %v1790, %v603
  %v1804 = vadd.f32 %v1791, %v603
  %v1805 = vadd.f32 %v1792, %v603
  %v1806 = vadd.f32 %v1793, %v603
  %v1807 = vadd.f32 %v1794, %v603
  %v1808 = vadd.f32 %v1795, %v603
  %v1809 = vadd.f32 %v1796, %v603
  %v1810 = vadd.f32 %v1797, %v603
  %v1811 = vmax.f32 %v1798, 0.0
  %v1812 = vmax.f32 %v1799, 0.0
  %v1813 = vmax.f32 %v1800, 0.0
  %v1814 = vmax.f32 %v1801, 0.0
  %v1815 = vmax.f32 %v1802, 0.0
  %v1816 = vmax.f32 %v1803, 0.0
  %v1817 = vmax.f32 %v1804, 0.0
  %v1818 = vmax.f32 %v1805, 0.0
  %v1819 = vmax.f32 %v1806, 0.0
  %v1820 = vmax.f32 %v1807, 0.0
  %v1821 = vmax.f32 %v1808, 0.0
  %v1822 = vmax.f32 %v1809, 0.0
  %v1823 = vmax.f32 %v1810, 0.0
  %v1824 = vmax.f32 %v1422, %v1811
  %v1825 = vmax.f32 %v1423, %v1812
  %v1826 = vmax.f32 %v1424, %v1813
  %v1827 = vmax.f32 %v1425, %v1814
  %v1828 = vmax.f32 %v1426, %v1815
  %v1829 = vmax.f32 %v1427, %v1816
  %v1830 = vmax.f32 %v1428, %v1817
  %v1831 = vmax.f32 %v1429, %v1818
  %v1832 = vmax.f32 %v1430, %v1819
  %v1833 = vmax.f32 %v1431, %v1820
  %v1834 = vmax.f32 %v1432, %v1821
  %v1835 = vmax.f32 %v1433, %v1822
  %v1836 = vmax.f32 %v1434, %v1823
  %vm1837 = vcmask 261120
  %1838 = vst.msk [vmem:[%s7] sm:$0xff] %vm1837, %v1824
  %1839 = vst.msk [vmem:[%s7 + $0x8] sm:$0xff] %vm1837, %v1825
  %1840 = vst.msk [vmem:[%s7 + $0x10] sm:$0xff] %vm1837, %v1826
  %1841 = vst.msk [vmem:[%s7 + $0x18] sm:$0xff] %vm1837, %v1827
  %1842 = vst.msk [vmem:[%s7 + $0x20] sm:$0xff] %vm1837, %v1828
  %1843 = vst.msk [vmem:[%s7 + $0x28] sm:$0xff] %vm1837, %v1829
  %1844 = vst.msk [vmem:[%s7 + $0x30] sm:$0xff] %vm1837, %v1830
  %1845 = vst.msk [vmem:[%s7 + $0x38] sm:$0xff] %vm1837, %v1831
  %1846 = vst.msk [vmem:[%s7 + $0x40] sm:$0xff] %vm1837, %v1832
  %1847 = vst.msk [vmem:[%s7 + $0x48] sm:$0xff] %vm1837, %v1833
  %1848 = vst.msk [vmem:[%s7 + $0x50] sm:$0xff] %vm1837, %v1834
  %1849 = vst.msk [vmem:[%s7 + $0x58] sm:$0xff] %vm1837, %v1835
  %vm1850 = vcmask 254976
  %1851 = vst.msk [vmem:[%s7 + $0x60] sm:$0x3] %vm1850, %v1836
  // Predicated region
  $region30: #{cnn_fashion_mnist_forward.4} parent=0 // pred_check
    _
  $region31: #{cnn_fashion_mnist_forward.4} parent=0 // pred_check_branch
    %1853 = sbr.rel (0) target = $region33
  $region32: #{cnn_fashion_mnist_forward.4} parent=0 // pred_region
    _
  $region33: #{cnn_fashion_mnist_forward.4} parent=0 // pred_fallthru
    _
  // Predicated region
  $region34: #{cnn_fashion_mnist_forward.4} parent=0 // pred_check
    _
  $region35: #{cnn_fashion_mnist_forward.4} parent=0 // pred_check_branch
    %1855 = sbr.rel (0) target = $region37
  $region36: #{cnn_fashion_mnist_forward.4} parent=0 // pred_region
    _
  $region37: #{cnn_fashion_mnist_forward.4} parent=0 // pred_fallthru
    _

// kernel: cnn_fashion_mnist_forward.5
$region0: #{cnn_fashion_mnist_forward.5}
  #allocation0 [shape = 'u32[]', space=smem, size = 0x4, offset = 0x4, fixed_abs, tag = 'smem constant byte address 0x4 - core index']
  #allocation1 [shape = 'u32[144,128]{1,0:T(1,128)}', space=vmem, size = 0x12000, scoped, tag = 'internal scratch']
  %s0 = inlined_call_operand.vmem [shape: bf16[2,1568], index: 0, kind: input, shape index: {}]
  %s1 = inlined_call_operand.vmem [shape: bf16[1568,10], index: 1, kind: input, shape index: {}]
  %s2 = inlined_call_operand.vmem [shape: f32[1,10], index: 2, kind: input, shape index: {}]
  %s3 = inlined_call_operand.hbm [shape: f32[2,10], index: 3, kind: output, shape index: {}]
  %s4 = sld [smem:[#allocation0]]
  $region22: #{cnn_fashion_mnist_forward.5} parent=0
    _
  %s6 = ssub.s32 1, %s4
  %s7 = scalar_select 0, %s6, %s4
  $region1: #{cnn_fashion_mnist_forward.5} parent=0
    #allocation2 [shape = 'u8[1024]{0}', space=vmem, size = 0x400, scoped, tag = 'output window, operand 0, single buffered']
    #allocation3 [shape = 's32[1]{0}', space=sflag, size = 0x4, scoped, tag = 'scoped memory for cnn_fashion_mnist_forward.5']
    %8 = vsyncpa [#allocation3], 0
    // Predicated region
    $region2: #{cnn_fashion_mnist_forward.5} parent=1 // pred_check
      _
    $region3: #{cnn_fashion_mnist_forward.5} parent=1 // pred_check_branch
      %10 = sbr.rel (0) target = $region5
    $region4: #{cnn_fashion_mnist_forward.5} parent=1 // pred_region
      _
    $region5: #{cnn_fashion_mnist_forward.5} parent=1 // pred_fallthru
      _
    // Predicated region
    $region6: #{cnn_fashion_mnist_forward.5} parent=1 // pred_check
      _
    $region7: #{cnn_fashion_mnist_forward.5} parent=1 // pred_check_branch
      %12 = sbr.rel (0) target = $region9
    $region8: #{cnn_fashion_mnist_forward.5} parent=1 // pred_region
      _
    $region9: #{cnn_fashion_mnist_forward.5} parent=1 // pred_fallthru
      _
    // Predicated region
    $region10: #{cnn_fashion_mnist_forward.5} parent=1 // pred_check
      _
    $region11: #{cnn_fashion_mnist_forward.5} parent=1 // pred_check_branch
      %14 = sbr.rel (0) target = $region13
    $region12: #{cnn_fashion_mnist_forward.5} parent=1 // pred_region
      _
    $region13: #{cnn_fashion_mnist_forward.5} parent=1 // pred_fallthru
      _
    %v16 = vld [vmem:[%s0] sm:$0xff]
    %v17 = vld [vmem:[%s0 + $0x8] sm:$0x1f]
    %v18 = vld [vmem:[%s1] sm:$0xf]
    %v19 = vld [vmem:[%s1 + $0x4] sm:$0xf]
    %v20 = vld [vmem:[%s1 + $0x8] sm:$0xf]
    %v21 = vld [vmem:[%s1 + $0xc] sm:$0xf]
    %v22 = vld [vmem:[%s1 + $0x10] sm:$0xf]
    %v23 = vld [vmem:[%s1 + $0x14] sm:$0xf]
    %v24 = vld [vmem:[%s1 + $0x18] sm:$0xf]
    %v25 = vld [vmem:[%s1 + $0x1c] sm:$0xf]
    %v26 = vld [vmem:[%s1 + $0x20] sm:$0xf]
    %v27 = vld [vmem:[%s1 + $0x24] sm:$0xf]
    %v28 = vld [vmem:[%s1 + $0x28] sm:$0xf]
    %v29 = vld [vmem:[%s1 + $0x2c] sm:$0xf]
    %v30 = vld [vmem:[%s1 + $0x30] sm:$0xf]
    %v31 = vld [vmem:[%s1 + $0x34] sm:$0xf]
    %v32 = vld [vmem:[%s1 + $0x38] sm:$0xf]
    %v33 = vld [vmem:[%s1 + $0x3c] sm:$0xf]
    %v34 = vld [vmem:[%s1 + $0x40] sm:$0xf]
    %v35 = vld [vmem:[%s1 + $0x44] sm:$0xf]
    %v36 = vld [vmem:[%s1 + $0x48] sm:$0xf]
    %v37 = vld [vmem:[%s1 + $0x4c] sm:$0xf]
    %v38 = vld [vmem:[%s1 + $0x50] sm:$0xf]
    %v39 = vld [vmem:[%s1 + $0x54] sm:$0xf]
    %v40 = vld [vmem:[%s1 + $0x58] sm:$0xf]
    %v41 = vld [vmem:[%s1 + $0x5c] sm:$0xf]
    %v42 = vld [vmem:[%s1 + $0x60] sm:$0xf]
    %v43 = vld [vmem:[%s1 + $0x64] sm:$0xf]
    %v44 = vld [vmem:[%s1 + $0x68] sm:$0xf]
    %v45 = vld [vmem:[%s1 + $0x6c] sm:$0xf]
    %v46 = vld [vmem:[%s1 + $0x70] sm:$0xf]
    %v47 = vld [vmem:[%s1 + $0x74] sm:$0xf]
    %v48 = vld [vmem:[%s1 + $0x78] sm:$0xf]
    %v49 = vld [vmem:[%s1 + $0x7c] sm:$0xf]
    %v50 = vld [vmem:[%s1 + $0x80] sm:$0xf]
    %v51 = vld [vmem:[%s1 + $0x84] sm:$0xf]
    %v52 = vld [vmem:[%s1 + $0x88] sm:$0xf]
    %v53 = vld [vmem:[%s1 + $0x8c] sm:$0xf]
    %v54 = vld [vmem:[%s1 + $0x90] sm:$0xf]
    %v55 = vld [vmem:[%s1 + $0x94] sm:$0xf]
    %v56 = vld [vmem:[%s1 + $0x98] sm:$0xf]
    %v57 = vld [vmem:[%s1 + $0x9c] sm:$0xf]
    %v58 = vld [vmem:[%s1 + $0xa0] sm:$0xf]
    %v59 = vld [vmem:[%s1 + $0xa4] sm:$0xf]
    %v60 = vld [vmem:[%s1 + $0xa8] sm:$0xf]
    %v61 = vld [vmem:[%s1 + $0xac] sm:$0xf]
    %v62 = vld [vmem:[%s1 + $0xb0] sm:$0xf]
    %v63 = vld [vmem:[%s1 + $0xb4] sm:$0xf]
    %v64 = vld [vmem:[%s1 + $0xb8] sm:$0xf]
    %v65 = vld [vmem:[%s1 + $0xbc] sm:$0xf]
    %v66 = vld [vmem:[%s1 + $0xc0] sm:$0xf]
    %v67 = vld [vmem:[%s1 + $0xc4] sm:$0xf]
    %v68 = vld [vmem:[%s1 + $0xc8] sm:$0xf]
    %v69 = vld [vmem:[%s1 + $0xcc] sm:$0xf]
    %v70 = vld [vmem:[%s1 + $0xd0] sm:$0xf]
    %v71 = vld [vmem:[%s1 + $0xd4] sm:$0xf]
    %v72 = vld [vmem:[%s1 + $0xd8] sm:$0xf]
    %v73 = vld [vmem:[%s1 + $0xdc] sm:$0xf]
    %v74 = vld [vmem:[%s1 + $0xe0] sm:$0xf]
    %v75 = vld [vmem:[%s1 + $0xe4] sm:$0xf]
    %v76 = vld [vmem:[%s1 + $0xe8] sm:$0xf]
    %v77 = vld [vmem:[%s1 + $0xec] sm:$0xf]
    %v78 = vld [vmem:[%s1 + $0xf0] sm:$0xf]
    %v79 = vld [vmem:[%s1 + $0xf4] sm:$0xf]
    %v80 = vld [vmem:[%s1 + $0xf8] sm:$0xf]
    %v81 = vld [vmem:[%s1 + $0xfc] sm:$0xf]
    %v82 = vld [vmem:[%s1 + $0x100] sm:$0xf]
    %v83 = vld [vmem:[%s1 + $0x104] sm:$0xf]
    %v84 = vld [vmem:[%s1 + $0x108] sm:$0xf]
    %v85 = vld [vmem:[%s1 + $0x10c] sm:$0xf]
    %v86 = vld [vmem:[%s1 + $0x110] sm:$0xf]
    %v87 = vld [vmem:[%s1 + $0x114] sm:$0xf]
    %v88 = vld [vmem:[%s1 + $0x118] sm:$0xf]
    %v89 = vld [vmem:[%s1 + $0x11c] sm:$0xf]
    %v90 = vld [vmem:[%s1 + $0x120] sm:$0xf]
    %v91 = vld [vmem:[%s1 + $0x124] sm:$0xf]
    %v92 = vld [vmem:[%s1 + $0x128] sm:$0xf]
    %v93 = vld [vmem:[%s1 + $0x12c] sm:$0xf]
    %v94 = vld [vmem:[%s1 + $0x130] sm:$0xf]
    %v95 = vld [vmem:[%s1 + $0x134] sm:$0xf]
    %v96 = vld [vmem:[%s1 + $0x138] sm:$0xf]
    %v97 = vld [vmem:[%s1 + $0x13c] sm:$0xf]
    %v98 = vld [vmem:[%s1 + $0x140] sm:$0xf]
    %v99 = vld [vmem:[%s1 + $0x144] sm:$0xf]
    %v100 = vld [vmem:[%s1 + $0x148] sm:$0xf]
    %v101 = vld [vmem:[%s1 + $0x14c] sm:$0xf]
    %v102 = vld [vmem:[%s1 + $0x150] sm:$0xf]
    %v103 = vld [vmem:[%s1 + $0x154] sm:$0xf]
    %v104 = vld [vmem:[%s1 + $0x158] sm:$0xf]
    %v105 = vld [vmem:[%s1 + $0x15c] sm:$0xf]
    %v106 = vld [vmem:[%s1 + $0x160] sm:$0xf]
    %v107 = vld [vmem:[%s1 + $0x164] sm:$0xf]
    %v108 = vld [vmem:[%s1 + $0x168] sm:$0xf]
    %v109 = vld [vmem:[%s1 + $0x16c] sm:$0xf]
    %v110 = vld [vmem:[%s1 + $0x170] sm:$0xf]
    %v111 = vld [vmem:[%s1 + $0x174] sm:$0xf]
    %v112 = vld [vmem:[%s1 + $0x178] sm:$0xf]
    %v113 = vld [vmem:[%s1 + $0x17c] sm:$0xf]
    %v114 = vld [vmem:[%s1 + $0x180] sm:$0xf]
    %v115 = vld [vmem:[%s1 + $0x184] sm:$0xf]
    %v116 = vld [vmem:[%s1 + $0x188] sm:$0xf]
    %v117 = vld [vmem:[%s1 + $0x18c] sm:$0xf]
    %v118 = vld [vmem:[%s1 + $0x190] sm:$0xf]
    %v119 = vld [vmem:[%s1 + $0x194] sm:$0xf]
    %v120 = vld [vmem:[%s1 + $0x198] sm:$0xf]
    %v121 = vld [vmem:[%s1 + $0x19c] sm:$0xf]
    %v122 = vld [vmem:[%s1 + $0x1a0] sm:$0xf]
    %v123 = vld [vmem:[%s1 + $0x1a4] sm:$0xf]
    %v124 = vld [vmem:[%s1 + $0x1a8] sm:$0xf]
    %v125 = vld [vmem:[%s1 + $0x1ac] sm:$0xf]
    %v126 = vld [vmem:[%s1 + $0x1b0] sm:$0xf]
    %v127 = vld [vmem:[%s1 + $0x1b4] sm:$0xf]
    %v128 = vld [vmem:[%s1 + $0x1b8] sm:$0xf]
    %v129 = vld [vmem:[%s1 + $0x1bc] sm:$0xf]
    %v130 = vld [vmem:[%s1 + $0x1c0] sm:$0xf]
    %v131 = vld [vmem:[%s1 + $0x1c4] sm:$0xf]
    %v132 = vld [vmem:[%s1 + $0x1c8] sm:$0xf]
    %v133 = vld [vmem:[%s1 + $0x1cc] sm:$0xf]
    %v134 = vld [vmem:[%s1 + $0x1d0] sm:$0xf]
    %v135 = vld [vmem:[%s1 + $0x1d4] sm:$0xf]
    %v136 = vld [vmem:[%s1 + $0x1d8] sm:$0xf]
    %v137 = vld [vmem:[%s1 + $0x1dc] sm:$0xf]
    %v138 = vld [vmem:[%s1 + $0x1e0] sm:$0xf]
    %v139 = vld [vmem:[%s1 + $0x1e4] sm:$0xf]
    %v140 = vld [vmem:[%s1 + $0x1e8] sm:$0xf]
    %v141 = vld [vmem:[%s1 + $0x1ec] sm:$0xf]
    %v142 = vld [vmem:[%s1 + $0x1f0] sm:$0xf]
    %v143 = vld [vmem:[%s1 + $0x1f4] sm:$0xf]
    %v144 = vld [vmem:[%s1 + $0x1f8] sm:$0xf]
    %v145 = vld [vmem:[%s1 + $0x1fc] sm:$0xf]
    %v146 = vld [vmem:[%s1 + $0x200] sm:$0xf]
    %v147 = vld [vmem:[%s1 + $0x204] sm:$0xf]
    %v148 = vld [vmem:[%s1 + $0x208] sm:$0xf]
    %v149 = vld [vmem:[%s1 + $0x20c] sm:$0xf]
    %v150 = vld [vmem:[%s1 + $0x210] sm:$0xf]
    %v151 = vld [vmem:[%s1 + $0x214] sm:$0xf]
    %v152 = vld [vmem:[%s1 + $0x218] sm:$0xf]
    %v153 = vld [vmem:[%s1 + $0x21c] sm:$0xf]
    %v154 = vld [vmem:[%s1 + $0x220] sm:$0xf]
    %v155 = vld [vmem:[%s1 + $0x224] sm:$0xf]
    %v156 = vld [vmem:[%s1 + $0x228] sm:$0xf]
    %v157 = vld [vmem:[%s1 + $0x22c] sm:$0xf]
    %v158 = vld [vmem:[%s1 + $0x230] sm:$0xf]
    %v159 = vld [vmem:[%s1 + $0x234] sm:$0xf]
    %v160 = vld [vmem:[%s1 + $0x238] sm:$0xf]
    %v161 = vld [vmem:[%s1 + $0x23c] sm:$0xf]
    %v162 = vld [vmem:[%s1 + $0x240] sm:$0xf]
    %v163 = vld [vmem:[%s1 + $0x244] sm:$0xf]
    %v164 = vld [vmem:[%s1 + $0x248] sm:$0xf]
    %v165 = vld [vmem:[%s1 + $0x24c] sm:$0xf]
    %v166 = vld [vmem:[%s1 + $0x250] sm:$0xf]
    %v167 = vld [vmem:[%s1 + $0x254] sm:$0xf]
    %v168 = vld [vmem:[%s1 + $0x258] sm:$0xf]
    %v169 = vld [vmem:[%s1 + $0x25c] sm:$0xf]
    %v170 = vld [vmem:[%s1 + $0x260] sm:$0xf]
    %v171 = vld [vmem:[%s1 + $0x264] sm:$0xf]
    %v172 = vld [vmem:[%s1 + $0x268] sm:$0xf]
    %v173 = vld [vmem:[%s1 + $0x26c] sm:$0xf]
    %v174 = vld [vmem:[%s1 + $0x270] sm:$0xf]
    %v175 = vld [vmem:[%s1 + $0x274] sm:$0xf]
    %v176 = vld [vmem:[%s1 + $0x278] sm:$0xf]
    %v177 = vld [vmem:[%s1 + $0x27c] sm:$0xf]
    %v178 = vld [vmem:[%s1 + $0x280] sm:$0xf]
    %v179 = vld [vmem:[%s1 + $0x284] sm:$0xf]
    %v180 = vld [vmem:[%s1 + $0x288] sm:$0xf]
    %v181 = vld [vmem:[%s1 + $0x28c] sm:$0xf]
    %v182 = vld [vmem:[%s1 + $0x290] sm:$0xf]
    %v183 = vld [vmem:[%s1 + $0x294] sm:$0xf]
    %v184 = vld [vmem:[%s1 + $0x298] sm:$0xf]
    %v185 = vld [vmem:[%s1 + $0x29c] sm:$0xf]
    %v186 = vld [vmem:[%s1 + $0x2a0] sm:$0xf]
    %v187 = vld [vmem:[%s1 + $0x2a4] sm:$0xf]
    %v188 = vld [vmem:[%s1 + $0x2a8] sm:$0xf]
    %v189 = vld [vmem:[%s1 + $0x2ac] sm:$0xf]
    %v190 = vld [vmem:[%s1 + $0x2b0] sm:$0xf]
    %v191 = vld [vmem:[%s1 + $0x2b4] sm:$0xf]
    %v192 = vld [vmem:[%s1 + $0x2b8] sm:$0xf]
    %v193 = vld [vmem:[%s1 + $0x2bc] sm:$0xf]
    %v194 = vld [vmem:[%s1 + $0x2c0] sm:$0xf]
    %v195 = vld [vmem:[%s1 + $0x2c4] sm:$0xf]
    %v196 = vld [vmem:[%s1 + $0x2c8] sm:$0xf]
    %v197 = vld [vmem:[%s1 + $0x2cc] sm:$0xf]
    %v198 = vld [vmem:[%s1 + $0x2d0] sm:$0xf]
    %v199 = vld [vmem:[%s1 + $0x2d4] sm:$0xf]
    %v200 = vld [vmem:[%s1 + $0x2d8] sm:$0xf]
    %v201 = vld [vmem:[%s1 + $0x2dc] sm:$0xf]
    %v202 = vld [vmem:[%s1 + $0x2e0] sm:$0xf]
    %v203 = vld [vmem:[%s1 + $0x2e4] sm:$0xf]
    %v204 = vld [vmem:[%s1 + $0x2e8] sm:$0xf]
    %v205 = vld [vmem:[%s1 + $0x2ec] sm:$0xf]
    %v206 = vld [vmem:[%s1 + $0x2f0] sm:$0xf]
    %v207 = vld [vmem:[%s1 + $0x2f4] sm:$0xf]
    %v208 = vld [vmem:[%s1 + $0x2f8] sm:$0xf]
    %v209 = vld [vmem:[%s1 + $0x2fc] sm:$0xf]
    %v210 = vld [vmem:[%s1 + $0x300] sm:$0xf]
    %v211 = vld [vmem:[%s1 + $0x304] sm:$0xf]
    %v212 = vld [vmem:[%s1 + $0x308] sm:$0xf]
    %v213 = vld [vmem:[%s1 + $0x30c] sm:$0xf]
    %v214 = vld [vmem:[%s2] sm:$0x1]
    %v216 = vlaneseq
    %v217 = vshrl.u32 %v216, 7
    %v218 = vsub.s32 0, %v217
    %v219 = vrot.slane %v214, %v218
    %v223 = vcombine.high %v16, %v16
    %v225 = vunpack.c.l.s4 1966171168
    %v226 = vunpack.c.0.s8 %v225
    %v227 = vlaneseq
    %v228 = vshrl.u32 %v227, 7
    %v229 = vsub.s32 %v226, %v228
    %v230 = vrot.slane %v16, %v229
    %v232 = vunpack.c.l.s4 1966171168
    %v233 = vunpack.c.0.s8 %v232
    %v234 = vlaneseq
    %v235 = vshrl.u32 %v234, 7
    %v236 = vsub.s32 %v233, %v235
    %v237 = vrot.slane %v223, %v236
    %v238 = vcombine.high %v230, %v230
    %v239 = vcombine.high %v237, %v237
    %v241 = vunpack.c.l.s4 1966171168
    %v242 = vunpack.c.0.s8 %v241
    %v243 = vlaneseq
    %v244 = vshrl.u32 %v243, 7
    %v245 = vsub.s32 %v242, %v244
    %v246 = vrot.slane %v230, %v245
    %v248 = vunpack.c.l.s4 1966171168
    %v249 = vunpack.c.0.s8 %v248
    %v250 = vlaneseq
    %v251 = vshrl.u32 %v250, 7
    %v252 = vsub.s32 %v249, %v251
    %v253 = vrot.slane %v237, %v252
    %v255 = vunpack.c.l.s4 1966171168
    %v256 = vunpack.c.0.s8 %v255
    %v257 = vlaneseq
    %v258 = vshrl.u32 %v257, 7
    %v259 = vsub.s32 %v256, %v258
    %v260 = vrot.slane %v238, %v259
    %v262 = vunpack.c.l.s4 1966171168
    %v263 = vunpack.c.0.s8 %v262
    %v264 = vlaneseq
    %v265 = vshrl.u32 %v264, 7
    %v266 = vsub.s32 %v263, %v265
    %v267 = vrot.slane %v239, %v266
    %v268 = vcombine.high %v246, %v246
    %v269 = vcombine.high %v253, %v253
    %v270 = vcombine.high %v260, %v260
    %v271 = vcombine.high %v267, %v267
    %v272 = vcombine.high %v17, %v17
    %v274 = vunpack.c.l.s4 1966171168
    %v275 = vunpack.c.0.s8 %v274
    %v276 = vlaneseq
    %v277 = vshrl.u32 %v276, 7
    %v278 = vsub.s32 %v275, %v277
    %v279 = vrot.slane %v17, %v278
    %v281 = vunpack.c.l.s4 1966171168
    %v282 = vunpack.c.0.s8 %v281
    %v283 = vlaneseq
    %v284 = vshrl.u32 %v283, 7
    %v285 = vsub.s32 %v282, %v284
    %v286 = vrot.slane %v272, %v285
    %v287 = vcombine.high %v279, %v279
    %v289 = vunpack.c.l.s4 1966171168
    %v290 = vunpack.c.0.s8 %v289
    %v291 = vlaneseq
    %v292 = vshrl.u32 %v291, 7
    %v293 = vsub.s32 %v290, %v292
    %v294 = vrot.slane %v279, %v293
    %v296 = vunpack.c.l.s4 1966171168
    %v297 = vunpack.c.0.s8 %v296
    %v298 = vlaneseq
    %v299 = vshrl.u32 %v298, 7
    %v300 = vsub.s32 %v297, %v299
    %v301 = vrot.slane %v286, %v300
    %v303 = vunpack.c.l.s4 1966171168
    %v304 = vunpack.c.0.s8 %v303
    %v305 = vlaneseq
    %v306 = vshrl.u32 %v305, 7
    %v307 = vsub.s32 %v304, %v306
    %v308 = vrot.slane %v287, %v307
    %v309 = vcombine.high %v294, %v294
    %v310 = vcombine.high %v308, %v308
    %v519 = vunpack.c.l.b16 %v18
    %v520 = vunpack.c.l.b16 %v19
    %v521 = vunpack.c.l.b16 %v20
    %v522 = vunpack.c.l.b16 %v21
    %v523 = vunpack.c.l.b16 %v22
    %v524 = vunpack.c.l.b16 %v23
    %v525 = vunpack.c.l.b16 %v24
    %v526 = vunpack.c.l.b16 %v25
    %v527 = vunpack.c.l.b16 %v26
    %v528 = vunpack.c.l.b16 %v27
    %v529 = vunpack.c.l.b16 %v28
    %v530 = vunpack.c.l.b16 %v29
    %v531 = vunpack.c.l.b16 %v30
    %v532 = vunpack.c.l.b16 %v31
    %v533 = vunpack.c.l.b16 %v32
    %v534 = vunpack.c.l.b16 %v33
    %v535 = vunpack.c.l.b16 %v34
    %v536 = vunpack.c.l.b16 %v35
    %v537 = vunpack.c.l.b16 %v36
    %v538 = vunpack.c.l.b16 %v37
    %v539 = vunpack.c.l.b16 %v38
    %v540 = vunpack.c.l.b16 %v39
    %v541 = vunpack.c.l.b16 %v40
    %v542 = vunpack.c.l.b16 %v41
    %v543 = vunpack.c.l.b16 %v42
    %v544 = vunpack.c.l.b16 %v43
    %v545 = vunpack.c.l.b16 %v44
    %v546 = vunpack.c.l.b16 %v45
    %v547 = vunpack.c.l.b16 %v46
    %v548 = vunpack.c.l.b16 %v47
    %v549 = vunpack.c.l.b16 %v48
    %v550 = vunpack.c.l.b16 %v49
    %v551 = vunpack.c.l.b16 %v50
    %v552 = vunpack.c.l.b16 %v51
    %v553 = vunpack.c.l.b16 %v52
    %v554 = vunpack.c.l.b16 %v53
    %v555 = vunpack.c.l.b16 %v54
    %v556 = vunpack.c.l.b16 %v55
    %v557 = vunpack.c.l.b16 %v56
    %v558 = vunpack.c.l.b16 %v57
    %v559 = vunpack.c.l.b16 %v58
    %v560 = vunpack.c.l.b16 %v59
    %v561 = vunpack.c.l.b16 %v60
    %v562 = vunpack.c.l.b16 %v61
    %v563 = vunpack.c.l.b16 %v62
    %v564 = vunpack.c.l.b16 %v63
    %v565 = vunpack.c.l.b16 %v64
    %v566 = vunpack.c.l.b16 %v65
    %v567 = vunpack.c.l.b16 %v66
    %v568 = vunpack.c.l.b16 %v67
    %v569 = vunpack.c.l.b16 %v68
    %v570 = vunpack.c.l.b16 %v69
    %v571 = vunpack.c.l.b16 %v70
    %v572 = vunpack.c.l.b16 %v71
    %v573 = vunpack.c.l.b16 %v72
    %v574 = vunpack.c.l.b16 %v73
    %v575 = vunpack.c.l.b16 %v74
    %v576 = vunpack.c.l.b16 %v75
    %v577 = vunpack.c.l.b16 %v76
    %v578 = vunpack.c.l.b16 %v77
    %v579 = vunpack.c.l.b16 %v78
    %v580 = vunpack.c.l.b16 %v79
    %v581 = vunpack.c.l.b16 %v80
    %v582 = vunpack.c.l.b16 %v81
    %v583 = vunpack.c.l.b16 %v82
    %v584 = vunpack.c.l.b16 %v83
    %v585 = vunpack.c.l.b16 %v84
    %v586 = vunpack.c.l.b16 %v85
    %v587 = vunpack.c.l.b16 %v86
    %v588 = vunpack.c.l.b16 %v87
    %v589 = vunpack.c.l.b16 %v88
    %v590 = vunpack.c.l.b16 %v89
    %v591 = vunpack.c.l.b16 %v90
    %v592 = vunpack.c.l.b16 %v91
    %v593 = vunpack.c.l.b16 %v92
    %v594 = vunpack.c.l.b16 %v93
    %v595 = vunpack.c.l.b16 %v94
    %v596 = vunpack.c.l.b16 %v95
    %v597 = vunpack.c.l.b16 %v96
    %v598 = vunpack.c.l.b16 %v97
    %v599 = vunpack.c.l.b16 %v98
    %v600 = vunpack.c.l.b16 %v99
    %v601 = vunpack.c.l.b16 %v100
    %v602 = vunpack.c.l.b16 %v101
    %v603 = vunpack.c.l.b16 %v102
    %v604 = vunpack.c.l.b16 %v103
    %v605 = vunpack.c.l.b16 %v104
    %v606 = vunpack.c.l.b16 %v105
    %v607 = vunpack.c.l.b16 %v106
    %v608 = vunpack.c.l.b16 %v107
    %v609 = vunpack.c.l.b16 %v108
    %v610 = vunpack.c.l.b16 %v109
    %v611 = vunpack.c.l.b16 %v110
    %v612 = vunpack.c.l.b16 %v111
    %v613 = vunpack.c.l.b16 %v112
    %v614 = vunpack.c.l.b16 %v113
    %v615 = vunpack.c.l.b16 %v114
    %v616 = vunpack.c.l.b16 %v115
    %v617 = vunpack.c.l.b16 %v116
    %v618 = vunpack.c.l.b16 %v117
    %v619 = vunpack.c.l.b16 %v118
    %v620 = vunpack.c.l.b16 %v119
    %v621 = vunpack.c.l.b16 %v120
    %v622 = vunpack.c.l.b16 %v121
    %v623 = vunpack.c.l.b16 %v122
    %v624 = vunpack.c.l.b16 %v123
    %v625 = vunpack.c.l.b16 %v124
    %v626 = vunpack.c.l.b16 %v125
    %v627 = vunpack.c.l.b16 %v126
    %v628 = vunpack.c.l.b16 %v127
    %v629 = vunpack.c.l.b16 %v128
    %v630 = vunpack.c.l.b16 %v129
    %v631 = vunpack.c.l.b16 %v130
    %v632 = vunpack.c.l.b16 %v131
    %v633 = vunpack.c.l.b16 %v132
    %v634 = vunpack.c.l.b16 %v133
    %v635 = vunpack.c.l.b16 %v134
    %v636 = vunpack.c.l.b16 %v135
    %v637 = vunpack.c.l.b16 %v136
    %v638 = vunpack.c.l.b16 %v137
    %v639 = vunpack.c.l.b16 %v138
    %v640 = vunpack.c.l.b16 %v139
    %v641 = vunpack.c.l.b16 %v140
    %v642 = vunpack.c.l.b16 %v141
    %v643 = vunpack.c.l.b16 %v142
    %v644 = vunpack.c.l.b16 %v143
    %v645 = vunpack.c.l.b16 %v144
    %v646 = vunpack.c.l.b16 %v145
    %v647 = vunpack.c.l.b16 %v146
    %v648 = vunpack.c.l.b16 %v147
    %v649 = vunpack.c.l.b16 %v148
    %v650 = vunpack.c.l.b16 %v149
    %v651 = vunpack.c.l.b16 %v150
    %v652 = vunpack.c.l.b16 %v151
    %v653 = vunpack.c.l.b16 %v152
    %v654 = vunpack.c.l.b16 %v153
    %v655 = vunpack.c.l.b16 %v154
    %v656 = vunpack.c.l.b16 %v155
    %v657 = vunpack.c.l.b16 %v156
    %v658 = vunpack.c.l.b16 %v157
    %v659 = vunpack.c.l.b16 %v158
    %v660 = vunpack.c.l.b16 %v159
    %v661 = vunpack.c.l.b16 %v160
    %v662 = vunpack.c.l.b16 %v161
    %v663 = vunpack.c.l.b16 %v162
    %v664 = vunpack.c.l.b16 %v163
    %v665 = vunpack.c.l.b16 %v164
    %v666 = vunpack.c.l.b16 %v165
    %v667 = vunpack.c.l.b16 %v166
    %v668 = vunpack.c.l.b16 %v167
    %v669 = vunpack.c.l.b16 %v168
    %v670 = vunpack.c.l.b16 %v169
    %v671 = vunpack.c.l.b16 %v170
    %v672 = vunpack.c.l.b16 %v171
    %v673 = vunpack.c.l.b16 %v172
    %v674 = vunpack.c.l.b16 %v173
    %v675 = vunpack.c.l.b16 %v174
    %v676 = vunpack.c.l.b16 %v175
    %v677 = vunpack.c.l.b16 %v176
    %v678 = vunpack.c.l.b16 %v177
    %v679 = vunpack.c.l.b16 %v178
    %v680 = vunpack.c.l.b16 %v179
    %v681 = vunpack.c.l.b16 %v180
    %v682 = vunpack.c.l.b16 %v181
    %v683 = vunpack.c.l.b16 %v182
    %v684 = vunpack.c.l.b16 %v183
    %v685 = vunpack.c.l.b16 %v184
    %v686 = vunpack.c.l.b16 %v185
    %v687 = vunpack.c.l.b16 %v186
    %v688 = vunpack.c.l.b16 %v187
    %v689 = vunpack.c.l.b16 %v188
    %v690 = vunpack.c.l.b16 %v189
    %v691 = vunpack.c.l.b16 %v190
    %v692 = vunpack.c.l.b16 %v191
    %v693 = vunpack.c.l.b16 %v192
    %v694 = vunpack.c.l.b16 %v193
    %v695 = vunpack.c.l.b16 %v194
    %v696 = vunpack.c.l.b16 %v195
    %v697 = vunpack.c.l.b16 %v196
    %v698 = vunpack.c.l.b16 %v197
    %v699 = vunpack.c.l.b16 %v198
    %v700 = vunpack.c.l.b16 %v199
    %v701 = vunpack.c.l.b16 %v200
    %v702 = vunpack.c.l.b16 %v201
    %v703 = vunpack.c.l.b16 %v202
    %v704 = vunpack.c.l.b16 %v203
    %v705 = vunpack.c.l.b16 %v204
    %v706 = vunpack.c.l.b16 %v205
    %v707 = vunpack.c.l.b16 %v206
    %v708 = vunpack.c.l.b16 %v207
    %v709 = vunpack.c.l.b16 %v208
    %v710 = vunpack.c.l.b16 %v209
    %v711 = vunpack.c.l.b16 %v210
    %v712 = vunpack.c.l.b16 %v211
    %v713 = vunpack.c.l.b16 %v212
    %v714 = vunpack.c.l.b16 %v213
    %v715 = vpack.c.b16 %v520, %v519
    %v716 = vpack.c.b16 %v522, %v521
    %v717 = vpack.c.b16 %v524, %v523
    %v718 = vpack.c.b16 %v526, %v525
    %v719 = vpack.c.b16 %v528, %v527
    %v720 = vpack.c.b16 %v530, %v529
    %v721 = vpack.c.b16 %v532, %v531
    %v722 = vpack.c.b16 %v534, %v533
    %v723 = vpack.c.b16 %v536, %v535
    %v724 = vpack.c.b16 %v538, %v537
    %v725 = vpack.c.b16 %v540, %v539
    %v726 = vpack.c.b16 %v542, %v541
    %v727 = vpack.c.b16 %v544, %v543
    %v728 = vpack.c.b16 %v546, %v545
    %v729 = vpack.c.b16 %v548, %v547
    %v730 = vpack.c.b16 %v550, %v549
    %v731 = vpack.c.b16 %v552, %v551
    %v732 = vpack.c.b16 %v554, %v553
    %v733 = vpack.c.b16 %v556, %v555
    %v734 = vpack.c.b16 %v558, %v557
    %v735 = vpack.c.b16 %v560, %v559
    %v736 = vpack.c.b16 %v562, %v561
    %v737 = vpack.c.b16 %v564, %v563
    %v738 = vpack.c.b16 %v566, %v565
    %v739 = vpack.c.b16 %v568, %v567
    %v740 = vpack.c.b16 %v570, %v569
    %v741 = vpack.c.b16 %v572, %v571
    %v742 = vpack.c.b16 %v574, %v573
    %v743 = vpack.c.b16 %v576, %v575
    %v744 = vpack.c.b16 %v578, %v577
    %v745 = vpack.c.b16 %v580, %v579
    %v746 = vpack.c.b16 %v582, %v581
    %v747 = vpack.c.b16 %v584, %v583
    %v748 = vpack.c.b16 %v586, %v585
    %v749 = vpack.c.b16 %v588, %v587
    %v750 = vpack.c.b16 %v590, %v589
    %v751 = vpack.c.b16 %v592, %v591
    %v752 = vpack.c.b16 %v594, %v593
    %v753 = vpack.c.b16 %v596, %v595
    %v754 = vpack.c.b16 %v598, %v597
    %v755 = vpack.c.b16 %v600, %v599
    %v756 = vpack.c.b16 %v602, %v601
    %v757 = vpack.c.b16 %v604, %v603
    %v758 = vpack.c.b16 %v606, %v605
    %v759 = vpack.c.b16 %v608, %v607
    %v760 = vpack.c.b16 %v610, %v609
    %v761 = vpack.c.b16 %v612, %v611
    %v762 = vpack.c.b16 %v614, %v613
    %v763 = vpack.c.b16 %v616, %v615
    %v764 = vpack.c.b16 %v618, %v617
    %v765 = vpack.c.b16 %v620, %v619
    %v766 = vpack.c.b16 %v622, %v621
    %v767 = vpack.c.b16 %v624, %v623
    %v768 = vpack.c.b16 %v626, %v625
    %v769 = vpack.c.b16 %v628, %v627
    %v770 = vpack.c.b16 %v630, %v629
    %v771 = vpack.c.b16 %v632, %v631
    %v772 = vpack.c.b16 %v634, %v633
    %v773 = vpack.c.b16 %v636, %v635
    %v774 = vpack.c.b16 %v638, %v637
    %v775 = vpack.c.b16 %v640, %v639
    %v776 = vpack.c.b16 %v642, %v641
    %v777 = vpack.c.b16 %v644, %v643
    %v778 = vpack.c.b16 %v646, %v645
    %v779 = vpack.c.b16 %v648, %v647
    %v780 = vpack.c.b16 %v650, %v649
    %v781 = vpack.c.b16 %v652, %v651
    %v782 = vpack.c.b16 %v654, %v653
    %v783 = vpack.c.b16 %v656, %v655
    %v784 = vpack.c.b16 %v658, %v657
    %v785 = vpack.c.b16 %v660, %v659
    %v786 = vpack.c.b16 %v662, %v661
    %v787 = vpack.c.b16 %v664, %v663
    %v788 = vpack.c.b16 %v666, %v665
    %v789 = vpack.c.b16 %v668, %v667
    %v790 = vpack.c.b16 %v670, %v669
    %v791 = vpack.c.b16 %v672, %v671
    %v792 = vpack.c.b16 %v674, %v673
    %v793 = vpack.c.b16 %v676, %v675
    %v794 = vpack.c.b16 %v678, %v677
    %v795 = vpack.c.b16 %v680, %v679
    %v796 = vpack.c.b16 %v682, %v681
    %v797 = vpack.c.b16 %v684, %v683
    %v798 = vpack.c.b16 %v686, %v685
    %v799 = vpack.c.b16 %v688, %v687
    %v800 = vpack.c.b16 %v690, %v689
    %v801 = vpack.c.b16 %v692, %v691
    %v802 = vpack.c.b16 %v694, %v693
    %v803 = vpack.c.b16 %v696, %v695
    %v804 = vpack.c.b16 %v698, %v697
    %v805 = vpack.c.b16 %v700, %v699
    %v806 = vpack.c.b16 %v702, %v701
    %v807 = vpack.c.b16 %v704, %v703
    %v808 = vpack.c.b16 %v706, %v705
    %v809 = vpack.c.b16 %v708, %v707
    %v810 = vpack.c.b16 %v710, %v709
    %v811 = vpack.c.b16 %v712, %v711
    %v812 = vpack.c.b16 %v714, %v713
    %vm911 = vcmask 261120
    %v913 = vsel %vm911, %v301, 0
    %915 = vmatprep.subr.bf16.mxu0 0
    %916 = vmatpush1.bf16.msra.mxu0 %v722
    %917 = vmatprep.subr.bf16.mxu0 0
    %918 = vmatpush1.bf16.msra.mxu0 %v721
    %919 = vmatprep.subr.bf16.mxu0 0
    %920 = vmatpush1.bf16.msra.mxu0 %v720
    %921 = vmatprep.subr.bf16.mxu0 0
    %922 = vmatpush1.bf16.msra.mxu0 %v719
    %923 = vmatprep.subr.bf16.mxu0 0
    %924 = vmatpush1.bf16.msra.mxu0 %v718
    %925 = vmatprep.subr.bf16.mxu0 0
    %926 = vmatpush1.bf16.msra.mxu0 %v717
    %927 = vmatprep.subr.bf16.mxu0 0
    %928 = vmatpush1.bf16.msra.mxu0 %v716
    %929 = vmatprep.subr.bf16.mxu0 0
    %930 = vmatpush1.bf16.msra.mxu0 %v715
    %931 = vmatprep.subr.bf16.mxu0 0
    %932 = vmatpush2.bf16.msra.mxu0 %v730
    %933 = vmatprep.subr.bf16.mxu0 0
    %934 = vmatpush2.bf16.msra.mxu0 %v729
    %935 = vmatprep.subr.bf16.mxu0 0
    %936 = vmatpush2.bf16.msra.mxu0 %v728
    %937 = vmatprep.subr.bf16.mxu0 0
    %938 = vmatpush2.bf16.msra.mxu0 %v727
    %939 = vmatprep.subr.bf16.mxu0 0
    %940 = vmatpush2.bf16.msra.mxu0 %v726
    %941 = vmatprep.subr.bf16.mxu0 0
    %942 = vmatpush2.bf16.msra.mxu0 %v725
    %943 = vmatprep.subr.bf16.mxu0 0
    %944 = vmatpush2.bf16.msra.mxu0 %v724
    %945 = vmatprep.subr.bf16.mxu0 0
    %946 = vmatpush2.bf16.msra.mxu0 %v723
    %947 = vmatprep.mubr.bf16.mxu0 %v260
    %948 = vmatmul.mubr.bf16.gmra.mxu0 %v246
    %v949 = vpop.f32.mrf.mxu0
    %v950 = vadd.f32 %v219, %v949
    %v951 = vpop.f32.mrf.mxu0
    %v952 = vpop.f32.mrf.mxu0
    %v953 = vpop.f32.mrf.mxu0
    %954 = vdwg.mxu0
    %955 = vmatprep.subr.bf16.mxu0 0
    %956 = vmatpush1.bf16.msra.mxu0 %v738
    %957 = vmatprep.subr.bf16.mxu0 0
    %958 = vmatpush1.bf16.msra.mxu0 %v737
    %959 = vmatprep.subr.bf16.mxu0 0
    %960 = vmatpush1.bf16.msra.mxu0 %v736
    %961 = vmatprep.subr.bf16.mxu0 0
    %962 = vmatpush1.bf16.msra.mxu0 %v735
    %963 = vmatprep.subr.bf16.mxu0 0
    %964 = vmatpush1.bf16.msra.mxu0 %v734
    %965 = vmatprep.subr.bf16.mxu0 0
    %966 = vmatpush1.bf16.msra.mxu0 %v733
    %967 = vmatprep.subr.bf16.mxu0 0
    %968 = vmatpush1.bf16.msra.mxu0 %v732
    %969 = vmatprep.subr.bf16.mxu0 0
    %970 = vmatpush1.bf16.msra.mxu0 %v731
    %971 = vmatprep.subr.bf16.mxu0 0
    %972 = vmatpush2.bf16.msra.mxu0 %v746
    %973 = vmatprep.subr.bf16.mxu0 0
    %974 = vmatpush2.bf16.msra.mxu0 %v745
    %975 = vmatprep.subr.bf16.mxu0 0
    %976 = vmatpush2.bf16.msra.mxu0 %v744
    %977 = vmatprep.subr.bf16.mxu0 0
    %978 = vmatpush2.bf16.msra.mxu0 %v743
    %979 = vmatprep.subr.bf16.mxu0 0
    %980 = vmatpush2.bf16.msra.mxu0 %v742
    %981 = vmatprep.subr.bf16.mxu0 0
    %982 = vmatpush2.bf16.msra.mxu0 %v741
    %983 = vmatprep.subr.bf16.mxu0 0
    %984 = vmatpush2.bf16.msra.mxu0 %v740
    %985 = vmatprep.subr.bf16.mxu0 0
    %986 = vmatpush2.bf16.msra.mxu0 %v739
    %987 = vmatprep.mubr.bf16.mxu0 %v270
    %988 = vmatmul.mubr.bf16.gmra.mxu0 %v268
    %v989 = vpop.f32.mrf.mxu0
    %v990 = vadd.f32 %v950, %v989
    %v991 = vpop.f32.mrf.mxu0
    %v992 = vpop.f32.mrf.mxu0
    %v993 = vpop.f32.mrf.mxu0
    %994 = vdwg.mxu0
    %995 = vmatprep.subr.bf16.mxu0 0
    %996 = vmatpush1.bf16.msra.mxu0 %v754
    %997 = vmatprep.subr.bf16.mxu0 0
    %998 = vmatpush1.bf16.msra.mxu0 %v753
    %999 = vmatprep.subr.bf16.mxu0 0
    %1000 = vmatpush1.bf16.msra.mxu0 %v752
    %1001 = vmatprep.subr.bf16.mxu0 0
    %1002 = vmatpush1.bf16.msra.mxu0 %v751
    %1003 = vmatprep.subr.bf16.mxu0 0
    %1004 = vmatpush1.bf16.msra.mxu0 %v750
    %1005 = vmatprep.subr.bf16.mxu0 0
    %1006 = vmatpush1.bf16.msra.mxu0 %v749
    %1007 = vmatprep.subr.bf16.mxu0 0
    %1008 = vmatpush1.bf16.msra.mxu0 %v748
    %1009 = vmatprep.subr.bf16.mxu0 0
    %1010 = vmatpush1.bf16.msra.mxu0 %v747
    %1011 = vmatprep.subr.bf16.mxu0 0
    %1012 = vmatpush2.bf16.msra.mxu0 %v762
    %1013 = vmatprep.subr.bf16.mxu0 0
    %1014 = vmatpush2.bf16.msra.mxu0 %v761
    %1015 = vmatprep.subr.bf16.mxu0 0
    %1016 = vmatpush2.bf16.msra.mxu0 %v760
    %1017 = vmatprep.subr.bf16.mxu0 0
    %1018 = vmatpush2.bf16.msra.mxu0 %v759
    %1019 = vmatprep.subr.bf16.mxu0 0
    %1020 = vmatpush2.bf16.msra.mxu0 %v758
    %1021 = vmatprep.subr.bf16.mxu0 0
    %1022 = vmatpush2.bf16.msra.mxu0 %v757
    %1023 = vmatprep.subr.bf16.mxu0 0
    %1024 = vmatpush2.bf16.msra.mxu0 %v756
    %1025 = vmatprep.subr.bf16.mxu0 0
    %1026 = vmatpush2.bf16.msra.mxu0 %v755
    %1027 = vmatprep.mubr.bf16.mxu0 %v267
    %1028 = vmatmul.mubr.bf16.gmra.mxu0 %v253
    %v1029 = vpop.f32.mrf.mxu0
    %v1030 = vadd.f32 %v990, %v1029
    %v1031 = vpop.f32.mrf.mxu0
    %v1032 = vpop.f32.mrf.mxu0
    %v1033 = vpop.f32.mrf.mxu0
    %1034 = vdwg.mxu0
    %1035 = vmatprep.subr.bf16.mxu0 0
    %1036 = vmatpush1.bf16.msra.mxu0 %v770
    %1037 = vmatprep.subr.bf16.mxu0 0
    %1038 = vmatpush1.bf16.msra.mxu0 %v769
    %1039 = vmatprep.subr.bf16.mxu0 0
    %1040 = vmatpush1.bf16.msra.mxu0 %v768
    %1041 = vmatprep.subr.bf16.mxu0 0
    %1042 = vmatpush1.bf16.msra.mxu0 %v767
    %1043 = vmatprep.subr.bf16.mxu0 0
    %1044 = vmatpush1.bf16.msra.mxu0 %v766
    %1045 = vmatprep.subr.bf16.mxu0 0
    %1046 = vmatpush1.bf16.msra.mxu0 %v765
    %1047 = vmatprep.subr.bf16.mxu0 0
    %1048 = vmatpush1.bf16.msra.mxu0 %v764
    %1049 = vmatprep.subr.bf16.mxu0 0
    %1050 = vmatpush1.bf16.msra.mxu0 %v763
    %1051 = vmatprep.subr.bf16.mxu0 0
    %1052 = vmatpush2.bf16.msra.mxu0 %v778
    %1053 = vmatprep.subr.bf16.mxu0 0
    %1054 = vmatpush2.bf16.msra.mxu0 %v777
    %1055 = vmatprep.subr.bf16.mxu0 0
    %1056 = vmatpush2.bf16.msra.mxu0 %v776
    %1057 = vmatprep.subr.bf16.mxu0 0
    %1058 = vmatpush2.bf16.msra.mxu0 %v775
    %1059 = vmatprep.subr.bf16.mxu0 0
    %1060 = vmatpush2.bf16.msra.mxu0 %v774
    %1061 = vmatprep.subr.bf16.mxu0 0
    %1062 = vmatpush2.bf16.msra.mxu0 %v773
    %1063 = vmatprep.subr.bf16.mxu0 0
    %1064 = vmatpush2.bf16.msra.mxu0 %v772
    %1065 = vmatprep.subr.bf16.mxu0 0
    %1066 = vmatpush2.bf16.msra.mxu0 %v771
    %1067 = vmatprep.mubr.bf16.mxu0 %v271
    %1068 = vmatmul.mubr.bf16.gmra.mxu0 %v269
    %v1069 = vpop.f32.mrf.mxu0
    %v1070 = vadd.f32 %v1030, %v1069
    %v1071 = vpop.f32.mrf.mxu0
    %v1072 = vpop.f32.mrf.mxu0
    %v1073 = vpop.f32.mrf.mxu0
    %1074 = vdwg.mxu0
    %1075 = vmatprep.subr.bf16.mxu0 0
    %1076 = vmatpush1.bf16.msra.mxu0 %v786
    %1077 = vmatprep.subr.bf16.mxu0 0
    %1078 = vmatpush1.bf16.msra.mxu0 %v785
    %1079 = vmatprep.subr.bf16.mxu0 0
    %1080 = vmatpush1.bf16.msra.mxu0 %v784
    %1081 = vmatprep.subr.bf16.mxu0 0
    %1082 = vmatpush1.bf16.msra.mxu0 %v783
    %1083 = vmatprep.subr.bf16.mxu0 0
    %1084 = vmatpush1.bf16.msra.mxu0 %v782
    %1085 = vmatprep.subr.bf16.mxu0 0
    %1086 = vmatpush1.bf16.msra.mxu0 %v781
    %1087 = vmatprep.subr.bf16.mxu0 0
    %1088 = vmatpush1.bf16.msra.mxu0 %v780
    %1089 = vmatprep.subr.bf16.mxu0 0
    %1090 = vmatpush1.bf16.msra.mxu0 %v779
    %1091 = vmatprep.subr.bf16.mxu0 0
    %1092 = vmatpush2.bf16.msra.mxu0 %v794
    %1093 = vmatprep.subr.bf16.mxu0 0
    %1094 = vmatpush2.bf16.msra.mxu0 %v793
    %1095 = vmatprep.subr.bf16.mxu0 0
    %1096 = vmatpush2.bf16.msra.mxu0 %v792
    %1097 = vmatprep.subr.bf16.mxu0 0
    %1098 = vmatpush2.bf16.msra.mxu0 %v791
    %1099 = vmatprep.subr.bf16.mxu0 0
    %1100 = vmatpush2.bf16.msra.mxu0 %v790
    %1101 = vmatprep.subr.bf16.mxu0 0
    %1102 = vmatpush2.bf16.msra.mxu0 %v789
    %1103 = vmatprep.subr.bf16.mxu0 0
    %1104 = vmatpush2.bf16.msra.mxu0 %v788
    %1105 = vmatprep.subr.bf16.mxu0 0
    %1106 = vmatpush2.bf16.msra.mxu0 %v787
    %1107 = vmatprep.mubr.bf16.mxu0 %v308
    %1108 = vmatmul.mubr.bf16.gmra.mxu0 %v294
    %v1109 = vpop.f32.mrf.mxu0
    %v1110 = vadd.f32 %v1070, %v1109
    %v1111 = vpop.f32.mrf.mxu0
    %v1112 = vpop.f32.mrf.mxu0
    %v1113 = vpop.f32.mrf.mxu0
    %1114 = vdwg.mxu0
    %1115 = vmatprep.subr.bf16.mxu0 0
    %1116 = vmatpush1.bf16.msra.mxu0 %v802
    %1117 = vmatprep.subr.bf16.mxu0 0
    %1118 = vmatpush1.bf16.msra.mxu0 %v801
    %1119 = vmatprep.subr.bf16.mxu0 0
    %1120 = vmatpush1.bf16.msra.mxu0 %v800
    %1121 = vmatprep.subr.bf16.mxu0 0
    %1122 = vmatpush1.bf16.msra.mxu0 %v799
    %1123 = vmatprep.subr.bf16.mxu0 0
    %1124 = vmatpush1.bf16.msra.mxu0 %v798
    %1125 = vmatprep.subr.bf16.mxu0 0
    %1126 = vmatpush1.bf16.msra.mxu0 %v797
    %1127 = vmatprep.subr.bf16.mxu0 0
    %1128 = vmatpush1.bf16.msra.mxu0 %v796
    %1129 = vmatprep.subr.bf16.mxu0 0
    %1130 = vmatpush1.bf16.msra.mxu0 %v795
    %1131 = vmatprep.subr.bf16.mxu0 0
    %1132 = vmatpush2.bf16.msra.mxu0 %v810
    %1133 = vmatprep.subr.bf16.mxu0 0
    %1134 = vmatpush2.bf16.msra.mxu0 %v809
    %1135 = vmatprep.subr.bf16.mxu0 0
    %1136 = vmatpush2.bf16.msra.mxu0 %v808
    %1137 = vmatprep.subr.bf16.mxu0 0
    %1138 = vmatpush2.bf16.msra.mxu0 %v807
    %1139 = vmatprep.subr.bf16.mxu0 0
    %1140 = vmatpush2.bf16.msra.mxu0 %v806
    %1141 = vmatprep.subr.bf16.mxu0 0
    %1142 = vmatpush2.bf16.msra.mxu0 %v805
    %1143 = vmatprep.subr.bf16.mxu0 0
    %1144 = vmatpush2.bf16.msra.mxu0 %v804
    %1145 = vmatprep.subr.bf16.mxu0 0
    %1146 = vmatpush2.bf16.msra.mxu0 %v803
    %1147 = vmatprep.mubr.bf16.mxu0 %v310
    %1148 = vmatmul.mubr.bf16.gmra.mxu0 %v309
    %v1149 = vpop.f32.mrf.mxu0
    %v1150 = vadd.f32 %v1110, %v1149
    %v1151 = vpop.f32.mrf.mxu0
    %v1152 = vpop.f32.mrf.mxu0
    %v1153 = vpop.f32.mrf.mxu0
    %1154 = vdwg.mxu0
    %1155 = vmatprep.subr.bf16.mxu0 0
    %1156 = vmatpush1.bf16.msra.mxu0 0
    %1157 = vmatprep.subr.bf16.mxu0 0
    %1158 = vmatpush1.bf16.msra.mxu0 0
    %1159 = vmatprep.subr.bf16.mxu0 0
    %1160 = vmatpush1.bf16.msra.mxu0 0
    %1161 = vmatprep.subr.bf16.mxu0 0
    %1162 = vmatpush1.bf16.msra.mxu0 0
    %1163 = vmatprep.subr.bf16.mxu0 0
    %1164 = vmatpush1.bf16.msra.mxu0 0
    %1165 = vmatprep.subr.bf16.mxu0 0
    %1166 = vmatpush1.bf16.msra.mxu0 0
    %1167 = vmatprep.subr.bf16.mxu0 0
    %1168 = vmatpush1.bf16.msra.mxu0 %v812
    %1169 = vmatprep.subr.bf16.mxu0 0
    %1170 = vmatpush1.bf16.msra.mxu0 %v811
    %1171 = vmatprep.subr.bf16.mxu0 0
    %1172 = vmatpush2.bf16.msra.mxu0 0
    %1173 = vmatprep.subr.bf16.mxu0 0
    %1174 = vmatpush2.bf16.msra.mxu0 0
    %1175 = vmatprep.subr.bf16.mxu0 0
    %1176 = vmatpush2.bf16.msra.mxu0 0
    %1177 = vmatprep.subr.bf16.mxu0 0
    %1178 = vmatpush2.bf16.msra.mxu0 0
    %1179 = vmatprep.subr.bf16.mxu0 0
    %1180 = vmatpush2.bf16.msra.mxu0 0
    %1181 = vmatprep.subr.bf16.mxu0 0
    %1182 = vmatpush2.bf16.msra.mxu0 0
    %1183 = vmatprep.subr.bf16.mxu0 0
    %1184 = vmatpush2.bf16.msra.mxu0 0
    %1185 = vmatprep.subr.bf16.mxu0 0
    %1186 = vmatpush2.bf16.msra.mxu0 0
    %1187 = vmatprep.mubr.bf16.mxu0 0
    %1188 = vmatmul.mubr.bf16.gmra.mxu0 %v913
    %v1189 = vpop.f32.mrf.mxu0
    %v1190 = vadd.f32 %v1150, %v1189
    %v1191 = vpop.f32.mrf.mxu0
    %v1192 = vpop.f32.mrf.mxu0
    %v1193 = vpop.f32.mrf.mxu0
    %1194 = vdwg.mxu0
    %vm1195 = vcmask 74752
    %v1196 = vsel %vm1195, %v1190, -inf
    %1197 = vmax.xlane.f32.xlu0 %v1196
    %v1198 = vpop.xlane.xlu0 %1197
    %v1199 = vsub.f32 %v1190, %v1198
    %v1200 = vmul.f32 %v1199, 1.442695
    %v1201 = vpow.pop %v1200
    %v1202 = vsel %vm1195, %v1201, 0.0
    %1203 = vadd.xlane.f32.xlu0 %v1202
    %v1204 = vpop.xlane.xlu0 %1203
    %v1205 = vlog2.pop %v1204
    %v1206 = vmul.f32 %v1205, 0.6931472
    %v1207 = vsub.f32 %v1199, %v1206
    %1208 = vst.msk [vmem:[#allocation2] sm:$0x3] %vm1195, %v1207
    // Predicated region
    $region14: #{cnn_fashion_mnist_forward.5} parent=1 // pred_check
      _
    $region15: #{cnn_fashion_mnist_forward.5} parent=1 // pred_check_branch
      %1210 = sbr.rel (0) target = $region17
    $region16: #{cnn_fashion_mnist_forward.5} parent=1 // pred_region
      %s1212 = ssub.s32 32, 32
      %1213 = vsyncadd [#allocation3], %s1212
      %s1215 = sshll.u32 [#allocation2], 4
      %s1216 = int_to_ptr.vmem [resolvable:$true] %s1215
      %1218 = dma.vmem_to_hbm [thread:$0]  %s1216, 32, %s3, [#allocation3]
    $region17: #{cnn_fashion_mnist_forward.5} parent=1 // pred_fallthru
      _
    // Predicated region
    $region18: #{cnn_fashion_mnist_forward.5} parent=1 // pred_check
      _
    $region19: #{cnn_fashion_mnist_forward.5} parent=1 // pred_check_branch
      %1220 = sbr.rel (0) target = $region21
    $region20: #{cnn_fashion_mnist_forward.5} parent=1 // pred_region
      %1221 = dma.done [#allocation3], 32
    $region21: #{cnn_fashion_mnist_forward.5} parent=1 // pred_fallthru
      _
    %1222 = vsyncpa [#allocation3], 1

</llo_original>
